<compile_context>
chip_gen: v7x
topology: tpu7x:2x2x1
jax: 0.10.0
libtpu: 0.0.40
codegen_flags: <defaults>
</compile_context>

<pallas_src>
import jax
import jax.numpy as jnp
from jax.experimental import pallas as pl
from jax.experimental.pallas import tpu as pltpu

LRELU_SLOPE = 0.2
IN_EPS = 1e-5

_CPARAMS = pltpu.CompilerParams(
    dimension_semantics=("parallel",),
    vmem_limit_bytes=32 * 1024 * 1024,
)


def _lrelu(x):
    return jnp.where(x > 0, x, LRELU_SLOPE * x)


# ----------------------------------------------------------------------------
# Pallas kernels (one grid step == one image)
# ----------------------------------------------------------------------------
def _conv0_kernel(p_ref, w_ref, b_ref, o_ref):
    """Layer 0: im2col matmul + bias + LeakyReLU."""
    y = jnp.dot(p_ref[0], w_ref[...], preferred_element_type=jnp.float32)
    y = y + b_ref[...]                       # (1, Cout) broadcasts over rows
    o_ref[0] = _lrelu(y).astype(o_ref.dtype)


def _conv_in_lrelu(p, w, g, b):
    """Shared body: conv matmul -> single-pass InstanceNorm -> affine -> LReLU."""
    y = jnp.dot(p, w, preferred_element_type=jnp.float32)          # (HW, C)
    hw = y.shape[0]
    s1 = jnp.sum(y, axis=0, keepdims=True)                         # (1, C)
    s2 = jnp.sum(y * y, axis=0, keepdims=True)                     # (1, C)
    mean = s1 * (1.0 / hw)
    var = jnp.maximum(s2 * (1.0 / hw) - mean * mean, 0.0)          # clamp >= 0
    scale = g * jax.lax.rsqrt(var + IN_EPS)                        # (1, C)
    shift = b - mean * scale                                       # (1, C)
    return _lrelu(y * scale + shift)                               # (HW, C)


def _block_kernel(p_ref, w_ref, g_ref, b_ref, o_ref):
    """Fused Conv(no bias) + InstanceNorm2d(affine) + LeakyReLU."""
    a = _conv_in_lrelu(p_ref[0], w_ref[...], g_ref[...], b_ref[...])
    o_ref[0] = a.astype(o_ref.dtype)


def _block_final_kernel(p_ref, w_ref, g_ref, b_ref, w4_ref, b4_ref, o_ref):
    """Last block fused with the final 4x4 Conv(8fd -> 1, bias)."""
    a = _conv_in_lrelu(p_ref[0], w_ref[...], g_ref[...], b_ref[...])   # (16, C)
    # Final conv (k4 s2 p0 on a 4x4 map) == full contraction with w4 laid out
    # in the same (h*w, c) order as the activation rows.
    partial = jnp.sum(a * w4_ref[...], axis=0, keepdims=True)          # (1, C)
    score = jnp.sum(partial, axis=1, keepdims=True) + b4_ref[...]      # (1, 1)
    o_ref[0] = score.astype(o_ref.dtype)


# ----------------------------------------------------------------------------
# Host-side glue: im2col (tiny XLA preprocessing) + pallas_call wrappers
# ----------------------------------------------------------------------------
def _im2col(x, kh, kw, stride, pad):
    """x: (N, H, W, C) -> patches (N, Ho*Wo, kh*kw*C); tap order (kh, kw, Cin)."""
    if pad:
        x = jnp.pad(x, ((0, 0), (pad, pad), (pad, pad), (0, 0)))
    n, h, w, c = x.shape
    ho = (h - kh) // stride + 1
    wo = (w - kw) // stride + 1
    cols = []
    for i in range(kh):
        for j in range(kw):
            cols.append(x[:, i:i + stride * ho:stride, j:j + stride * wo:stride, :])
    p = jnp.stack(cols, axis=3)                       # (N, Ho, Wo, kh*kw, C)
    return p.reshape(n, ho * wo, kh * kw * c), ho, wo


def _w2d(w):
    """(Cout, Cin, kh, kw) -> (kh*kw*Cin, Cout), matching _im2col's tap order."""
    cout, cin, kh, kw = w.shape
    return jnp.transpose(w, (2, 3, 1, 0)).reshape(kh * kw * cin, cout)


def conv0_lrelu(x_nhwc, w, b):
    cout = w.shape[0]
    patches, ho, wo = _im2col(x_nhwc, w.shape[2], w.shape[3], 2, 1)
    n, m, k = patches.shape
    out = pl.pallas_call(
        _conv0_kernel,
        grid=(n,),
        in_specs=[
            pl.BlockSpec((1, m, k), lambda i: (i, 0, 0)),
            pl.BlockSpec((k, cout), lambda i: (0, 0)),
            pl.BlockSpec((1, cout), lambda i: (0, 0)),
        ],
        out_specs=pl.BlockSpec((1, m, cout), lambda i: (i, 0, 0)),
        out_shape=jax.ShapeDtypeStruct((n, m, cout), jnp.float32),
        compiler_params=_CPARAMS,
    )(patches, _w2d(w), b.reshape(1, cout))
    return out.reshape(n, ho, wo, cout)


def conv_in_lrelu_block(x_nhwc, w, gamma, beta):
    cout = w.shape[0]
    patches, ho, wo = _im2col(x_nhwc, w.shape[2], w.shape[3], 2, 1)
    n, m, k = patches.shape
    out = pl.pallas_call(
        _block_kernel,
        grid=(n,),
        in_specs=[
            pl.BlockSpec((1, m, k), lambda i: (i, 0, 0)),
            pl.BlockSpec((k, cout), lambda i: (0, 0)),
            pl.BlockSpec((1, cout), lambda i: (0, 0)),
            pl.BlockSpec((1, cout), lambda i: (0, 0)),
        ],
        out_specs=pl.BlockSpec((1, m, cout), lambda i: (i, 0, 0)),
        out_shape=jax.ShapeDtypeStruct((n, m, cout), jnp.float32),
        compiler_params=_CPARAMS,
    )(patches, _w2d(w), gamma.reshape(1, cout), beta.reshape(1, cout))
    return out.reshape(n, ho, wo, cout)


def conv_in_lrelu_final(x_nhwc, w, gamma, beta, w4, b4):
    """Last block (Conv + IN + LReLU) fused with the final Conv(8fd -> 1)."""
    cout = w.shape[0]
    patches, ho, wo = _im2col(x_nhwc, w.shape[2], w.shape[3], 2, 1)
    n, m, k = patches.shape
    # Final conv must reduce the full (ho, wo, cout) activation to a scalar.
    assert (ho, wo) == (w4.shape[2], w4.shape[3]) and w4.shape[:2] == (1, cout)
    w4r = jnp.transpose(w4, (2, 3, 1, 0)).reshape(m, cout)     # (h*w, c) order
    out = pl.pallas_call(
        _block_final_kernel,
        grid=(n,),
        in_specs=[
            pl.BlockSpec((1, m, k), lambda i: (i, 0, 0)),
            pl.BlockSpec((k, cout), lambda i: (0, 0)),
            pl.BlockSpec((1, cout), lambda i: (0, 0)),
            pl.BlockSpec((1, cout), lambda i: (0, 0)),
            pl.BlockSpec((m, cout), lambda i: (0, 0)),
            pl.BlockSpec((1, 1), lambda i: (0, 0)),
        ],
        out_specs=pl.BlockSpec((1, 1, 1), lambda i: (i, 0, 0)),
        out_shape=jax.ShapeDtypeStruct((n, 1, 1), jnp.float32),
        compiler_params=_CPARAMS,
    )(patches, _w2d(w), gamma.reshape(1, cout), beta.reshape(1, cout),
      w4r, b4.reshape(1, 1))
    return out


# ----------------------------------------------------------------------------
# Parameter init (deterministic, PyTorch-like uniform fan-in bounds)
# ----------------------------------------------------------------------------
def init_critic_params(key, img_channels, features_d):
    fd = features_d

    def conv_w(k, cout, cin, ksz):
        bound = 1.0 / jnp.sqrt(cin * ksz * ksz)
        return jax.random.uniform(k, (cout, cin, ksz, ksz), jnp.float32, -bound, bound)

    def conv_b(k, cout, cin, ksz):
        bound = 1.0 / jnp.sqrt(cin * ksz * ksz)
        return jax.random.uniform(k, (cout,), jnp.float32, -bound, bound)

    keys = jax.random.split(key, 16)
    params = {}
    params["w0"] = conv_w(keys[0], fd, img_channels, 4)
    params["b0"] = conv_b(keys[1], fd, img_channels, 4)
    chans = [(fd, 2 * fd), (2 * fd, 4 * fd), (4 * fd, 8 * fd)]
    for i, (cin, cout) in enumerate(chans, start=1):
        params[f"w{i}"] = conv_w(keys[3 * i], cout, cin, 4)
        params[f"g{i}"] = 1.0 + 0.1 * jax.random.normal(keys[3 * i + 1], (cout,), jnp.float32)
        params[f"bt{i}"] = 0.1 * jax.random.normal(keys[3 * i + 2], (cout,), jnp.float32)
    params["w4"] = conv_w(keys[13], 1, 8 * fd, 4)
    params["b4"] = conv_b(keys[14], 1, 8 * fd, 4)
    return params


# ----------------------------------------------------------------------------
# Critic forward (NCHW in, (N,1,1,1) out — matches the PyTorch module)
# ----------------------------------------------------------------------------
def critic_forward(params, x_nchw):
    x = jnp.transpose(x_nchw, (0, 2, 3, 1)).astype(jnp.float32)     # NCHW -> NHWC
    x = conv0_lrelu(x, params["w0"], params["b0"])                  # 64 -> 32
    x = conv_in_lrelu_block(x, params["w1"], params["g1"], params["bt1"])  # -> 16
    x = conv_in_lrelu_block(x, params["w2"], params["g2"], params["bt2"])  # -> 8
    score = conv_in_lrelu_final(x, params["w3"], params["g3"], params["bt3"],
                                params["w4"], params["b4"])         # 8 -> 4 -> 1x1
    return score.reshape(score.shape[0], 1, 1, 1)


if __name__ == "__main__":
    key = jax.random.PRNGKey(0)
    k_param, k_input = jax.random.split(key)

    batch, img_channels, features_d, img_size = 2, 3, 8, 64
    params = init_critic_params(k_param, img_channels, features_d)
    x = jax.random.normal(k_input, (batch, img_channels, img_size, img_size), jnp.float32)

    fwd = jax.jit(critic_forward)
    out = jax.block_until_ready(fwd(params, x))
    assert out.shape == (batch, 1, 1, 1), out.shape
    assert bool(jnp.all(jnp.isfinite(out)))
    print("KERNEL_OK")
</pallas_src>

<mosaic_0001>
module attributes {stable_mosaic.version = 11 : i64} {
  func.func @_conv0_kernel(%arg0: i32, %arg1: memref<1x1024x48xf32, #tpu.memory_space<vmem>>, %arg2: memref<48x8xf32, #tpu.memory_space<vmem>>, %arg3: memref<1x8xf32, #tpu.memory_space<vmem>>, %arg4: memref<1x1024x8xf32, #tpu.memory_space<vmem>>) attributes {dimension_semantics = [#tpu.dimension_semantics<parallel>], iteration_bounds = array<i64: 2>, scalar_prefetch = 0 : i64, scratch_operands = 0 : i64, tpu.core_type = #tpu.core_type<tc>, window_params = [{transform_indices = @transform_0, window_bounds = array<i64: 1, 1024, 48>}, {pipeline_mode = #tpu.pipeline_mode<synchronous>, transform_indices = @transform_1, window_bounds = array<i64: 48, 8>}, {pipeline_mode = #tpu.pipeline_mode<synchronous>, transform_indices = @transform_2, window_bounds = array<i64: 1, 8>}, {transform_indices = @transform_3, window_bounds = array<i64: 1, 1024, 8>}]} {
    %c0 = arith.constant 0 : index
    %c0_0 = arith.constant 0 : index
    %c0_1 = arith.constant 0 : index
    %0 = vector.load %arg1[%c0, %c0_0, %c0_1] : memref<1x1024x48xf32, #tpu.memory_space<vmem>>, vector<1x1024x48xf32>
    %1 = vector.shape_cast %0 : vector<1x1024x48xf32> to vector<1024x48xf32>
    %c0_2 = arith.constant 0 : index
    %c0_3 = arith.constant 0 : index
    %2 = vector.load %arg2[%c0_2, %c0_3] : memref<48x8xf32, #tpu.memory_space<vmem>>, vector<48x8xf32>
    %cst = arith.constant dense<0.000000e+00> : vector<1024x8xf32>
    %3 = tpu.matmul %1, %2, %cst {dimension_numbers = #tpu.dot_dimension_numbers<[1], [0], [0], [1], [0, 0, 1, 1], [], []>} : vector<1024x48xf32>, vector<48x8xf32>, vector<1024x8xf32> -> vector<1024x8xf32>
    %c0_4 = arith.constant 0 : index
    %c0_5 = arith.constant 0 : index
    %4 = vector.load %arg3[%c0_4, %c0_5] : memref<1x8xf32, #tpu.memory_space<vmem>>, vector<1x8xf32>
    %5 = vector.broadcast %4 : vector<1x8xf32> to vector<1024x8xf32>
    %6 = arith.addf %3, %5 : vector<1024x8xf32>
    %cst_6 = arith.constant 0.000000e+00 : f32
    %7 = vector.broadcast %cst_6 : f32 to vector<1024x8xf32>
    %8 = arith.cmpf ogt, %6, %7 : vector<1024x8xf32>
    %cst_7 = arith.constant 2.000000e-01 : f32
    %9 = vector.broadcast %cst_7 : f32 to vector<1024x8xf32>
    %10 = arith.mulf %9, %6 : vector<1024x8xf32>
    %11 = arith.select %8, %6, %10 : vector<1024x8xi1>, vector<1024x8xf32>
    %c0_8 = arith.constant 0 : index
    %c0_9 = arith.constant 0 : index
    %c0_10 = arith.constant 0 : index
    %12 = vector.load %arg4[%c0_8, %c0_9, %c0_10] : memref<1x1024x8xf32, #tpu.memory_space<vmem>>, vector<1x1024x8xf32>
    %13 = vector.shape_cast %12 : vector<1x1024x8xf32> to vector<1024x8xf32>
    %14 = vector.shape_cast %11 : vector<1024x8xf32> to vector<1x1024x8xf32>
    tpu.vector_store %arg4[%c0_8, %c0_9, %c0_10], %14 {strides = array<i32>} : memref<1x1024x8xf32, #tpu.memory_space<vmem>>, vector<1x1024x8xf32>,
    return
  }
  func.func @transform_0(%arg0: i32) -> (i32, i32, i32) {
    %c0_i32 = arith.constant 0 : i32
    %c0_i32_0 = arith.constant 0 : i32
    %c0_i32_1 = arith.constant 0 : i32
    return %arg0, %c0_i32, %c0_i32_0 : i32, i32, i32
  }
  func.func @transform_1(%arg0: i32) -> (i32, i32) {
    %c0_i32 = arith.constant 0 : i32
    %c0_i32_0 = arith.constant 0 : i32
    %c0_i32_1 = arith.constant 0 : i32
    return %c0_i32, %c0_i32_0 : i32, i32
  }
  func.func @transform_2(%arg0: i32) -> (i32, i32) {
    %c0_i32 = arith.constant 0 : i32
    %c0_i32_0 = arith.constant 0 : i32
    %c0_i32_1 = arith.constant 0 : i32
    return %c0_i32, %c0_i32_0 : i32, i32
  }
  func.func @transform_3(%arg0: i32) -> (i32, i32, i32) {
    %c0_i32 = arith.constant 0 : i32
    %c0_i32_0 = arith.constant 0 : i32
    %c0_i32_1 = arith.constant 0 : i32
    return %arg0, %c0_i32, %c0_i32_0 : i32, i32, i32
  }
}

module attributes {stable_mosaic.version = 11 : i64} {
  func.func @_block_kernel(%arg0: i32, %arg1: memref<1x256x128xf32, #tpu.memory_space<vmem>>, %arg2: memref<128x16xf32, #tpu.memory_space<vmem>>, %arg3: memref<1x16xf32, #tpu.memory_space<vmem>>, %arg4: memref<1x16xf32, #tpu.memory_space<vmem>>, %arg5: memref<1x256x16xf32, #tpu.memory_space<vmem>>) attributes {dimension_semantics = [#tpu.dimension_semantics<parallel>], iteration_bounds = array<i64: 2>, scalar_prefetch = 0 : i64, scratch_operands = 0 : i64, tpu.core_type = #tpu.core_type<tc>, window_params = [{transform_indices = @transform_0, window_bounds = array<i64: 1, 256, 128>}, {pipeline_mode = #tpu.pipeline_mode<synchronous>, transform_indices = @transform_1, window_bounds = array<i64: 128, 16>}, {pipeline_mode = #tpu.pipeline_mode<synchronous>, transform_indices = @transform_2, window_bounds = array<i64: 1, 16>}, {pipeline_mode = #tpu.pipeline_mode<synchronous>, transform_indices = @transform_3, window_bounds = array<i64: 1, 16>}, {transform_indices = @transform_4, window_bounds = array<i64: 1, 256, 16>}]} {
    %c0 = arith.constant 0 : index
    %c0_0 = arith.constant 0 : index
    %c0_1 = arith.constant 0 : index
    %0 = vector.load %arg1[%c0, %c0_0, %c0_1] : memref<1x256x128xf32, #tpu.memory_space<vmem>>, vector<1x256x128xf32>
    %1 = vector.shape_cast %0 : vector<1x256x128xf32> to vector<256x128xf32>
    %c0_2 = arith.constant 0 : index
    %c0_3 = arith.constant 0 : index
    %2 = vector.load %arg2[%c0_2, %c0_3] : memref<128x16xf32, #tpu.memory_space<vmem>>, vector<128x16xf32>
    %c0_4 = arith.constant 0 : index
    %c0_5 = arith.constant 0 : index
    %3 = vector.load %arg3[%c0_4, %c0_5] : memref<1x16xf32, #tpu.memory_space<vmem>>, vector<1x16xf32>
    %c0_6 = arith.constant 0 : index
    %c0_7 = arith.constant 0 : index
    %4 = vector.load %arg4[%c0_6, %c0_7] : memref<1x16xf32, #tpu.memory_space<vmem>>, vector<1x16xf32>
    %cst = arith.constant dense<0.000000e+00> : vector<256x16xf32>
    %5 = tpu.matmul %1, %2, %cst {dimension_numbers = #tpu.dot_dimension_numbers<[1], [0], [0], [1], [0, 0, 1, 1], [], []>} : vector<256x128xf32>, vector<128x16xf32>, vector<256x16xf32> -> vector<256x16xf32>
    %cst_8 = arith.constant dense<0.000000e+00> : vector<16xf32>
    %6 = vector.multi_reduction <add>, %5, %cst_8 [0] : vector<256x16xf32> to vector<16xf32>
    %7 = vector.shape_cast %6 : vector<16xf32> to vector<1x16xf32>
    %8 = arith.mulf %5, %5 : vector<256x16xf32>
    %cst_9 = arith.constant dense<0.000000e+00> : vector<16xf32>
    %9 = vector.multi_reduction <add>, %8, %cst_9 [0] : vector<256x16xf32> to vector<16xf32>
    %10 = vector.shape_cast %9 : vector<16xf32> to vector<1x16xf32>
    %cst_10 = arith.constant 3.906250e-03 : f32
    %11 = vector.broadcast %cst_10 : f32 to vector<1x16xf32>
    %12 = arith.mulf %7, %11 : vector<1x16xf32>
    %cst_11 = arith.constant 3.906250e-03 : f32
    %13 = vector.broadcast %cst_11 : f32 to vector<1x16xf32>
    %14 = arith.mulf %10, %13 : vector<1x16xf32>
    %15 = arith.mulf %12, %12 : vector<1x16xf32>
    %16 = arith.subf %14, %15 : vector<1x16xf32>
    %cst_12 = arith.constant 0.000000e+00 : f32
    %17 = vector.broadcast %cst_12 : f32 to vector<1x16xf32>
    %18 = arith.maximumf %16, %17 : vector<1x16xf32>
    %cst_13 = arith.constant 9.99999974E-6 : f32
    %19 = vector.broadcast %cst_13 : f32 to vector<1x16xf32>
    %20 = arith.addf %18, %19 : vector<1x16xf32>
    %21 = math.rsqrt %20 : vector<1x16xf32>
    %22 = arith.mulf %3, %21 : vector<1x16xf32>
    %23 = arith.mulf %12, %22 : vector<1x16xf32>
    %24 = arith.subf %4, %23 : vector<1x16xf32>
    %25 = vector.broadcast %22 : vector<1x16xf32> to vector<256x16xf32>
    %26 = arith.mulf %5, %25 : vector<256x16xf32>
    %27 = vector.broadcast %24 : vector<1x16xf32> to vector<256x16xf32>
    %28 = arith.addf %26, %27 : vector<256x16xf32>
    %cst_14 = arith.constant 0.000000e+00 : f32
    %29 = vector.broadcast %cst_14 : f32 to vector<256x16xf32>
    %30 = arith.cmpf ogt, %28, %29 : vector<256x16xf32>
    %cst_15 = arith.constant 2.000000e-01 : f32
    %31 = vector.broadcast %cst_15 : f32 to vector<256x16xf32>
    %32 = arith.mulf %31, %28 : vector<256x16xf32>
    %33 = arith.select %30, %28, %32 : vector<256x16xi1>, vector<256x16xf32>
    %c0_16 = arith.constant 0 : index
    %c0_17 = arith.constant 0 : index
    %c0_18 = arith.constant 0 : index
    %34 = vector.load %arg5[%c0_16, %c0_17, %c0_18] : memref<1x256x16xf32, #tpu.memory_space<vmem>>, vector<1x256x16xf32>
    %35 = vector.shape_cast %34 : vector<1x256x16xf32> to vector<256x16xf32>
    %36 = vector.shape_cast %33 : vector<256x16xf32> to vector<1x256x16xf32>
    tpu.vector_store %arg5[%c0_16, %c0_17, %c0_18], %36 {strides = array<i32>} : memref<1x256x16xf32, #tpu.memory_space<vmem>>, vector<1x256x16xf32>,
    return
  }
  func.func @transform_0(%arg0: i32) -> (i32, i32, i32) {
    %c0_i32 = arith.constant 0 : i32
    %c0_i32_0 = arith.constant 0 : i32
    %c0_i32_1 = arith.constant 0 : i32
    return %arg0, %c0_i32, %c0_i32_0 : i32, i32, i32
  }
  func.func @transform_1(%arg0: i32) -> (i32, i32) {
    %c0_i32 = arith.constant 0 : i32
    %c0_i32_0 = arith.constant 0 : i32
    %c0_i32_1 = arith.constant 0 : i32
    return %c0_i32, %c0_i32_0 : i32, i32
  }
  func.func @transform_2(%arg0: i32) -> (i32, i32) {
    %c0_i32 = arith.constant 0 : i32
    %c0_i32_0 = arith.constant 0 : i32
    %c0_i32_1 = arith.constant 0 : i32
    return %c0_i32, %c0_i32_0 : i32, i32
  }
  func.func @transform_3(%arg0: i32) -> (i32, i32) {
    %c0_i32 = arith.constant 0 : i32
    %c0_i32_0 = arith.constant 0 : i32
    %c0_i32_1 = arith.constant 0 : i32
    return %c0_i32, %c0_i32_0 : i32, i32
  }
  func.func @transform_4(%arg0: i32) -> (i32, i32, i32) {
    %c0_i32 = arith.constant 0 : i32
    %c0_i32_0 = arith.constant 0 : i32
    %c0_i32_1 = arith.constant 0 : i32
    return %arg0, %c0_i32, %c0_i32_0 : i32, i32, i32
  }
}

module attributes {stable_mosaic.version = 11 : i64} {
  func.func @_block_kernel(%arg0: i32, %arg1: memref<1x64x256xf32, #tpu.memory_space<vmem>>, %arg2: memref<256x32xf32, #tpu.memory_space<vmem>>, %arg3: memref<1x32xf32, #tpu.memory_space<vmem>>, %arg4: memref<1x32xf32, #tpu.memory_space<vmem>>, %arg5: memref<1x64x32xf32, #tpu.memory_space<vmem>>) attributes {dimension_semantics = [#tpu.dimension_semantics<parallel>], iteration_bounds = array<i64: 2>, scalar_prefetch = 0 : i64, scratch_operands = 0 : i64, tpu.core_type = #tpu.core_type<tc>, window_params = [{transform_indices = @transform_0, window_bounds = array<i64: 1, 64, 256>}, {pipeline_mode = #tpu.pipeline_mode<synchronous>, transform_indices = @transform_1, window_bounds = array<i64: 256, 32>}, {pipeline_mode = #tpu.pipeline_mode<synchronous>, transform_indices = @transform_2, window_bounds = array<i64: 1, 32>}, {pipeline_mode = #tpu.pipeline_mode<synchronous>, transform_indices = @transform_3, window_bounds = array<i64: 1, 32>}, {transform_indices = @transform_4, window_bounds = array<i64: 1, 64, 32>}]} {
    %c0 = arith.constant 0 : index
    %c0_0 = arith.constant 0 : index
    %c0_1 = arith.constant 0 : index
    %0 = vector.load %arg1[%c0, %c0_0, %c0_1] : memref<1x64x256xf32, #tpu.memory_space<vmem>>, vector<1x64x256xf32>
    %1 = vector.shape_cast %0 : vector<1x64x256xf32> to vector<64x256xf32>
    %c0_2 = arith.constant 0 : index
    %c0_3 = arith.constant 0 : index
    %2 = vector.load %arg2[%c0_2, %c0_3] : memref<256x32xf32, #tpu.memory_space<vmem>>, vector<256x32xf32>
    %c0_4 = arith.constant 0 : index
    %c0_5 = arith.constant 0 : index
    %3 = vector.load %arg3[%c0_4, %c0_5] : memref<1x32xf32, #tpu.memory_space<vmem>>, vector<1x32xf32>
    %c0_6 = arith.constant 0 : index
    %c0_7 = arith.constant 0 : index
    %4 = vector.load %arg4[%c0_6, %c0_7] : memref<1x32xf32, #tpu.memory_space<vmem>>, vector<1x32xf32>
    %cst = arith.constant dense<0.000000e+00> : vector<64x32xf32>
    %5 = tpu.matmul %1, %2, %cst {dimension_numbers = #tpu.dot_dimension_numbers<[1], [0], [0], [1], [0, 0, 1, 1], [], []>} : vector<64x256xf32>, vector<256x32xf32>, vector<64x32xf32> -> vector<64x32xf32>
    %cst_8 = arith.constant dense<0.000000e+00> : vector<32xf32>
    %6 = vector.multi_reduction <add>, %5, %cst_8 [0] : vector<64x32xf32> to vector<32xf32>
    %7 = vector.shape_cast %6 : vector<32xf32> to vector<1x32xf32>
    %8 = arith.mulf %5, %5 : vector<64x32xf32>
    %cst_9 = arith.constant dense<0.000000e+00> : vector<32xf32>
    %9 = vector.multi_reduction <add>, %8, %cst_9 [0] : vector<64x32xf32> to vector<32xf32>
    %10 = vector.shape_cast %9 : vector<32xf32> to vector<1x32xf32>
    %cst_10 = arith.constant 1.562500e-02 : f32
    %11 = vector.broadcast %cst_10 : f32 to vector<1x32xf32>
    %12 = arith.mulf %7, %11 : vector<1x32xf32>
    %cst_11 = arith.constant 1.562500e-02 : f32
    %13 = vector.broadcast %cst_11 : f32 to vector<1x32xf32>
    %14 = arith.mulf %10, %13 : vector<1x32xf32>
    %15 = arith.mulf %12, %12 : vector<1x32xf32>
    %16 = arith.subf %14, %15 : vector<1x32xf32>
    %cst_12 = arith.constant 0.000000e+00 : f32
    %17 = vector.broadcast %cst_12 : f32 to vector<1x32xf32>
    %18 = arith.maximumf %16, %17 : vector<1x32xf32>
    %cst_13 = arith.constant 9.99999974E-6 : f32
    %19 = vector.broadcast %cst_13 : f32 to vector<1x32xf32>
    %20 = arith.addf %18, %19 : vector<1x32xf32>
    %21 = math.rsqrt %20 : vector<1x32xf32>
    %22 = arith.mulf %3, %21 : vector<1x32xf32>
    %23 = arith.mulf %12, %22 : vector<1x32xf32>
    %24 = arith.subf %4, %23 : vector<1x32xf32>
    %25 = vector.broadcast %22 : vector<1x32xf32> to vector<64x32xf32>
    %26 = arith.mulf %5, %25 : vector<64x32xf32>
    %27 = vector.broadcast %24 : vector<1x32xf32> to vector<64x32xf32>
    %28 = arith.addf %26, %27 : vector<64x32xf32>
    %cst_14 = arith.constant 0.000000e+00 : f32
    %29 = vector.broadcast %cst_14 : f32 to vector<64x32xf32>
    %30 = arith.cmpf ogt, %28, %29 : vector<64x32xf32>
    %cst_15 = arith.constant 2.000000e-01 : f32
    %31 = vector.broadcast %cst_15 : f32 to vector<64x32xf32>
    %32 = arith.mulf %31, %28 : vector<64x32xf32>
    %33 = arith.select %30, %28, %32 : vector<64x32xi1>, vector<64x32xf32>
    %c0_16 = arith.constant 0 : index
    %c0_17 = arith.constant 0 : index
    %c0_18 = arith.constant 0 : index
    %34 = vector.load %arg5[%c0_16, %c0_17, %c0_18] : memref<1x64x32xf32, #tpu.memory_space<vmem>>, vector<1x64x32xf32>
    %35 = vector.shape_cast %34 : vector<1x64x32xf32> to vector<64x32xf32>
    %36 = vector.shape_cast %33 : vector<64x32xf32> to vector<1x64x32xf32>
    tpu.vector_store %arg5[%c0_16, %c0_17, %c0_18], %36 {strides = array<i32>} : memref<1x64x32xf32, #tpu.memory_space<vmem>>, vector<1x64x32xf32>,
    return
  }
  func.func @transform_0(%arg0: i32) -> (i32, i32, i32) {
    %c0_i32 = arith.constant 0 : i32
    %c0_i32_0 = arith.constant 0 : i32
    %c0_i32_1 = arith.constant 0 : i32
    return %arg0, %c0_i32, %c0_i32_0 : i32, i32, i32
  }
  func.func @transform_1(%arg0: i32) -> (i32, i32) {
    %c0_i32 = arith.constant 0 : i32
    %c0_i32_0 = arith.constant 0 : i32
    %c0_i32_1 = arith.constant 0 : i32
    return %c0_i32, %c0_i32_0 : i32, i32
  }
  func.func @transform_2(%arg0: i32) -> (i32, i32) {
    %c0_i32 = arith.constant 0 : i32
    %c0_i32_0 = arith.constant 0 : i32
    %c0_i32_1 = arith.constant 0 : i32
    return %c0_i32, %c0_i32_0 : i32, i32
  }
  func.func @transform_3(%arg0: i32) -> (i32, i32) {
    %c0_i32 = arith.constant 0 : i32
    %c0_i32_0 = arith.constant 0 : i32
    %c0_i32_1 = arith.constant 0 : i32
    return %c0_i32, %c0_i32_0 : i32, i32
  }
  func.func @transform_4(%arg0: i32) -> (i32, i32, i32) {
    %c0_i32 = arith.constant 0 : i32
    %c0_i32_0 = arith.constant 0 : i32
    %c0_i32_1 = arith.constant 0 : i32
    return %arg0, %c0_i32, %c0_i32_0 : i32, i32, i32
  }
}

module attributes {stable_mosaic.version = 11 : i64} {
  func.func @_block_final_kernel(%arg0: i32, %arg1: memref<1x16x512xf32, #tpu.memory_space<vmem>>, %arg2: memref<512x64xf32, #tpu.memory_space<vmem>>, %arg3: memref<1x64xf32, #tpu.memory_space<vmem>>, %arg4: memref<1x64xf32, #tpu.memory_space<vmem>>, %arg5: memref<16x64xf32, #tpu.memory_space<vmem>>, %arg6: memref<1x1xf32, #tpu.memory_space<vmem>>, %arg7: memref<1x1x1xf32, #tpu.memory_space<vmem>>) attributes {dimension_semantics = [#tpu.dimension_semantics<parallel>], iteration_bounds = array<i64: 2>, scalar_prefetch = 0 : i64, scratch_operands = 0 : i64, tpu.core_type = #tpu.core_type<tc>, window_params = [{transform_indices = @transform_0, window_bounds = array<i64: 1, 16, 512>}, {pipeline_mode = #tpu.pipeline_mode<synchronous>, transform_indices = @transform_1, window_bounds = array<i64: 512, 64>}, {pipeline_mode = #tpu.pipeline_mode<synchronous>, transform_indices = @transform_2, window_bounds = array<i64: 1, 64>}, {pipeline_mode = #tpu.pipeline_mode<synchronous>, transform_indices = @transform_3, window_bounds = array<i64: 1, 64>}, {pipeline_mode = #tpu.pipeline_mode<synchronous>, transform_indices = @transform_4, window_bounds = array<i64: 16, 64>}, {pipeline_mode = #tpu.pipeline_mode<synchronous>, transform_indices = @transform_5, window_bounds = array<i64: 1, 1>}, {transform_indices = @transform_6, window_bounds = array<i64: 1, 1, 1>}]} {
    %c0 = arith.constant 0 : index
    %c0_0 = arith.constant 0 : index
    %c0_1 = arith.constant 0 : index
    %0 = vector.load %arg1[%c0, %c0_0, %c0_1] : memref<1x16x512xf32, #tpu.memory_space<vmem>>, vector<1x16x512xf32>
    %1 = vector.shape_cast %0 : vector<1x16x512xf32> to vector<16x512xf32>
    %c0_2 = arith.constant 0 : index
    %c0_3 = arith.constant 0 : index
    %2 = vector.load %arg2[%c0_2, %c0_3] : memref<512x64xf32, #tpu.memory_space<vmem>>, vector<512x64xf32>
    %c0_4 = arith.constant 0 : index
    %c0_5 = arith.constant 0 : index
    %3 = vector.load %arg3[%c0_4, %c0_5] : memref<1x64xf32, #tpu.memory_space<vmem>>, vector<1x64xf32>
    %c0_6 = arith.constant 0 : index
    %c0_7 = arith.constant 0 : index
    %4 = vector.load %arg4[%c0_6, %c0_7] : memref<1x64xf32, #tpu.memory_space<vmem>>, vector<1x64xf32>
    %cst = arith.constant dense<0.000000e+00> : vector<16x64xf32>
    %5 = tpu.matmul %1, %2, %cst {dimension_numbers = #tpu.dot_dimension_numbers<[1], [0], [0], [1], [0, 0, 1, 1], [], []>} : vector<16x512xf32>, vector<512x64xf32>, vector<16x64xf32> -> vector<16x64xf32>
    %cst_8 = arith.constant dense<0.000000e+00> : vector<64xf32>
    %6 = vector.multi_reduction <add>, %5, %cst_8 [0] : vector<16x64xf32> to vector<64xf32>
    %7 = vector.shape_cast %6 : vector<64xf32> to vector<1x64xf32>
    %8 = arith.mulf %5, %5 : vector<16x64xf32>
    %cst_9 = arith.constant dense<0.000000e+00> : vector<64xf32>
    %9 = vector.multi_reduction <add>, %8, %cst_9 [0] : vector<16x64xf32> to vector<64xf32>
    %10 = vector.shape_cast %9 : vector<64xf32> to vector<1x64xf32>
    %cst_10 = arith.constant 6.250000e-02 : f32
    %11 = vector.broadcast %cst_10 : f32 to vector<1x64xf32>
    %12 = arith.mulf %7, %11 : vector<1x64xf32>
    %cst_11 = arith.constant 6.250000e-02 : f32
    %13 = vector.broadcast %cst_11 : f32 to vector<1x64xf32>
    %14 = arith.mulf %10, %13 : vector<1x64xf32>
    %15 = arith.mulf %12, %12 : vector<1x64xf32>
    %16 = arith.subf %14, %15 : vector<1x64xf32>
    %cst_12 = arith.constant 0.000000e+00 : f32
    %17 = vector.broadcast %cst_12 : f32 to vector<1x64xf32>
    %18 = arith.maximumf %16, %17 : vector<1x64xf32>
    %cst_13 = arith.constant 9.99999974E-6 : f32
    %19 = vector.broadcast %cst_13 : f32 to vector<1x64xf32>
    %20 = arith.addf %18, %19 : vector<1x64xf32>
    %21 = math.rsqrt %20 : vector<1x64xf32>
    %22 = arith.mulf %3, %21 : vector<1x64xf32>
    %23 = arith.mulf %12, %22 : vector<1x64xf32>
    %24 = arith.subf %4, %23 : vector<1x64xf32>
    %25 = vector.broadcast %22 : vector<1x64xf32> to vector<16x64xf32>
    %26 = arith.mulf %5, %25 : vector<16x64xf32>
    %27 = vector.broadcast %24 : vector<1x64xf32> to vector<16x64xf32>
    %28 = arith.addf %26, %27 : vector<16x64xf32>
    %cst_14 = arith.constant 0.000000e+00 : f32
    %29 = vector.broadcast %cst_14 : f32 to vector<16x64xf32>
    %30 = arith.cmpf ogt, %28, %29 : vector<16x64xf32>
    %cst_15 = arith.constant 2.000000e-01 : f32
    %31 = vector.broadcast %cst_15 : f32 to vector<16x64xf32>
    %32 = arith.mulf %31, %28 : vector<16x64xf32>
    %33 = arith.select %30, %28, %32 : vector<16x64xi1>, vector<16x64xf32>
    %c0_16 = arith.constant 0 : index
    %c0_17 = arith.constant 0 : index
    %34 = vector.load %arg5[%c0_16, %c0_17] : memref<16x64xf32, #tpu.memory_space<vmem>>, vector<16x64xf32>
    %35 = arith.mulf %33, %34 : vector<16x64xf32>
    %cst_18 = arith.constant dense<0.000000e+00> : vector<64xf32>
    %36 = vector.multi_reduction <add>, %35, %cst_18 [0] : vector<16x64xf32> to vector<64xf32>
    %37 = vector.shape_cast %36 : vector<64xf32> to vector<1x64xf32>
    %cst_19 = arith.constant dense<0.000000e+00> : vector<1xf32>
    %38 = vector.multi_reduction <add>, %37, %cst_19 [1] : vector<1x64xf32> to vector<1xf32>
    %39 = vector.shape_cast %38 : vector<1xf32> to vector<1x1xf32>
    %c0_20 = arith.constant 0 : index
    %c0_21 = arith.constant 0 : index
    %40 = vector.load %arg6[%c0_20, %c0_21] : memref<1x1xf32, #tpu.memory_space<vmem>>, vector<1x1xf32>
    %41 = arith.addf %39, %40 : vector<1x1xf32>
    %c0_22 = arith.constant 0 : index
    %c0_23 = arith.constant 0 : index
    %c0_24 = arith.constant 0 : index
    %42 = vector.load %arg7[%c0_22, %c0_23, %c0_24] : memref<1x1x1xf32, #tpu.memory_space<vmem>>, vector<1x1x1xf32>
    %43 = vector.shape_cast %42 : vector<1x1x1xf32> to vector<1x1xf32>
    %44 = vector.shape_cast %41 : vector<1x1xf32> to vector<1x1x1xf32>
    tpu.vector_store %arg7[%c0_22, %c0_23, %c0_24], %44 {strides = array<i32>} : memref<1x1x1xf32, #tpu.memory_space<vmem>>, vector<1x1x1xf32>,
    return
  }
  func.func @transform_0(%arg0: i32) -> (i32, i32, i32) {
    %c0_i32 = arith.constant 0 : i32
    %c0_i32_0 = arith.constant 0 : i32
    %c0_i32_1 = arith.constant 0 : i32
    return %arg0, %c0_i32, %c0_i32_0 : i32, i32, i32
  }
  func.func @transform_1(%arg0: i32) -> (i32, i32) {
    %c0_i32 = arith.constant 0 : i32
    %c0_i32_0 = arith.constant 0 : i32
    %c0_i32_1 = arith.constant 0 : i32
    return %c0_i32, %c0_i32_0 : i32, i32
  }
  func.func @transform_2(%arg0: i32) -> (i32, i32) {
    %c0_i32 = arith.constant 0 : i32
    %c0_i32_0 = arith.constant 0 : i32
    %c0_i32_1 = arith.constant 0 : i32
    return %c0_i32, %c0_i32_0 : i32, i32
  }
  func.func @transform_3(%arg0: i32) -> (i32, i32) {
    %c0_i32 = arith.constant 0 : i32
    %c0_i32_0 = arith.constant 0 : i32
    %c0_i32_1 = arith.constant 0 : i32
    return %c0_i32, %c0_i32_0 : i32, i32
  }
  func.func @transform_4(%arg0: i32) -> (i32, i32) {
    %c0_i32 = arith.constant 0 : i32
    %c0_i32_0 = arith.constant 0 : i32
    %c0_i32_1 = arith.constant 0 : i32
    return %c0_i32, %c0_i32_0 : i32, i32
  }
  func.func @transform_5(%arg0: i32) -> (i32, i32) {
    %c0_i32 = arith.constant 0 : i32
    %c0_i32_0 = arith.constant 0 : i32
    %c0_i32_1 = arith.constant 0 : i32
    return %c0_i32, %c0_i32_0 : i32, i32
  }
  func.func @transform_6(%arg0: i32) -> (i32, i32, i32) {
    %c0_i32 = arith.constant 0 : i32
    %c0_i32_0 = arith.constant 0 : i32
    %c0_i32_1 = arith.constant 0 : i32
    return %arg0, %c0_i32, %c0_i32_0 : i32, i32, i32
  }
}

</mosaic_0001>

<llo_original>
// kernel: critic_forward.4
$region0: #{critic_forward.4}
  #allocation0 [shape = 'u32[]', space=smem, size = 0x4, offset = 0x4, fixed_abs, tag = 'smem constant byte address 0x4 - core index']
  #allocation1 [shape = 'u32[144,128]{1,0:T(1,128)}', space=vmem, size = 0x12000, scoped, tag = 'internal scratch']
  %s0 = inlined_call_operand.vmem [shape: f32[2,1024,48], index: 0, kind: input, shape index: {}]
  %s1 = inlined_call_operand.vmem [shape: f32[48,8], index: 1, kind: input, shape index: {}]
  %s2 = inlined_call_operand.vmem [shape: f32[1,8], index: 2, kind: input, shape index: {}]
  %s3 = inlined_call_operand.vmem [shape: f32[2,1024,8], index: 3, kind: output, shape index: {}]
  %s4 = sld [smem:[#allocation0]]
  $region45: #{critic_forward.4} parent=0
    _
  %s6 = ssub.s32 1, %s4
  %s7 = scalar_select 0, %s6, %s4
  loop: start=0, step=1, limit=4
  $region2: #{critic_forward.4} parent=0 // loop_pre_header
    _
  $region3: #{critic_forward.4} parent=0 // loop_header
    %s9 = sphi 0, %s13
    %p10 = scmp.ge.s32.totalorder %s9, 4
    %s19 = sphi 0, %s21
    %s22 = sphi 0, %s19
    %s23 = sphi 0, %s22
    %s39 = sphi 0, %s23
    %s43 = sphi 0, %s43
    %s45 = sphi 0, %s43
    %s46 = sphi 0, %s45
    %s60 = sphi 0, %s46
    %s64 = sphi 0, %s64
    %s66 = sphi 0, %s64
    %s67 = sphi 0, %s66
    %s81 = sphi 0, %s67
    %s87 = sphi 0, %s89
    %s90 = sphi 0, %s87
    %s91 = sphi 0, %s90
    %s107 = sphi 0, %s91
  $region4: #{critic_forward.4} parent=0 // loop_header_branch
    %12 = sbr.rel (%p10) target = $region8
  $region5: #{critic_forward.4} parent=0 // loop_body
    %s14 = ssub.s32 %s9, 1
    %s15 = ssub.s32 %s9, 2
    %s16 = sadd.s32 %s9, 1
    %s17 = ssub.s32 %s9, %s16
    %p18 = scmp.eq.s32.totalorder %s17, 0
    %s20 = sadd.s32 %s19, 1
    %s21 = scalar_select %p18, %s19, %s20
    %p24 = pneg %p18
    %p25 = scmp.eq.s32.totalorder %s9, 1
    %p26 = por %p24, %p25
    %p27 = scmp.ne.s32.totalorder %s19, %s22
    %p28 = scmp.eq.s32.totalorder %s9, 0
    %p29 = por %p27, %p28
    %p30 = scmp.ne.s32.totalorder %s19, %s22
    %p31 = scmp.eq.s32.totalorder %s14, 1
    %p32 = por %p30, %p31
    %p33 = scmp.ne.s32.totalorder %s22, %s23
    %p34 = scmp.eq.s32.totalorder %s14, 0
    %p35 = por %p33, %p34
    %p36 = scmp.ne.s32.totalorder %s22, %s23
    %p37 = scmp.eq.s32.totalorder %s15, 1
    %p38 = por %p36, %p37
    %p40 = scmp.ne.s32.totalorder %s23, %s39
    %p41 = scmp.eq.s32.totalorder %s15, 0
    %p42 = por %p40, %p41
    %s44 = sadd.s32 %s43, 1
    %p47 = scmp.eq.s32.totalorder %s9, 1
    %p48 = scmp.ne.s32.totalorder %s43, %s45
    %p49 = scmp.eq.s32.totalorder %s9, 0
    %p50 = por %p48, %p49
    %p51 = scmp.ne.s32.totalorder %s43, %s45
    %p52 = scmp.eq.s32.totalorder %s14, 1
    %p53 = por %p51, %p52
    %p54 = scmp.ne.s32.totalorder %s45, %s46
    %p55 = scmp.eq.s32.totalorder %s14, 0
    %p56 = por %p54, %p55
    %p57 = scmp.ne.s32.totalorder %s45, %s46
    %p58 = scmp.eq.s32.totalorder %s15, 1
    %p59 = por %p57, %p58
    %p61 = scmp.ne.s32.totalorder %s46, %s60
    %p62 = scmp.eq.s32.totalorder %s15, 0
    %p63 = por %p61, %p62
    %s65 = sadd.s32 %s64, 1
    %p68 = scmp.eq.s32.totalorder %s9, 1
    %p69 = scmp.ne.s32.totalorder %s64, %s66
    %p70 = scmp.eq.s32.totalorder %s9, 0
    %p71 = por %p69, %p70
    %p72 = scmp.ne.s32.totalorder %s64, %s66
    %p73 = scmp.eq.s32.totalorder %s14, 1
    %p74 = por %p72, %p73
    %p75 = scmp.ne.s32.totalorder %s66, %s67
    %p76 = scmp.eq.s32.totalorder %s14, 0
    %p77 = por %p75, %p76
    %p78 = scmp.ne.s32.totalorder %s66, %s67
    %p79 = scmp.eq.s32.totalorder %s15, 1
    %p80 = por %p78, %p79
    %p82 = scmp.ne.s32.totalorder %s67, %s81
    %p83 = scmp.eq.s32.totalorder %s15, 0
    %p84 = por %p82, %p83
    %s85 = ssub.s32 %s9, %s16
    %p86 = scmp.eq.s32.totalorder %s85, 0
    %s88 = sadd.s32 %s87, 1
    %s89 = scalar_select %p86, %s87, %s88
    %p92 = pneg %p86
    %p93 = scmp.eq.s32.totalorder %s9, 1
    %p94 = por %p92, %p93
    %p95 = scmp.ne.s32.totalorder %s87, %s90
    %p96 = scmp.eq.s32.totalorder %s9, 0
    %p97 = por %p95, %p96
    %p98 = scmp.ne.s32.totalorder %s87, %s90
    %p99 = scmp.eq.s32.totalorder %s14, 1
    %p100 = por %p98, %p99
    %p101 = scmp.ne.s32.totalorder %s90, %s91
    %p102 = scmp.eq.s32.totalorder %s14, 0
    %p103 = por %p101, %p102
    %p104 = scmp.ne.s32.totalorder %s90, %s91
    %p105 = scmp.eq.s32.totalorder %s15, 1
    %p106 = por %p104, %p105
    %p108 = scmp.ne.s32.totalorder %s91, %s107
    %p109 = scmp.eq.s32.totalorder %s15, 0
    %p110 = por %p108, %p109
    %p111 = scmp.le.s32.totalorder 1, %s9
    %p112 = scmp.lt.s32.totalorder %s9, 3
    %p113 = pnand %p111, %p112
    %p114 = pneg %p113
    // Predicated region
    $region9: #{critic_forward.4} parent=5 // pred_check
      _
    $region10: #{critic_forward.4} parent=5 // pred_check_branch
      %116 = sbr.rel (%p113) target = $region12
    $region11: #{critic_forward.4} parent=5 // pred_region
      %s117 = ssub.s32 %s9, 1
      // Predicated region
      $region13: #{critic_forward.4} parent=11 // pred_check
        %p118 = pneg %p56
      $region14: #{critic_forward.4} parent=11 // pred_check_branch
        %120 = sbr.rel (%p118) target = $region16
      $region15: #{critic_forward.4} parent=11 // pred_region
        _
      $region16: #{critic_forward.4} parent=11 // pred_fallthru
        _
      // Predicated region
      $region17: #{critic_forward.4} parent=11 // pred_check
        %p121 = pneg %p77
      $region18: #{critic_forward.4} parent=11 // pred_check_branch
        %123 = sbr.rel (%p121) target = $region20
      $region19: #{critic_forward.4} parent=11 // pred_region
        _
      $region20: #{critic_forward.4} parent=11 // pred_fallthru
        _
    $region12: #{critic_forward.4} parent=5 // pred_fallthru
      _
    %p124 = scmp.lt.s32.totalorder %s9, 2
    // Predicated region
    $region21: #{critic_forward.4} parent=5 // pred_check
      %p125 = pneg %p124
    $region22: #{critic_forward.4} parent=5 // pred_check_branch
      %127 = sbr.rel (%p125) target = $region24
    $region23: #{critic_forward.4} parent=5 // pred_region
      // Predicated region
      $region25: #{critic_forward.4} parent=23 // pred_check
        %p128 = pneg %p29
      $region26: #{critic_forward.4} parent=23 // pred_check_branch
        %130 = sbr.rel (%p128) target = $region28
      $region27: #{critic_forward.4} parent=23 // pred_region
        %p131 = scmp.lt.s32.totalorder %s9, 1
        %s132 = scalar_select %p131, %s9, 1
        %s133 = smul.addr %s132, 128
        %s134 = smul.addr %s133, 8
        %s135 = scalar_lea.vmem %s0, %s134
      $region28: #{critic_forward.4} parent=23 // pred_fallthru
        _
    $region24: #{critic_forward.4} parent=5 // pred_fallthru
      _
    %p136 = scmp.le.s32.totalorder 1, %s9
    %p137 = scmp.lt.s32.totalorder %s9, 3
    %p138 = pnand %p136, %p137
    %p139 = pneg %p138
    // Predicated region
    $region29: #{critic_forward.4} parent=5 // pred_check
      _
    $region30: #{critic_forward.4} parent=5 // pred_check_branch
      %141 = sbr.rel (%p138) target = $region32
    $region31: #{critic_forward.4} parent=5 // pred_region
      %s142 = ssub.s32 %s9, 1
      %p143 = scmp.lt.s32.totalorder %s14, 1
      %s144 = scalar_select %p143, %s14, 1
      %s145 = smul.addr %s144, 128
      %s146 = smul.addr %s145, 8
      %s147 = scalar_lea.vmem %s0, %s146
      %p148 = pneg %p35
      %p149 = pneg %p32
      %p150 = pneg %p56
      %p151 = pneg %p53
      %p152 = pneg %p77
      %p153 = pneg %p74
      %p154 = pneg %p103
      %p155 = pneg %p100
      %p156 = scmp.lt.s32.totalorder %s14, 1
      %s157 = scalar_select %p156, %s14, 1
      %s158 = smul.addr %s157, 128
      %s159 = smul.addr %s158, 8
      %s160 = scalar_lea.vmem %s3, %s159
      %p161 = scmp.lt.s32.totalorder %s14, 1
      %s162 = scalar_select %p161, %s14, 1
      %s163 = smul.addr %s162, 128
      %s164 = smul.addr %s163, 8
      %s165 = scalar_lea.vmem %s0, %s164
      %p166 = scmp.lt.s32.totalorder %s14, 1
      %s167 = scalar_select %p166, %s14, 1
      %s168 = smul.addr %s167, 128
      %s169 = smul.addr %s168, 8
      %s170 = scalar_lea.vmem %s3, %s169
      %v171 = vld [vmem:[%s165] sm:$0xff]
      %v172 = vld [vmem:[%s165 + $0x8] sm:$0xff]
      %v173 = vld [vmem:[%s165 + $0x10] sm:$0xff]
      %v174 = vld [vmem:[%s165 + $0x18] sm:$0xff]
      %v175 = vld [vmem:[%s165 + $0x20] sm:$0xff]
      %v176 = vld [vmem:[%s165 + $0x28] sm:$0xff]
      %v177 = vld [vmem:[%s165 + $0x30] sm:$0xff]
      %v178 = vld [vmem:[%s165 + $0x38] sm:$0xff]
      %v179 = vld [vmem:[%s165 + $0x40] sm:$0xff]
      %v180 = vld [vmem:[%s165 + $0x48] sm:$0xff]
      %v181 = vld [vmem:[%s165 + $0x50] sm:$0xff]
      %v182 = vld [vmem:[%s165 + $0x58] sm:$0xff]
      %v183 = vld [vmem:[%s165 + $0x60] sm:$0xff]
      %v184 = vld [vmem:[%s165 + $0x68] sm:$0xff]
      %v185 = vld [vmem:[%s165 + $0x70] sm:$0xff]
      %v186 = vld [vmem:[%s165 + $0x78] sm:$0xff]
      %v187 = vld [vmem:[%s165 + $0x80] sm:$0xff]
      %v188 = vld [vmem:[%s165 + $0x88] sm:$0xff]
      %v189 = vld [vmem:[%s165 + $0x90] sm:$0xff]
      %v190 = vld [vmem:[%s165 + $0x98] sm:$0xff]
      %v191 = vld [vmem:[%s165 + $0xa0] sm:$0xff]
      %v192 = vld [vmem:[%s165 + $0xa8] sm:$0xff]
      %v193 = vld [vmem:[%s165 + $0xb0] sm:$0xff]
      %v194 = vld [vmem:[%s165 + $0xb8] sm:$0xff]
      %v195 = vld [vmem:[%s165 + $0xc0] sm:$0xff]
      %v196 = vld [vmem:[%s165 + $0xc8] sm:$0xff]
      %v197 = vld [vmem:[%s165 + $0xd0] sm:$0xff]
      %v198 = vld [vmem:[%s165 + $0xd8] sm:$0xff]
      %v199 = vld [vmem:[%s165 + $0xe0] sm:$0xff]
      %v200 = vld [vmem:[%s165 + $0xe8] sm:$0xff]
      %v201 = vld [vmem:[%s165 + $0xf0] sm:$0xff]
      %v202 = vld [vmem:[%s165 + $0xf8] sm:$0xff]
      %v203 = vld [vmem:[%s165 + $0x100] sm:$0xff]
      %v204 = vld [vmem:[%s165 + $0x108] sm:$0xff]
      %v205 = vld [vmem:[%s165 + $0x110] sm:$0xff]
      %v206 = vld [vmem:[%s165 + $0x118] sm:$0xff]
      %v207 = vld [vmem:[%s165 + $0x120] sm:$0xff]
      %v208 = vld [vmem:[%s165 + $0x128] sm:$0xff]
      %v209 = vld [vmem:[%s165 + $0x130] sm:$0xff]
      %v210 = vld [vmem:[%s165 + $0x138] sm:$0xff]
      %v211 = vld [vmem:[%s165 + $0x140] sm:$0xff]
      %v212 = vld [vmem:[%s165 + $0x148] sm:$0xff]
      %v213 = vld [vmem:[%s165 + $0x150] sm:$0xff]
      %v214 = vld [vmem:[%s165 + $0x158] sm:$0xff]
      %v215 = vld [vmem:[%s165 + $0x160] sm:$0xff]
      %v216 = vld [vmem:[%s165 + $0x168] sm:$0xff]
      %v217 = vld [vmem:[%s165 + $0x170] sm:$0xff]
      %v218 = vld [vmem:[%s165 + $0x178] sm:$0xff]
      %v219 = vld [vmem:[%s165 + $0x180] sm:$0xff]
      %v220 = vld [vmem:[%s165 + $0x188] sm:$0xff]
      %v221 = vld [vmem:[%s165 + $0x190] sm:$0xff]
      %v222 = vld [vmem:[%s165 + $0x198] sm:$0xff]
      %v223 = vld [vmem:[%s165 + $0x1a0] sm:$0xff]
      %v224 = vld [vmem:[%s165 + $0x1a8] sm:$0xff]
      %v225 = vld [vmem:[%s165 + $0x1b0] sm:$0xff]
      %v226 = vld [vmem:[%s165 + $0x1b8] sm:$0xff]
      %v227 = vld [vmem:[%s165 + $0x1c0] sm:$0xff]
      %v228 = vld [vmem:[%s165 + $0x1c8] sm:$0xff]
      %v229 = vld [vmem:[%s165 + $0x1d0] sm:$0xff]
      %v230 = vld [vmem:[%s165 + $0x1d8] sm:$0xff]
      %v231 = vld [vmem:[%s165 + $0x1e0] sm:$0xff]
      %v232 = vld [vmem:[%s165 + $0x1e8] sm:$0xff]
      %v233 = vld [vmem:[%s165 + $0x1f0] sm:$0xff]
      %v234 = vld [vmem:[%s165 + $0x1f8] sm:$0xff]
      %v235 = vld [vmem:[%s165 + $0x200] sm:$0xff]
      %v236 = vld [vmem:[%s165 + $0x208] sm:$0xff]
      %v237 = vld [vmem:[%s165 + $0x210] sm:$0xff]
      %v238 = vld [vmem:[%s165 + $0x218] sm:$0xff]
      %v239 = vld [vmem:[%s165 + $0x220] sm:$0xff]
      %v240 = vld [vmem:[%s165 + $0x228] sm:$0xff]
      %v241 = vld [vmem:[%s165 + $0x230] sm:$0xff]
      %v242 = vld [vmem:[%s165 + $0x238] sm:$0xff]
      %v243 = vld [vmem:[%s165 + $0x240] sm:$0xff]
      %v244 = vld [vmem:[%s165 + $0x248] sm:$0xff]
      %v245 = vld [vmem:[%s165 + $0x250] sm:$0xff]
      %v246 = vld [vmem:[%s165 + $0x258] sm:$0xff]
      %v247 = vld [vmem:[%s165 + $0x260] sm:$0xff]
      %v248 = vld [vmem:[%s165 + $0x268] sm:$0xff]
      %v249 = vld [vmem:[%s165 + $0x270] sm:$0xff]
      %v250 = vld [vmem:[%s165 + $0x278] sm:$0xff]
      %v251 = vld [vmem:[%s165 + $0x280] sm:$0xff]
      %v252 = vld [vmem:[%s165 + $0x288] sm:$0xff]
      %v253 = vld [vmem:[%s165 + $0x290] sm:$0xff]
      %v254 = vld [vmem:[%s165 + $0x298] sm:$0xff]
      %v255 = vld [vmem:[%s165 + $0x2a0] sm:$0xff]
      %v256 = vld [vmem:[%s165 + $0x2a8] sm:$0xff]
      %v257 = vld [vmem:[%s165 + $0x2b0] sm:$0xff]
      %v258 = vld [vmem:[%s165 + $0x2b8] sm:$0xff]
      %v259 = vld [vmem:[%s165 + $0x2c0] sm:$0xff]
      %v260 = vld [vmem:[%s165 + $0x2c8] sm:$0xff]
      %v261 = vld [vmem:[%s165 + $0x2d0] sm:$0xff]
      %v262 = vld [vmem:[%s165 + $0x2d8] sm:$0xff]
      %v263 = vld [vmem:[%s165 + $0x2e0] sm:$0xff]
      %v264 = vld [vmem:[%s165 + $0x2e8] sm:$0xff]
      %v265 = vld [vmem:[%s165 + $0x2f0] sm:$0xff]
      %v266 = vld [vmem:[%s165 + $0x2f8] sm:$0xff]
      %v267 = vld [vmem:[%s165 + $0x300] sm:$0xff]
      %v268 = vld [vmem:[%s165 + $0x308] sm:$0xff]
      %v269 = vld [vmem:[%s165 + $0x310] sm:$0xff]
      %v270 = vld [vmem:[%s165 + $0x318] sm:$0xff]
      %v271 = vld [vmem:[%s165 + $0x320] sm:$0xff]
      %v272 = vld [vmem:[%s165 + $0x328] sm:$0xff]
      %v273 = vld [vmem:[%s165 + $0x330] sm:$0xff]
      %v274 = vld [vmem:[%s165 + $0x338] sm:$0xff]
      %v275 = vld [vmem:[%s165 + $0x340] sm:$0xff]
      %v276 = vld [vmem:[%s165 + $0x348] sm:$0xff]
      %v277 = vld [vmem:[%s165 + $0x350] sm:$0xff]
      %v278 = vld [vmem:[%s165 + $0x358] sm:$0xff]
      %v279 = vld [vmem:[%s165 + $0x360] sm:$0xff]
      %v280 = vld [vmem:[%s165 + $0x368] sm:$0xff]
      %v281 = vld [vmem:[%s165 + $0x370] sm:$0xff]
      %v282 = vld [vmem:[%s165 + $0x378] sm:$0xff]
      %v283 = vld [vmem:[%s165 + $0x380] sm:$0xff]
      %v284 = vld [vmem:[%s165 + $0x388] sm:$0xff]
      %v285 = vld [vmem:[%s165 + $0x390] sm:$0xff]
      %v286 = vld [vmem:[%s165 + $0x398] sm:$0xff]
      %v287 = vld [vmem:[%s165 + $0x3a0] sm:$0xff]
      %v288 = vld [vmem:[%s165 + $0x3a8] sm:$0xff]
      %v289 = vld [vmem:[%s165 + $0x3b0] sm:$0xff]
      %v290 = vld [vmem:[%s165 + $0x3b8] sm:$0xff]
      %v291 = vld [vmem:[%s165 + $0x3c0] sm:$0xff]
      %v292 = vld [vmem:[%s165 + $0x3c8] sm:$0xff]
      %v293 = vld [vmem:[%s165 + $0x3d0] sm:$0xff]
      %v294 = vld [vmem:[%s165 + $0x3d8] sm:$0xff]
      %v295 = vld [vmem:[%s165 + $0x3e0] sm:$0xff]
      %v296 = vld [vmem:[%s165 + $0x3e8] sm:$0xff]
      %v297 = vld [vmem:[%s165 + $0x3f0] sm:$0xff]
      %v298 = vld [vmem:[%s165 + $0x3f8] sm:$0xff]
      %v299 = vld [vmem:[%s1] sm:$0xff]
      %v300 = vld [vmem:[%s1 + $0x8] sm:$0xff]
      %v301 = vld [vmem:[%s1 + $0x10] sm:$0xff]
      %v302 = vld [vmem:[%s1 + $0x18] sm:$0xff]
      %v303 = vld [vmem:[%s1 + $0x20] sm:$0xff]
      %v304 = vld [vmem:[%s1 + $0x28] sm:$0xff]
      %v305 = vld [vmem:[%s2] sm:$0x1]
      %v307 = vlaneseq
      %v308 = vshrl.u32 %v307, 7
      %v309 = vsub.s32 0, %v308
      %v310 = vrot.slane %v305, %v309
      %vm312 = vcmask 392192
      %v314 = vsel %vm312, %v171, 0
      %v317 = vsel %vm312, %v172, 0
      %v320 = vsel %vm312, %v173, 0
      %v323 = vsel %vm312, %v174, 0
      %v326 = vsel %vm312, %v175, 0
      %v329 = vsel %vm312, %v176, 0
      %v332 = vsel %vm312, %v177, 0
      %v335 = vsel %vm312, %v178, 0
      %v338 = vsel %vm312, %v179, 0
      %v341 = vsel %vm312, %v180, 0
      %v344 = vsel %vm312, %v181, 0
      %v347 = vsel %vm312, %v182, 0
      %v350 = vsel %vm312, %v183, 0
      %v353 = vsel %vm312, %v184, 0
      %v356 = vsel %vm312, %v185, 0
      %v359 = vsel %vm312, %v186, 0
      %v362 = vsel %vm312, %v187, 0
      %v365 = vsel %vm312, %v188, 0
      %v368 = vsel %vm312, %v189, 0
      %v371 = vsel %vm312, %v190, 0
      %v374 = vsel %vm312, %v191, 0
      %v377 = vsel %vm312, %v192, 0
      %v380 = vsel %vm312, %v193, 0
      %v383 = vsel %vm312, %v194, 0
      %v386 = vsel %vm312, %v195, 0
      %v389 = vsel %vm312, %v196, 0
      %v392 = vsel %vm312, %v197, 0
      %v395 = vsel %vm312, %v198, 0
      %v398 = vsel %vm312, %v199, 0
      %v401 = vsel %vm312, %v200, 0
      %v404 = vsel %vm312, %v201, 0
      %v407 = vsel %vm312, %v202, 0
      %v410 = vsel %vm312, %v203, 0
      %v413 = vsel %vm312, %v204, 0
      %v416 = vsel %vm312, %v205, 0
      %v419 = vsel %vm312, %v206, 0
      %v422 = vsel %vm312, %v207, 0
      %v425 = vsel %vm312, %v208, 0
      %v428 = vsel %vm312, %v209, 0
      %v431 = vsel %vm312, %v210, 0
      %v434 = vsel %vm312, %v211, 0
      %v437 = vsel %vm312, %v212, 0
      %v440 = vsel %vm312, %v213, 0
      %v443 = vsel %vm312, %v214, 0
      %v446 = vsel %vm312, %v215, 0
      %v449 = vsel %vm312, %v216, 0
      %v452 = vsel %vm312, %v217, 0
      %v455 = vsel %vm312, %v218, 0
      %v458 = vsel %vm312, %v219, 0
      %v461 = vsel %vm312, %v220, 0
      %v464 = vsel %vm312, %v221, 0
      %v467 = vsel %vm312, %v222, 0
      %v470 = vsel %vm312, %v223, 0
      %v473 = vsel %vm312, %v224, 0
      %v476 = vsel %vm312, %v225, 0
      %v479 = vsel %vm312, %v226, 0
      %v482 = vsel %vm312, %v227, 0
      %v485 = vsel %vm312, %v228, 0
      %v488 = vsel %vm312, %v229, 0
      %v491 = vsel %vm312, %v230, 0
      %v494 = vsel %vm312, %v231, 0
      %v497 = vsel %vm312, %v232, 0
      %v500 = vsel %vm312, %v233, 0
      %v503 = vsel %vm312, %v234, 0
      %v506 = vsel %vm312, %v235, 0
      %v509 = vsel %vm312, %v236, 0
      %v512 = vsel %vm312, %v237, 0
      %v515 = vsel %vm312, %v238, 0
      %v518 = vsel %vm312, %v239, 0
      %v521 = vsel %vm312, %v240, 0
      %v524 = vsel %vm312, %v241, 0
      %v527 = vsel %vm312, %v242, 0
      %v530 = vsel %vm312, %v243, 0
      %v533 = vsel %vm312, %v244, 0
      %v536 = vsel %vm312, %v245, 0
      %v539 = vsel %vm312, %v246, 0
      %v542 = vsel %vm312, %v247, 0
      %v545 = vsel %vm312, %v248, 0
      %v548 = vsel %vm312, %v249, 0
      %v551 = vsel %vm312, %v250, 0
      %v554 = vsel %vm312, %v251, 0
      %v557 = vsel %vm312, %v252, 0
      %v560 = vsel %vm312, %v253, 0
      %v563 = vsel %vm312, %v254, 0
      %v566 = vsel %vm312, %v255, 0
      %v569 = vsel %vm312, %v256, 0
      %v572 = vsel %vm312, %v257, 0
      %v575 = vsel %vm312, %v258, 0
      %v578 = vsel %vm312, %v259, 0
      %v581 = vsel %vm312, %v260, 0
      %v584 = vsel %vm312, %v261, 0
      %v587 = vsel %vm312, %v262, 0
      %v590 = vsel %vm312, %v263, 0
      %v593 = vsel %vm312, %v264, 0
      %v596 = vsel %vm312, %v265, 0
      %v599 = vsel %vm312, %v266, 0
      %v602 = vsel %vm312, %v267, 0
      %v605 = vsel %vm312, %v268, 0
      %v608 = vsel %vm312, %v269, 0
      %v611 = vsel %vm312, %v270, 0
      %v614 = vsel %vm312, %v271, 0
      %v617 = vsel %vm312, %v272, 0
      %v620 = vsel %vm312, %v273, 0
      %v623 = vsel %vm312, %v274, 0
      %v626 = vsel %vm312, %v275, 0
      %v629 = vsel %vm312, %v276, 0
      %v632 = vsel %vm312, %v277, 0
      %v635 = vsel %vm312, %v278, 0
      %v638 = vsel %vm312, %v279, 0
      %v641 = vsel %vm312, %v280, 0
      %v644 = vsel %vm312, %v281, 0
      %v647 = vsel %vm312, %v282, 0
      %v650 = vsel %vm312, %v283, 0
      %v653 = vsel %vm312, %v284, 0
      %v656 = vsel %vm312, %v285, 0
      %v659 = vsel %vm312, %v286, 0
      %v662 = vsel %vm312, %v287, 0
      %v665 = vsel %vm312, %v288, 0
      %v668 = vsel %vm312, %v289, 0
      %v671 = vsel %vm312, %v290, 0
      %v674 = vsel %vm312, %v291, 0
      %v677 = vsel %vm312, %v292, 0
      %v680 = vsel %vm312, %v293, 0
      %v683 = vsel %vm312, %v294, 0
      %v686 = vsel %vm312, %v295, 0
      %v689 = vsel %vm312, %v296, 0
      %v692 = vsel %vm312, %v297, 0
      %v695 = vsel %vm312, %v298, 0
      %697 = vmatprep.subr.mxu0 0.0
      %698 = vmatpush1.msra.mxu0 %v299
      %699 = vmatprep.subr.mxu0 0.0
      %700 = vmatpush1.msra.mxu0 %v300
      %701 = vmatprep.subr.mxu0 0.0
      %702 = vmatpush1.msra.mxu0 %v301
      %703 = vmatprep.subr.mxu0 0.0
      %704 = vmatpush1.msra.mxu0 %v302
      %705 = vmatprep.subr.mxu0 0.0
      %706 = vmatpush1.msra.mxu0 %v303
      %707 = vmatprep.subr.mxu0 0.0
      %708 = vmatpush1.msra.mxu0 %v304
      %709 = vmatprep.subr.mxu0 0.0
      %710 = vmatpush1.msra.mxu0 0.0
      %711 = vmatprep.subr.mxu0 0.0
      %712 = vmatpush1.msra.mxu0 0.0
      %713 = vmatprep.subr.mxu0 0.0
      %714 = vmatpush1.msra.mxu0 0.0
      %715 = vmatprep.subr.mxu0 0.0
      %716 = vmatpush1.msra.mxu0 0.0
      %717 = vmatprep.subr.mxu0 0.0
      %718 = vmatpush1.msra.mxu0 0.0
      %719 = vmatprep.subr.mxu0 0.0
      %720 = vmatpush1.msra.mxu0 0.0
      %721 = vmatprep.subr.mxu0 0.0
      %722 = vmatpush1.msra.mxu0 0.0
      %723 = vmatprep.subr.mxu0 0.0
      %724 = vmatpush1.msra.mxu0 0.0
      %725 = vmatprep.subr.mxu0 0.0
      %726 = vmatpush1.msra.mxu0 0.0
      %727 = vmatprep.subr.mxu0 0.0
      %728 = vmatpush1.msra.mxu0 0.0
      %729 = vmatprep.subr.mxu0 0.0
      %730 = vmatpush1.msra.mxu0 0.0
      %731 = vmatprep.subr.mxu0 0.0
      %732 = vmatpush1.msra.mxu0 0.0
      %733 = vmatprep.subr.mxu0 0.0
      %734 = vmatpush1.msra.mxu0 0.0
      %735 = vmatprep.subr.mxu0 0.0
      %736 = vmatpush1.msra.mxu0 0.0
      %737 = vmatprep.subr.mxu0 0.0
      %738 = vmatpush1.msra.mxu0 0.0
      %739 = vmatprep.subr.mxu0 0.0
      %740 = vmatpush1.msra.mxu0 0.0
      %741 = vmatprep.subr.mxu0 0.0
      %742 = vmatpush1.msra.mxu0 0.0
      %743 = vmatprep.subr.mxu0 0.0
      %744 = vmatpush1.msra.mxu0 0.0
      %745 = vmatprep.subr.mxu0 0.0
      %746 = vmatpush1.msra.mxu0 0.0
      %747 = vmatprep.subr.mxu0 0.0
      %748 = vmatpush1.msra.mxu0 0.0
      %749 = vmatprep.subr.mxu0 0.0
      %750 = vmatpush1.msra.mxu0 0.0
      %751 = vmatprep.subr.mxu0 0.0
      %752 = vmatpush1.msra.mxu0 0.0
      %753 = vmatprep.subr.mxu0 0.0
      %754 = vmatpush1.msra.mxu0 0.0
      %755 = vmatprep.subr.mxu0 0.0
      %756 = vmatpush1.msra.mxu0 0.0
      %757 = vmatprep.subr.mxu0 0.0
      %758 = vmatpush1.msra.mxu0 0.0
      %759 = vmatprep.subr.mxu0 0.0
      %760 = vmatpush1.msra.mxu0 0.0
      %761 = vmatprep.mubr.f32.mxu0 0.0
      %762 = vmatmul.mubr.f32.gmra.mrb[0].mxu0 %v314
      %v763 = vpop.f32.mrb[0].mxu0
      %v764 = vadd.f32 %v310, %v763
      %v765 = vpop.f32.mrb[0].mxu0
      %766 = vmatprep.mubr.f32.mxu0 0.0
      %767 = vmatmul.mubr.f32.gmra.mrb[0].mxu0 %v317
      %v768 = vpop.f32.mrb[0].mxu0
      %v769 = vadd.f32 %v310, %v768
      %v770 = vpop.f32.mrb[0].mxu0
      %771 = vmatprep.mubr.f32.mxu0 0.0
      %772 = vmatmul.mubr.f32.gmra.mrb[0].mxu0 %v320
      %v773 = vpop.f32.mrb[0].mxu0
      %v774 = vadd.f32 %v310, %v773
      %v775 = vpop.f32.mrb[0].mxu0
      %776 = vmatprep.mubr.f32.mxu0 0.0
      %777 = vmatmul.mubr.f32.gmra.mrb[0].mxu0 %v323
      %v778 = vpop.f32.mrb[0].mxu0
      %v779 = vadd.f32 %v310, %v778
      %v780 = vpop.f32.mrb[0].mxu0
      %781 = vmatprep.mubr.f32.mxu0 0.0
      %782 = vmatmul.mubr.f32.gmra.mrb[0].mxu0 %v326
      %v783 = vpop.f32.mrb[0].mxu0
      %v784 = vadd.f32 %v310, %v783
      %v785 = vpop.f32.mrb[0].mxu0
      %786 = vmatprep.mubr.f32.mxu0 0.0
      %787 = vmatmul.mubr.f32.gmra.mrb[0].mxu0 %v329
      %v788 = vpop.f32.mrb[0].mxu0
      %v789 = vadd.f32 %v310, %v788
      %v790 = vpop.f32.mrb[0].mxu0
      %791 = vmatprep.mubr.f32.mxu0 0.0
      %792 = vmatmul.mubr.f32.gmra.mrb[0].mxu0 %v332
      %v793 = vpop.f32.mrb[0].mxu0
      %v794 = vadd.f32 %v310, %v793
      %v795 = vpop.f32.mrb[0].mxu0
      %796 = vmatprep.mubr.f32.mxu0 0.0
      %797 = vmatmul.mubr.f32.gmra.mrb[0].mxu0 %v335
      %v798 = vpop.f32.mrb[0].mxu0
      %v799 = vadd.f32 %v310, %v798
      %v800 = vpop.f32.mrb[0].mxu0
      %801 = vmatprep.mubr.f32.mxu0 0.0
      %802 = vmatmul.mubr.f32.gmra.mrb[0].mxu0 %v338
      %v803 = vpop.f32.mrb[0].mxu0
      %v804 = vadd.f32 %v310, %v803
      %v805 = vpop.f32.mrb[0].mxu0
      %806 = vmatprep.mubr.f32.mxu0 0.0
      %807 = vmatmul.mubr.f32.gmra.mrb[0].mxu0 %v341
      %v808 = vpop.f32.mrb[0].mxu0
      %v809 = vadd.f32 %v310, %v808
      %v810 = vpop.f32.mrb[0].mxu0
      %811 = vmatprep.mubr.f32.mxu0 0.0
      %812 = vmatmul.mubr.f32.gmra.mrb[0].mxu0 %v344
      %v813 = vpop.f32.mrb[0].mxu0
      %v814 = vadd.f32 %v310, %v813
      %v815 = vpop.f32.mrb[0].mxu0
      %816 = vmatprep.mubr.f32.mxu0 0.0
      %817 = vmatmul.mubr.f32.gmra.mrb[0].mxu0 %v347
      %v818 = vpop.f32.mrb[0].mxu0
      %v819 = vadd.f32 %v310, %v818
      %v820 = vpop.f32.mrb[0].mxu0
      %821 = vmatprep.mubr.f32.mxu0 0.0
      %822 = vmatmul.mubr.f32.gmra.mrb[0].mxu0 %v350
      %v823 = vpop.f32.mrb[0].mxu0
      %v824 = vadd.f32 %v310, %v823
      %v825 = vpop.f32.mrb[0].mxu0
      %826 = vmatprep.mubr.f32.mxu0 0.0
      %827 = vmatmul.mubr.f32.gmra.mrb[0].mxu0 %v353
      %v828 = vpop.f32.mrb[0].mxu0
      %v829 = vadd.f32 %v310, %v828
      %v830 = vpop.f32.mrb[0].mxu0
      %831 = vmatprep.mubr.f32.mxu0 0.0
      %832 = vmatmul.mubr.f32.gmra.mrb[0].mxu0 %v356
      %v833 = vpop.f32.mrb[0].mxu0
      %v834 = vadd.f32 %v310, %v833
      %v835 = vpop.f32.mrb[0].mxu0
      %836 = vmatprep.mubr.f32.mxu0 0.0
      %837 = vmatmul.mubr.f32.gmra.mrb[0].mxu0 %v359
      %v838 = vpop.f32.mrb[0].mxu0
      %v839 = vadd.f32 %v310, %v838
      %v840 = vpop.f32.mrb[0].mxu0
      %841 = vmatprep.mubr.f32.mxu0 0.0
      %842 = vmatmul.mubr.f32.gmra.mrb[0].mxu0 %v362
      %v843 = vpop.f32.mrb[0].mxu0
      %v844 = vadd.f32 %v310, %v843
      %v845 = vpop.f32.mrb[0].mxu0
      %846 = vmatprep.mubr.f32.mxu0 0.0
      %847 = vmatmul.mubr.f32.gmra.mrb[0].mxu0 %v365
      %v848 = vpop.f32.mrb[0].mxu0
      %v849 = vadd.f32 %v310, %v848
      %v850 = vpop.f32.mrb[0].mxu0
      %851 = vmatprep.mubr.f32.mxu0 0.0
      %852 = vmatmul.mubr.f32.gmra.mrb[0].mxu0 %v368
      %v853 = vpop.f32.mrb[0].mxu0
      %v854 = vadd.f32 %v310, %v853
      %v855 = vpop.f32.mrb[0].mxu0
      %856 = vmatprep.mubr.f32.mxu0 0.0
      %857 = vmatmul.mubr.f32.gmra.mrb[0].mxu0 %v371
      %v858 = vpop.f32.mrb[0].mxu0
      %v859 = vadd.f32 %v310, %v858
      %v860 = vpop.f32.mrb[0].mxu0
      %861 = vmatprep.mubr.f32.mxu0 0.0
      %862 = vmatmul.mubr.f32.gmra.mrb[0].mxu0 %v374
      %v863 = vpop.f32.mrb[0].mxu0
      %v864 = vadd.f32 %v310, %v863
      %v865 = vpop.f32.mrb[0].mxu0
      %866 = vmatprep.mubr.f32.mxu0 0.0
      %867 = vmatmul.mubr.f32.gmra.mrb[0].mxu0 %v377
      %v868 = vpop.f32.mrb[0].mxu0
      %v869 = vadd.f32 %v310, %v868
      %v870 = vpop.f32.mrb[0].mxu0
      %871 = vmatprep.mubr.f32.mxu0 0.0
      %872 = vmatmul.mubr.f32.gmra.mrb[0].mxu0 %v380
      %v873 = vpop.f32.mrb[0].mxu0
      %v874 = vadd.f32 %v310, %v873
      %v875 = vpop.f32.mrb[0].mxu0
      %876 = vmatprep.mubr.f32.mxu0 0.0
      %877 = vmatmul.mubr.f32.gmra.mrb[0].mxu0 %v383
      %v878 = vpop.f32.mrb[0].mxu0
      %v879 = vadd.f32 %v310, %v878
      %v880 = vpop.f32.mrb[0].mxu0
      %881 = vmatprep.mubr.f32.mxu0 0.0
      %882 = vmatmul.mubr.f32.gmra.mrb[0].mxu0 %v386
      %v883 = vpop.f32.mrb[0].mxu0
      %v884 = vadd.f32 %v310, %v883
      %v885 = vpop.f32.mrb[0].mxu0
      %886 = vmatprep.mubr.f32.mxu0 0.0
      %887 = vmatmul.mubr.f32.gmra.mrb[0].mxu0 %v389
      %v888 = vpop.f32.mrb[0].mxu0
      %v889 = vadd.f32 %v310, %v888
      %v890 = vpop.f32.mrb[0].mxu0
      %891 = vmatprep.mubr.f32.mxu0 0.0
      %892 = vmatmul.mubr.f32.gmra.mrb[0].mxu0 %v392
      %v893 = vpop.f32.mrb[0].mxu0
      %v894 = vadd.f32 %v310, %v893
      %v895 = vpop.f32.mrb[0].mxu0
      %896 = vmatprep.mubr.f32.mxu0 0.0
      %897 = vmatmul.mubr.f32.gmra.mrb[0].mxu0 %v395
      %v898 = vpop.f32.mrb[0].mxu0
      %v899 = vadd.f32 %v310, %v898
      %v900 = vpop.f32.mrb[0].mxu0
      %901 = vmatprep.mubr.f32.mxu0 0.0
      %902 = vmatmul.mubr.f32.gmra.mrb[0].mxu0 %v398
      %v903 = vpop.f32.mrb[0].mxu0
      %v904 = vadd.f32 %v310, %v903
      %v905 = vpop.f32.mrb[0].mxu0
      %906 = vmatprep.mubr.f32.mxu0 0.0
      %907 = vmatmul.mubr.f32.gmra.mrb[0].mxu0 %v401
      %v908 = vpop.f32.mrb[0].mxu0
      %v909 = vadd.f32 %v310, %v908
      %v910 = vpop.f32.mrb[0].mxu0
      %911 = vmatprep.mubr.f32.mxu0 0.0
      %912 = vmatmul.mubr.f32.gmra.mrb[0].mxu0 %v404
      %v913 = vpop.f32.mrb[0].mxu0
      %v914 = vadd.f32 %v310, %v913
      %v915 = vpop.f32.mrb[0].mxu0
      %916 = vmatprep.mubr.f32.mxu0 0.0
      %917 = vmatmul.mubr.f32.gmra.mrb[0].mxu0 %v407
      %v918 = vpop.f32.mrb[0].mxu0
      %v919 = vadd.f32 %v310, %v918
      %v920 = vpop.f32.mrb[0].mxu0
      %921 = vmatprep.mubr.f32.mxu0 0.0
      %922 = vmatmul.mubr.f32.gmra.mrb[0].mxu0 %v410
      %v923 = vpop.f32.mrb[0].mxu0
      %v924 = vadd.f32 %v310, %v923
      %v925 = vpop.f32.mrb[0].mxu0
      %926 = vmatprep.mubr.f32.mxu0 0.0
      %927 = vmatmul.mubr.f32.gmra.mrb[0].mxu0 %v413
      %v928 = vpop.f32.mrb[0].mxu0
      %v929 = vadd.f32 %v310, %v928
      %v930 = vpop.f32.mrb[0].mxu0
      %931 = vmatprep.mubr.f32.mxu0 0.0
      %932 = vmatmul.mubr.f32.gmra.mrb[0].mxu0 %v416
      %v933 = vpop.f32.mrb[0].mxu0
      %v934 = vadd.f32 %v310, %v933
      %v935 = vpop.f32.mrb[0].mxu0
      %936 = vmatprep.mubr.f32.mxu0 0.0
      %937 = vmatmul.mubr.f32.gmra.mrb[0].mxu0 %v419
      %v938 = vpop.f32.mrb[0].mxu0
      %v939 = vadd.f32 %v310, %v938
      %v940 = vpop.f32.mrb[0].mxu0
      %941 = vmatprep.mubr.f32.mxu0 0.0
      %942 = vmatmul.mubr.f32.gmra.mrb[0].mxu0 %v422
      %v943 = vpop.f32.mrb[0].mxu0
      %v944 = vadd.f32 %v310, %v943
      %v945 = vpop.f32.mrb[0].mxu0
      %946 = vmatprep.mubr.f32.mxu0 0.0
      %947 = vmatmul.mubr.f32.gmra.mrb[0].mxu0 %v425
      %v948 = vpop.f32.mrb[0].mxu0
      %v949 = vadd.f32 %v310, %v948
      %v950 = vpop.f32.mrb[0].mxu0
      %951 = vmatprep.mubr.f32.mxu0 0.0
      %952 = vmatmul.mubr.f32.gmra.mrb[0].mxu0 %v428
      %v953 = vpop.f32.mrb[0].mxu0
      %v954 = vadd.f32 %v310, %v953
      %v955 = vpop.f32.mrb[0].mxu0
      %956 = vmatprep.mubr.f32.mxu0 0.0
      %957 = vmatmul.mubr.f32.gmra.mrb[0].mxu0 %v431
      %v958 = vpop.f32.mrb[0].mxu0
      %v959 = vadd.f32 %v310, %v958
      %v960 = vpop.f32.mrb[0].mxu0
      %961 = vmatprep.mubr.f32.mxu0 0.0
      %962 = vmatmul.mubr.f32.gmra.mrb[0].mxu0 %v434
      %v963 = vpop.f32.mrb[0].mxu0
      %v964 = vadd.f32 %v310, %v963
      %v965 = vpop.f32.mrb[0].mxu0
      %966 = vmatprep.mubr.f32.mxu0 0.0
      %967 = vmatmul.mubr.f32.gmra.mrb[0].mxu0 %v437
      %v968 = vpop.f32.mrb[0].mxu0
      %v969 = vadd.f32 %v310, %v968
      %v970 = vpop.f32.mrb[0].mxu0
      %971 = vmatprep.mubr.f32.mxu0 0.0
      %972 = vmatmul.mubr.f32.gmra.mrb[0].mxu0 %v440
      %v973 = vpop.f32.mrb[0].mxu0
      %v974 = vadd.f32 %v310, %v973
      %v975 = vpop.f32.mrb[0].mxu0
      %976 = vmatprep.mubr.f32.mxu0 0.0
      %977 = vmatmul.mubr.f32.gmra.mrb[0].mxu0 %v443
      %v978 = vpop.f32.mrb[0].mxu0
      %v979 = vadd.f32 %v310, %v978
      %v980 = vpop.f32.mrb[0].mxu0
      %981 = vmatprep.mubr.f32.mxu0 0.0
      %982 = vmatmul.mubr.f32.gmra.mrb[0].mxu0 %v446
      %v983 = vpop.f32.mrb[0].mxu0
      %v984 = vadd.f32 %v310, %v983
      %v985 = vpop.f32.mrb[0].mxu0
      %986 = vmatprep.mubr.f32.mxu0 0.0
      %987 = vmatmul.mubr.f32.gmra.mrb[0].mxu0 %v449
      %v988 = vpop.f32.mrb[0].mxu0
      %v989 = vadd.f32 %v310, %v988
      %v990 = vpop.f32.mrb[0].mxu0
      %991 = vmatprep.mubr.f32.mxu0 0.0
      %992 = vmatmul.mubr.f32.gmra.mrb[0].mxu0 %v452
      %v993 = vpop.f32.mrb[0].mxu0
      %v994 = vadd.f32 %v310, %v993
      %v995 = vpop.f32.mrb[0].mxu0
      %996 = vmatprep.mubr.f32.mxu0 0.0
      %997 = vmatmul.mubr.f32.gmra.mrb[0].mxu0 %v455
      %v998 = vpop.f32.mrb[0].mxu0
      %v999 = vadd.f32 %v310, %v998
      %v1000 = vpop.f32.mrb[0].mxu0
      %1001 = vmatprep.mubr.f32.mxu0 0.0
      %1002 = vmatmul.mubr.f32.gmra.mrb[0].mxu0 %v458
      %v1003 = vpop.f32.mrb[0].mxu0
      %v1004 = vadd.f32 %v310, %v1003
      %v1005 = vpop.f32.mrb[0].mxu0
      %1006 = vmatprep.mubr.f32.mxu0 0.0
      %1007 = vmatmul.mubr.f32.gmra.mrb[0].mxu0 %v461
      %v1008 = vpop.f32.mrb[0].mxu0
      %v1009 = vadd.f32 %v310, %v1008
      %v1010 = vpop.f32.mrb[0].mxu0
      %1011 = vmatprep.mubr.f32.mxu0 0.0
      %1012 = vmatmul.mubr.f32.gmra.mrb[0].mxu0 %v464
      %v1013 = vpop.f32.mrb[0].mxu0
      %v1014 = vadd.f32 %v310, %v1013
      %v1015 = vpop.f32.mrb[0].mxu0
      %1016 = vmatprep.mubr.f32.mxu0 0.0
      %1017 = vmatmul.mubr.f32.gmra.mrb[0].mxu0 %v467
      %v1018 = vpop.f32.mrb[0].mxu0
      %v1019 = vadd.f32 %v310, %v1018
      %v1020 = vpop.f32.mrb[0].mxu0
      %1021 = vmatprep.mubr.f32.mxu0 0.0
      %1022 = vmatmul.mubr.f32.gmra.mrb[0].mxu0 %v470
      %v1023 = vpop.f32.mrb[0].mxu0
      %v1024 = vadd.f32 %v310, %v1023
      %v1025 = vpop.f32.mrb[0].mxu0
      %1026 = vmatprep.mubr.f32.mxu0 0.0
      %1027 = vmatmul.mubr.f32.gmra.mrb[0].mxu0 %v473
      %v1028 = vpop.f32.mrb[0].mxu0
      %v1029 = vadd.f32 %v310, %v1028
      %v1030 = vpop.f32.mrb[0].mxu0
      %1031 = vmatprep.mubr.f32.mxu0 0.0
      %1032 = vmatmul.mubr.f32.gmra.mrb[0].mxu0 %v476
      %v1033 = vpop.f32.mrb[0].mxu0
      %v1034 = vadd.f32 %v310, %v1033
      %v1035 = vpop.f32.mrb[0].mxu0
      %1036 = vmatprep.mubr.f32.mxu0 0.0
      %1037 = vmatmul.mubr.f32.gmra.mrb[0].mxu0 %v479
      %v1038 = vpop.f32.mrb[0].mxu0
      %v1039 = vadd.f32 %v310, %v1038
      %v1040 = vpop.f32.mrb[0].mxu0
      %1041 = vmatprep.mubr.f32.mxu0 0.0
      %1042 = vmatmul.mubr.f32.gmra.mrb[0].mxu0 %v482
      %v1043 = vpop.f32.mrb[0].mxu0
      %v1044 = vadd.f32 %v310, %v1043
      %v1045 = vpop.f32.mrb[0].mxu0
      %1046 = vmatprep.mubr.f32.mxu0 0.0
      %1047 = vmatmul.mubr.f32.gmra.mrb[0].mxu0 %v485
      %v1048 = vpop.f32.mrb[0].mxu0
      %v1049 = vadd.f32 %v310, %v1048
      %v1050 = vpop.f32.mrb[0].mxu0
      %1051 = vmatprep.mubr.f32.mxu0 0.0
      %1052 = vmatmul.mubr.f32.gmra.mrb[0].mxu0 %v488
      %v1053 = vpop.f32.mrb[0].mxu0
      %v1054 = vadd.f32 %v310, %v1053
      %v1055 = vpop.f32.mrb[0].mxu0
      %1056 = vmatprep.mubr.f32.mxu0 0.0
      %1057 = vmatmul.mubr.f32.gmra.mrb[0].mxu0 %v491
      %v1058 = vpop.f32.mrb[0].mxu0
      %v1059 = vadd.f32 %v310, %v1058
      %v1060 = vpop.f32.mrb[0].mxu0
      %1061 = vmatprep.mubr.f32.mxu0 0.0
      %1062 = vmatmul.mubr.f32.gmra.mrb[0].mxu0 %v494
      %v1063 = vpop.f32.mrb[0].mxu0
      %v1064 = vadd.f32 %v310, %v1063
      %v1065 = vpop.f32.mrb[0].mxu0
      %1066 = vmatprep.mubr.f32.mxu0 0.0
      %1067 = vmatmul.mubr.f32.gmra.mrb[0].mxu0 %v497
      %v1068 = vpop.f32.mrb[0].mxu0
      %v1069 = vadd.f32 %v310, %v1068
      %v1070 = vpop.f32.mrb[0].mxu0
      %1071 = vmatprep.mubr.f32.mxu0 0.0
      %1072 = vmatmul.mubr.f32.gmra.mrb[0].mxu0 %v500
      %v1073 = vpop.f32.mrb[0].mxu0
      %v1074 = vadd.f32 %v310, %v1073
      %v1075 = vpop.f32.mrb[0].mxu0
      %1076 = vmatprep.mubr.f32.mxu0 0.0
      %1077 = vmatmul.mubr.f32.gmra.mrb[0].mxu0 %v503
      %v1078 = vpop.f32.mrb[0].mxu0
      %v1079 = vadd.f32 %v310, %v1078
      %v1080 = vpop.f32.mrb[0].mxu0
      %1081 = vmatprep.mubr.f32.mxu0 0.0
      %1082 = vmatmul.mubr.f32.gmra.mrb[0].mxu0 %v506
      %v1083 = vpop.f32.mrb[0].mxu0
      %v1084 = vadd.f32 %v310, %v1083
      %v1085 = vpop.f32.mrb[0].mxu0
      %1086 = vmatprep.mubr.f32.mxu0 0.0
      %1087 = vmatmul.mubr.f32.gmra.mrb[0].mxu0 %v509
      %v1088 = vpop.f32.mrb[0].mxu0
      %v1089 = vadd.f32 %v310, %v1088
      %v1090 = vpop.f32.mrb[0].mxu0
      %1091 = vmatprep.mubr.f32.mxu0 0.0
      %1092 = vmatmul.mubr.f32.gmra.mrb[0].mxu0 %v512
      %v1093 = vpop.f32.mrb[0].mxu0
      %v1094 = vadd.f32 %v310, %v1093
      %v1095 = vpop.f32.mrb[0].mxu0
      %1096 = vmatprep.mubr.f32.mxu0 0.0
      %1097 = vmatmul.mubr.f32.gmra.mrb[0].mxu0 %v515
      %v1098 = vpop.f32.mrb[0].mxu0
      %v1099 = vadd.f32 %v310, %v1098
      %v1100 = vpop.f32.mrb[0].mxu0
      %1101 = vmatprep.mubr.f32.mxu0 0.0
      %1102 = vmatmul.mubr.f32.gmra.mrb[0].mxu0 %v518
      %v1103 = vpop.f32.mrb[0].mxu0
      %v1104 = vadd.f32 %v310, %v1103
      %v1105 = vpop.f32.mrb[0].mxu0
      %1106 = vmatprep.mubr.f32.mxu0 0.0
      %1107 = vmatmul.mubr.f32.gmra.mrb[0].mxu0 %v521
      %v1108 = vpop.f32.mrb[0].mxu0
      %v1109 = vadd.f32 %v310, %v1108
      %v1110 = vpop.f32.mrb[0].mxu0
      %1111 = vmatprep.mubr.f32.mxu0 0.0
      %1112 = vmatmul.mubr.f32.gmra.mrb[0].mxu0 %v524
      %v1113 = vpop.f32.mrb[0].mxu0
      %v1114 = vadd.f32 %v310, %v1113
      %v1115 = vpop.f32.mrb[0].mxu0
      %1116 = vmatprep.mubr.f32.mxu0 0.0
      %1117 = vmatmul.mubr.f32.gmra.mrb[0].mxu0 %v527
      %v1118 = vpop.f32.mrb[0].mxu0
      %v1119 = vadd.f32 %v310, %v1118
      %v1120 = vpop.f32.mrb[0].mxu0
      %1121 = vmatprep.mubr.f32.mxu0 0.0
      %1122 = vmatmul.mubr.f32.gmra.mrb[0].mxu0 %v530
      %v1123 = vpop.f32.mrb[0].mxu0
      %v1124 = vadd.f32 %v310, %v1123
      %v1125 = vpop.f32.mrb[0].mxu0
      %1126 = vmatprep.mubr.f32.mxu0 0.0
      %1127 = vmatmul.mubr.f32.gmra.mrb[0].mxu0 %v533
      %v1128 = vpop.f32.mrb[0].mxu0
      %v1129 = vadd.f32 %v310, %v1128
      %v1130 = vpop.f32.mrb[0].mxu0
      %1131 = vmatprep.mubr.f32.mxu0 0.0
      %1132 = vmatmul.mubr.f32.gmra.mrb[0].mxu0 %v536
      %v1133 = vpop.f32.mrb[0].mxu0
      %v1134 = vadd.f32 %v310, %v1133
      %v1135 = vpop.f32.mrb[0].mxu0
      %1136 = vmatprep.mubr.f32.mxu0 0.0
      %1137 = vmatmul.mubr.f32.gmra.mrb[0].mxu0 %v539
      %v1138 = vpop.f32.mrb[0].mxu0
      %v1139 = vadd.f32 %v310, %v1138
      %v1140 = vpop.f32.mrb[0].mxu0
      %1141 = vmatprep.mubr.f32.mxu0 0.0
      %1142 = vmatmul.mubr.f32.gmra.mrb[0].mxu0 %v542
      %v1143 = vpop.f32.mrb[0].mxu0
      %v1144 = vadd.f32 %v310, %v1143
      %v1145 = vpop.f32.mrb[0].mxu0
      %1146 = vmatprep.mubr.f32.mxu0 0.0
      %1147 = vmatmul.mubr.f32.gmra.mrb[0].mxu0 %v545
      %v1148 = vpop.f32.mrb[0].mxu0
      %v1149 = vadd.f32 %v310, %v1148
      %v1150 = vpop.f32.mrb[0].mxu0
      %1151 = vmatprep.mubr.f32.mxu0 0.0
      %1152 = vmatmul.mubr.f32.gmra.mrb[0].mxu0 %v548
      %v1153 = vpop.f32.mrb[0].mxu0
      %v1154 = vadd.f32 %v310, %v1153
      %v1155 = vpop.f32.mrb[0].mxu0
      %1156 = vmatprep.mubr.f32.mxu0 0.0
      %1157 = vmatmul.mubr.f32.gmra.mrb[0].mxu0 %v551
      %v1158 = vpop.f32.mrb[0].mxu0
      %v1159 = vadd.f32 %v310, %v1158
      %v1160 = vpop.f32.mrb[0].mxu0
      %1161 = vmatprep.mubr.f32.mxu0 0.0
      %1162 = vmatmul.mubr.f32.gmra.mrb[0].mxu0 %v554
      %v1163 = vpop.f32.mrb[0].mxu0
      %v1164 = vadd.f32 %v310, %v1163
      %v1165 = vpop.f32.mrb[0].mxu0
      %1166 = vmatprep.mubr.f32.mxu0 0.0
      %1167 = vmatmul.mubr.f32.gmra.mrb[0].mxu0 %v557
      %v1168 = vpop.f32.mrb[0].mxu0
      %v1169 = vadd.f32 %v310, %v1168
      %v1170 = vpop.f32.mrb[0].mxu0
      %1171 = vmatprep.mubr.f32.mxu0 0.0
      %1172 = vmatmul.mubr.f32.gmra.mrb[0].mxu0 %v560
      %v1173 = vpop.f32.mrb[0].mxu0
      %v1174 = vadd.f32 %v310, %v1173
      %v1175 = vpop.f32.mrb[0].mxu0
      %1176 = vmatprep.mubr.f32.mxu0 0.0
      %1177 = vmatmul.mubr.f32.gmra.mrb[0].mxu0 %v563
      %v1178 = vpop.f32.mrb[0].mxu0
      %v1179 = vadd.f32 %v310, %v1178
      %v1180 = vpop.f32.mrb[0].mxu0
      %1181 = vmatprep.mubr.f32.mxu0 0.0
      %1182 = vmatmul.mubr.f32.gmra.mrb[0].mxu0 %v566
      %v1183 = vpop.f32.mrb[0].mxu0
      %v1184 = vadd.f32 %v310, %v1183
      %v1185 = vpop.f32.mrb[0].mxu0
      %1186 = vmatprep.mubr.f32.mxu0 0.0
      %1187 = vmatmul.mubr.f32.gmra.mrb[0].mxu0 %v569
      %v1188 = vpop.f32.mrb[0].mxu0
      %v1189 = vadd.f32 %v310, %v1188
      %v1190 = vpop.f32.mrb[0].mxu0
      %1191 = vmatprep.mubr.f32.mxu0 0.0
      %1192 = vmatmul.mubr.f32.gmra.mrb[0].mxu0 %v572
      %v1193 = vpop.f32.mrb[0].mxu0
      %v1194 = vadd.f32 %v310, %v1193
      %v1195 = vpop.f32.mrb[0].mxu0
      %1196 = vmatprep.mubr.f32.mxu0 0.0
      %1197 = vmatmul.mubr.f32.gmra.mrb[0].mxu0 %v575
      %v1198 = vpop.f32.mrb[0].mxu0
      %v1199 = vadd.f32 %v310, %v1198
      %v1200 = vpop.f32.mrb[0].mxu0
      %1201 = vmatprep.mubr.f32.mxu0 0.0
      %1202 = vmatmul.mubr.f32.gmra.mrb[0].mxu0 %v578
      %v1203 = vpop.f32.mrb[0].mxu0
      %v1204 = vadd.f32 %v310, %v1203
      %v1205 = vpop.f32.mrb[0].mxu0
      %1206 = vmatprep.mubr.f32.mxu0 0.0
      %1207 = vmatmul.mubr.f32.gmra.mrb[0].mxu0 %v581
      %v1208 = vpop.f32.mrb[0].mxu0
      %v1209 = vadd.f32 %v310, %v1208
      %v1210 = vpop.f32.mrb[0].mxu0
      %1211 = vmatprep.mubr.f32.mxu0 0.0
      %1212 = vmatmul.mubr.f32.gmra.mrb[0].mxu0 %v584
      %v1213 = vpop.f32.mrb[0].mxu0
      %v1214 = vadd.f32 %v310, %v1213
      %v1215 = vpop.f32.mrb[0].mxu0
      %1216 = vmatprep.mubr.f32.mxu0 0.0
      %1217 = vmatmul.mubr.f32.gmra.mrb[0].mxu0 %v587
      %v1218 = vpop.f32.mrb[0].mxu0
      %v1219 = vadd.f32 %v310, %v1218
      %v1220 = vpop.f32.mrb[0].mxu0
      %1221 = vmatprep.mubr.f32.mxu0 0.0
      %1222 = vmatmul.mubr.f32.gmra.mrb[0].mxu0 %v590
      %v1223 = vpop.f32.mrb[0].mxu0
      %v1224 = vadd.f32 %v310, %v1223
      %v1225 = vpop.f32.mrb[0].mxu0
      %1226 = vmatprep.mubr.f32.mxu0 0.0
      %1227 = vmatmul.mubr.f32.gmra.mrb[0].mxu0 %v593
      %v1228 = vpop.f32.mrb[0].mxu0
      %v1229 = vadd.f32 %v310, %v1228
      %v1230 = vpop.f32.mrb[0].mxu0
      %1231 = vmatprep.mubr.f32.mxu0 0.0
      %1232 = vmatmul.mubr.f32.gmra.mrb[0].mxu0 %v596
      %v1233 = vpop.f32.mrb[0].mxu0
      %v1234 = vadd.f32 %v310, %v1233
      %v1235 = vpop.f32.mrb[0].mxu0
      %1236 = vmatprep.mubr.f32.mxu0 0.0
      %1237 = vmatmul.mubr.f32.gmra.mrb[0].mxu0 %v599
      %v1238 = vpop.f32.mrb[0].mxu0
      %v1239 = vadd.f32 %v310, %v1238
      %v1240 = vpop.f32.mrb[0].mxu0
      %1241 = vmatprep.mubr.f32.mxu0 0.0
      %1242 = vmatmul.mubr.f32.gmra.mrb[0].mxu0 %v602
      %v1243 = vpop.f32.mrb[0].mxu0
      %v1244 = vadd.f32 %v310, %v1243
      %v1245 = vpop.f32.mrb[0].mxu0
      %1246 = vmatprep.mubr.f32.mxu0 0.0
      %1247 = vmatmul.mubr.f32.gmra.mrb[0].mxu0 %v605
      %v1248 = vpop.f32.mrb[0].mxu0
      %v1249 = vadd.f32 %v310, %v1248
      %v1250 = vpop.f32.mrb[0].mxu0
      %1251 = vmatprep.mubr.f32.mxu0 0.0
      %1252 = vmatmul.mubr.f32.gmra.mrb[0].mxu0 %v608
      %v1253 = vpop.f32.mrb[0].mxu0
      %v1254 = vadd.f32 %v310, %v1253
      %v1255 = vpop.f32.mrb[0].mxu0
      %1256 = vmatprep.mubr.f32.mxu0 0.0
      %1257 = vmatmul.mubr.f32.gmra.mrb[0].mxu0 %v611
      %v1258 = vpop.f32.mrb[0].mxu0
      %v1259 = vadd.f32 %v310, %v1258
      %v1260 = vpop.f32.mrb[0].mxu0
      %1261 = vmatprep.mubr.f32.mxu0 0.0
      %1262 = vmatmul.mubr.f32.gmra.mrb[0].mxu0 %v614
      %v1263 = vpop.f32.mrb[0].mxu0
      %v1264 = vadd.f32 %v310, %v1263
      %v1265 = vpop.f32.mrb[0].mxu0
      %1266 = vmatprep.mubr.f32.mxu0 0.0
      %1267 = vmatmul.mubr.f32.gmra.mrb[0].mxu0 %v617
      %v1268 = vpop.f32.mrb[0].mxu0
      %v1269 = vadd.f32 %v310, %v1268
      %v1270 = vpop.f32.mrb[0].mxu0
      %1271 = vmatprep.mubr.f32.mxu0 0.0
      %1272 = vmatmul.mubr.f32.gmra.mrb[0].mxu0 %v620
      %v1273 = vpop.f32.mrb[0].mxu0
      %v1274 = vadd.f32 %v310, %v1273
      %v1275 = vpop.f32.mrb[0].mxu0
      %1276 = vmatprep.mubr.f32.mxu0 0.0
      %1277 = vmatmul.mubr.f32.gmra.mrb[0].mxu0 %v623
      %v1278 = vpop.f32.mrb[0].mxu0
      %v1279 = vadd.f32 %v310, %v1278
      %v1280 = vpop.f32.mrb[0].mxu0
      %1281 = vmatprep.mubr.f32.mxu0 0.0
      %1282 = vmatmul.mubr.f32.gmra.mrb[0].mxu0 %v626
      %v1283 = vpop.f32.mrb[0].mxu0
      %v1284 = vadd.f32 %v310, %v1283
      %v1285 = vpop.f32.mrb[0].mxu0
      %1286 = vmatprep.mubr.f32.mxu0 0.0
      %1287 = vmatmul.mubr.f32.gmra.mrb[0].mxu0 %v629
      %v1288 = vpop.f32.mrb[0].mxu0
      %v1289 = vadd.f32 %v310, %v1288
      %v1290 = vpop.f32.mrb[0].mxu0
      %1291 = vmatprep.mubr.f32.mxu0 0.0
      %1292 = vmatmul.mubr.f32.gmra.mrb[0].mxu0 %v632
      %v1293 = vpop.f32.mrb[0].mxu0
      %v1294 = vadd.f32 %v310, %v1293
      %v1295 = vpop.f32.mrb[0].mxu0
      %1296 = vmatprep.mubr.f32.mxu0 0.0
      %1297 = vmatmul.mubr.f32.gmra.mrb[0].mxu0 %v635
      %v1298 = vpop.f32.mrb[0].mxu0
      %v1299 = vadd.f32 %v310, %v1298
      %v1300 = vpop.f32.mrb[0].mxu0
      %1301 = vmatprep.mubr.f32.mxu0 0.0
      %1302 = vmatmul.mubr.f32.gmra.mrb[0].mxu0 %v638
      %v1303 = vpop.f32.mrb[0].mxu0
      %v1304 = vadd.f32 %v310, %v1303
      %v1305 = vpop.f32.mrb[0].mxu0
      %1306 = vmatprep.mubr.f32.mxu0 0.0
      %1307 = vmatmul.mubr.f32.gmra.mrb[0].mxu0 %v641
      %v1308 = vpop.f32.mrb[0].mxu0
      %v1309 = vadd.f32 %v310, %v1308
      %v1310 = vpop.f32.mrb[0].mxu0
      %1311 = vmatprep.mubr.f32.mxu0 0.0
      %1312 = vmatmul.mubr.f32.gmra.mrb[0].mxu0 %v644
      %v1313 = vpop.f32.mrb[0].mxu0
      %v1314 = vadd.f32 %v310, %v1313
      %v1315 = vpop.f32.mrb[0].mxu0
      %1316 = vmatprep.mubr.f32.mxu0 0.0
      %1317 = vmatmul.mubr.f32.gmra.mrb[0].mxu0 %v647
      %v1318 = vpop.f32.mrb[0].mxu0
      %v1319 = vadd.f32 %v310, %v1318
      %v1320 = vpop.f32.mrb[0].mxu0
      %1321 = vmatprep.mubr.f32.mxu0 0.0
      %1322 = vmatmul.mubr.f32.gmra.mrb[0].mxu0 %v650
      %v1323 = vpop.f32.mrb[0].mxu0
      %v1324 = vadd.f32 %v310, %v1323
      %v1325 = vpop.f32.mrb[0].mxu0
      %1326 = vmatprep.mubr.f32.mxu0 0.0
      %1327 = vmatmul.mubr.f32.gmra.mrb[0].mxu0 %v653
      %v1328 = vpop.f32.mrb[0].mxu0
      %v1329 = vadd.f32 %v310, %v1328
      %v1330 = vpop.f32.mrb[0].mxu0
      %1331 = vmatprep.mubr.f32.mxu0 0.0
      %1332 = vmatmul.mubr.f32.gmra.mrb[0].mxu0 %v656
      %v1333 = vpop.f32.mrb[0].mxu0
      %v1334 = vadd.f32 %v310, %v1333
      %v1335 = vpop.f32.mrb[0].mxu0
      %1336 = vmatprep.mubr.f32.mxu0 0.0
      %1337 = vmatmul.mubr.f32.gmra.mrb[0].mxu0 %v659
      %v1338 = vpop.f32.mrb[0].mxu0
      %v1339 = vadd.f32 %v310, %v1338
      %v1340 = vpop.f32.mrb[0].mxu0
      %1341 = vmatprep.mubr.f32.mxu0 0.0
      %1342 = vmatmul.mubr.f32.gmra.mrb[0].mxu0 %v662
      %v1343 = vpop.f32.mrb[0].mxu0
      %v1344 = vadd.f32 %v310, %v1343
      %v1345 = vpop.f32.mrb[0].mxu0
      %1346 = vmatprep.mubr.f32.mxu0 0.0
      %1347 = vmatmul.mubr.f32.gmra.mrb[0].mxu0 %v665
      %v1348 = vpop.f32.mrb[0].mxu0
      %v1349 = vadd.f32 %v310, %v1348
      %v1350 = vpop.f32.mrb[0].mxu0
      %1351 = vmatprep.mubr.f32.mxu0 0.0
      %1352 = vmatmul.mubr.f32.gmra.mrb[0].mxu0 %v668
      %v1353 = vpop.f32.mrb[0].mxu0
      %v1354 = vadd.f32 %v310, %v1353
      %v1355 = vpop.f32.mrb[0].mxu0
      %1356 = vmatprep.mubr.f32.mxu0 0.0
      %1357 = vmatmul.mubr.f32.gmra.mrb[0].mxu0 %v671
      %v1358 = vpop.f32.mrb[0].mxu0
      %v1359 = vadd.f32 %v310, %v1358
      %v1360 = vpop.f32.mrb[0].mxu0
      %1361 = vmatprep.mubr.f32.mxu0 0.0
      %1362 = vmatmul.mubr.f32.gmra.mrb[0].mxu0 %v674
      %v1363 = vpop.f32.mrb[0].mxu0
      %v1364 = vadd.f32 %v310, %v1363
      %v1365 = vpop.f32.mrb[0].mxu0
      %1366 = vmatprep.mubr.f32.mxu0 0.0
      %1367 = vmatmul.mubr.f32.gmra.mrb[0].mxu0 %v677
      %v1368 = vpop.f32.mrb[0].mxu0
      %v1369 = vadd.f32 %v310, %v1368
      %v1370 = vpop.f32.mrb[0].mxu0
      %1371 = vmatprep.mubr.f32.mxu0 0.0
      %1372 = vmatmul.mubr.f32.gmra.mrb[0].mxu0 %v680
      %v1373 = vpop.f32.mrb[0].mxu0
      %v1374 = vadd.f32 %v310, %v1373
      %v1375 = vpop.f32.mrb[0].mxu0
      %1376 = vmatprep.mubr.f32.mxu0 0.0
      %1377 = vmatmul.mubr.f32.gmra.mrb[0].mxu0 %v683
      %v1378 = vpop.f32.mrb[0].mxu0
      %v1379 = vadd.f32 %v310, %v1378
      %v1380 = vpop.f32.mrb[0].mxu0
      %1381 = vmatprep.mubr.f32.mxu0 0.0
      %1382 = vmatmul.mubr.f32.gmra.mrb[0].mxu0 %v686
      %v1383 = vpop.f32.mrb[0].mxu0
      %v1384 = vadd.f32 %v310, %v1383
      %v1385 = vpop.f32.mrb[0].mxu0
      %1386 = vmatprep.mubr.f32.mxu0 0.0
      %1387 = vmatmul.mubr.f32.gmra.mrb[0].mxu0 %v689
      %v1388 = vpop.f32.mrb[0].mxu0
      %v1389 = vadd.f32 %v310, %v1388
      %v1390 = vpop.f32.mrb[0].mxu0
      %1391 = vmatprep.mubr.f32.mxu0 0.0
      %1392 = vmatmul.mubr.f32.gmra.mrb[0].mxu0 %v692
      %v1393 = vpop.f32.mrb[0].mxu0
      %v1394 = vadd.f32 %v310, %v1393
      %v1395 = vpop.f32.mrb[0].mxu0
      %1396 = vmatprep.mubr.f32.mxu0 0.0
      %1397 = vmatmul.mubr.f32.gmra.mrb[0].mxu0 %v695
      %v1398 = vpop.f32.mrb[0].mxu0
      %v1399 = vadd.f32 %v310, %v1398
      %v1400 = vpop.f32.mrb[0].mxu0
      %1401 = vdwg.mxu0
      %vm1402 = vcmp.gt.f32.partialorder %v764, 0.0
      %vm1403 = vcmp.gt.f32.partialorder %v769, 0.0
      %vm1404 = vcmp.gt.f32.partialorder %v774, 0.0
      %vm1405 = vcmp.gt.f32.partialorder %v779, 0.0
      %vm1406 = vcmp.gt.f32.partialorder %v784, 0.0
      %vm1407 = vcmp.gt.f32.partialorder %v789, 0.0
      %vm1408 = vcmp.gt.f32.partialorder %v794, 0.0
      %vm1409 = vcmp.gt.f32.partialorder %v799, 0.0
      %vm1410 = vcmp.gt.f32.partialorder %v804, 0.0
      %vm1411 = vcmp.gt.f32.partialorder %v809, 0.0
      %vm1412 = vcmp.gt.f32.partialorder %v814, 0.0
      %vm1413 = vcmp.gt.f32.partialorder %v819, 0.0
      %vm1414 = vcmp.gt.f32.partialorder %v824, 0.0
      %vm1415 = vcmp.gt.f32.partialorder %v829, 0.0
      %vm1416 = vcmp.gt.f32.partialorder %v834, 0.0
      %vm1417 = vcmp.gt.f32.partialorder %v839, 0.0
      %vm1418 = vcmp.gt.f32.partialorder %v844, 0.0
      %vm1419 = vcmp.gt.f32.partialorder %v849, 0.0
      %vm1420 = vcmp.gt.f32.partialorder %v854, 0.0
      %vm1421 = vcmp.gt.f32.partialorder %v859, 0.0
      %vm1422 = vcmp.gt.f32.partialorder %v864, 0.0
      %vm1423 = vcmp.gt.f32.partialorder %v869, 0.0
      %vm1424 = vcmp.gt.f32.partialorder %v874, 0.0
      %vm1425 = vcmp.gt.f32.partialorder %v879, 0.0
      %vm1426 = vcmp.gt.f32.partialorder %v884, 0.0
      %vm1427 = vcmp.gt.f32.partialorder %v889, 0.0
      %vm1428 = vcmp.gt.f32.partialorder %v894, 0.0
      %vm1429 = vcmp.gt.f32.partialorder %v899, 0.0
      %vm1430 = vcmp.gt.f32.partialorder %v904, 0.0
      %vm1431 = vcmp.gt.f32.partialorder %v909, 0.0
      %vm1432 = vcmp.gt.f32.partialorder %v914, 0.0
      %vm1433 = vcmp.gt.f32.partialorder %v919, 0.0
      %vm1434 = vcmp.gt.f32.partialorder %v924, 0.0
      %vm1435 = vcmp.gt.f32.partialorder %v929, 0.0
      %vm1436 = vcmp.gt.f32.partialorder %v934, 0.0
      %vm1437 = vcmp.gt.f32.partialorder %v939, 0.0
      %vm1438 = vcmp.gt.f32.partialorder %v944, 0.0
      %vm1439 = vcmp.gt.f32.partialorder %v949, 0.0
      %vm1440 = vcmp.gt.f32.partialorder %v954, 0.0
      %vm1441 = vcmp.gt.f32.partialorder %v959, 0.0
      %vm1442 = vcmp.gt.f32.partialorder %v964, 0.0
      %vm1443 = vcmp.gt.f32.partialorder %v969, 0.0
      %vm1444 = vcmp.gt.f32.partialorder %v974, 0.0
      %vm1445 = vcmp.gt.f32.partialorder %v979, 0.0
      %vm1446 = vcmp.gt.f32.partialorder %v984, 0.0
      %vm1447 = vcmp.gt.f32.partialorder %v989, 0.0
      %vm1448 = vcmp.gt.f32.partialorder %v994, 0.0
      %vm1449 = vcmp.gt.f32.partialorder %v999, 0.0
      %vm1450 = vcmp.gt.f32.partialorder %v1004, 0.0
      %vm1451 = vcmp.gt.f32.partialorder %v1009, 0.0
      %vm1452 = vcmp.gt.f32.partialorder %v1014, 0.0
      %vm1453 = vcmp.gt.f32.partialorder %v1019, 0.0
      %vm1454 = vcmp.gt.f32.partialorder %v1024, 0.0
      %vm1455 = vcmp.gt.f32.partialorder %v1029, 0.0
      %vm1456 = vcmp.gt.f32.partialorder %v1034, 0.0
      %vm1457 = vcmp.gt.f32.partialorder %v1039, 0.0
      %vm1458 = vcmp.gt.f32.partialorder %v1044, 0.0
      %vm1459 = vcmp.gt.f32.partialorder %v1049, 0.0
      %vm1460 = vcmp.gt.f32.partialorder %v1054, 0.0
      %vm1461 = vcmp.gt.f32.partialorder %v1059, 0.0
      %vm1462 = vcmp.gt.f32.partialorder %v1064, 0.0
      %vm1463 = vcmp.gt.f32.partialorder %v1069, 0.0
      %vm1464 = vcmp.gt.f32.partialorder %v1074, 0.0
      %vm1465 = vcmp.gt.f32.partialorder %v1079, 0.0
      %vm1466 = vcmp.gt.f32.partialorder %v1084, 0.0
      %vm1467 = vcmp.gt.f32.partialorder %v1089, 0.0
      %vm1468 = vcmp.gt.f32.partialorder %v1094, 0.0
      %vm1469 = vcmp.gt.f32.partialorder %v1099, 0.0
      %vm1470 = vcmp.gt.f32.partialorder %v1104, 0.0
      %vm1471 = vcmp.gt.f32.partialorder %v1109, 0.0
      %vm1472 = vcmp.gt.f32.partialorder %v1114, 0.0
      %vm1473 = vcmp.gt.f32.partialorder %v1119, 0.0
      %vm1474 = vcmp.gt.f32.partialorder %v1124, 0.0
      %vm1475 = vcmp.gt.f32.partialorder %v1129, 0.0
      %vm1476 = vcmp.gt.f32.partialorder %v1134, 0.0
      %vm1477 = vcmp.gt.f32.partialorder %v1139, 0.0
      %vm1478 = vcmp.gt.f32.partialorder %v1144, 0.0
      %vm1479 = vcmp.gt.f32.partialorder %v1149, 0.0
      %vm1480 = vcmp.gt.f32.partialorder %v1154, 0.0
      %vm1481 = vcmp.gt.f32.partialorder %v1159, 0.0
      %vm1482 = vcmp.gt.f32.partialorder %v1164, 0.0
      %vm1483 = vcmp.gt.f32.partialorder %v1169, 0.0
      %vm1484 = vcmp.gt.f32.partialorder %v1174, 0.0
      %vm1485 = vcmp.gt.f32.partialorder %v1179, 0.0
      %vm1486 = vcmp.gt.f32.partialorder %v1184, 0.0
      %vm1487 = vcmp.gt.f32.partialorder %v1189, 0.0
      %vm1488 = vcmp.gt.f32.partialorder %v1194, 0.0
      %vm1489 = vcmp.gt.f32.partialorder %v1199, 0.0
      %vm1490 = vcmp.gt.f32.partialorder %v1204, 0.0
      %vm1491 = vcmp.gt.f32.partialorder %v1209, 0.0
      %vm1492 = vcmp.gt.f32.partialorder %v1214, 0.0
      %vm1493 = vcmp.gt.f32.partialorder %v1219, 0.0
      %vm1494 = vcmp.gt.f32.partialorder %v1224, 0.0
      %vm1495 = vcmp.gt.f32.partialorder %v1229, 0.0
      %vm1496 = vcmp.gt.f32.partialorder %v1234, 0.0
      %vm1497 = vcmp.gt.f32.partialorder %v1239, 0.0
      %vm1498 = vcmp.gt.f32.partialorder %v1244, 0.0
      %vm1499 = vcmp.gt.f32.partialorder %v1249, 0.0
      %vm1500 = vcmp.gt.f32.partialorder %v1254, 0.0
      %vm1501 = vcmp.gt.f32.partialorder %v1259, 0.0
      %vm1502 = vcmp.gt.f32.partialorder %v1264, 0.0
      %vm1503 = vcmp.gt.f32.partialorder %v1269, 0.0
      %vm1504 = vcmp.gt.f32.partialorder %v1274, 0.0
      %vm1505 = vcmp.gt.f32.partialorder %v1279, 0.0
      %vm1506 = vcmp.gt.f32.partialorder %v1284, 0.0
      %vm1507 = vcmp.gt.f32.partialorder %v1289, 0.0
      %vm1508 = vcmp.gt.f32.partialorder %v1294, 0.0
      %vm1509 = vcmp.gt.f32.partialorder %v1299, 0.0
      %vm1510 = vcmp.gt.f32.partialorder %v1304, 0.0
      %vm1511 = vcmp.gt.f32.partialorder %v1309, 0.0
      %vm1512 = vcmp.gt.f32.partialorder %v1314, 0.0
      %vm1513 = vcmp.gt.f32.partialorder %v1319, 0.0
      %vm1514 = vcmp.gt.f32.partialorder %v1324, 0.0
      %vm1515 = vcmp.gt.f32.partialorder %v1329, 0.0
      %vm1516 = vcmp.gt.f32.partialorder %v1334, 0.0
      %vm1517 = vcmp.gt.f32.partialorder %v1339, 0.0
      %vm1518 = vcmp.gt.f32.partialorder %v1344, 0.0
      %vm1519 = vcmp.gt.f32.partialorder %v1349, 0.0
      %vm1520 = vcmp.gt.f32.partialorder %v1354, 0.0
      %vm1521 = vcmp.gt.f32.partialorder %v1359, 0.0
      %vm1522 = vcmp.gt.f32.partialorder %v1364, 0.0
      %vm1523 = vcmp.gt.f32.partialorder %v1369, 0.0
      %vm1524 = vcmp.gt.f32.partialorder %v1374, 0.0
      %vm1525 = vcmp.gt.f32.partialorder %v1379, 0.0
      %vm1526 = vcmp.gt.f32.partialorder %v1384, 0.0
      %vm1527 = vcmp.gt.f32.partialorder %v1389, 0.0
      %vm1528 = vcmp.gt.f32.partialorder %v1394, 0.0
      %vm1529 = vcmp.gt.f32.partialorder %v1399, 0.0
      %v1530 = vmul.f32 %v764, 0.2
      %v1531 = vmul.f32 %v769, 0.2
      %v1532 = vmul.f32 %v774, 0.2
      %v1533 = vmul.f32 %v779, 0.2
      %v1534 = vmul.f32 %v784, 0.2
      %v1535 = vmul.f32 %v789, 0.2
      %v1536 = vmul.f32 %v794, 0.2
      %v1537 = vmul.f32 %v799, 0.2
      %v1538 = vmul.f32 %v804, 0.2
      %v1539 = vmul.f32 %v809, 0.2
      %v1540 = vmul.f32 %v814, 0.2
      %v1541 = vmul.f32 %v819, 0.2
      %v1542 = vmul.f32 %v824, 0.2
      %v1543 = vmul.f32 %v829, 0.2
      %v1544 = vmul.f32 %v834, 0.2
      %v1545 = vmul.f32 %v839, 0.2
      %v1546 = vmul.f32 %v844, 0.2
      %v1547 = vmul.f32 %v849, 0.2
      %v1548 = vmul.f32 %v854, 0.2
      %v1549 = vmul.f32 %v859, 0.2
      %v1550 = vmul.f32 %v864, 0.2
      %v1551 = vmul.f32 %v869, 0.2
      %v1552 = vmul.f32 %v874, 0.2
      %v1553 = vmul.f32 %v879, 0.2
      %v1554 = vmul.f32 %v884, 0.2
      %v1555 = vmul.f32 %v889, 0.2
      %v1556 = vmul.f32 %v894, 0.2
      %v1557 = vmul.f32 %v899, 0.2
      %v1558 = vmul.f32 %v904, 0.2
      %v1559 = vmul.f32 %v909, 0.2
      %v1560 = vmul.f32 %v914, 0.2
      %v1561 = vmul.f32 %v919, 0.2
      %v1562 = vmul.f32 %v924, 0.2
      %v1563 = vmul.f32 %v929, 0.2
      %v1564 = vmul.f32 %v934, 0.2
      %v1565 = vmul.f32 %v939, 0.2
      %v1566 = vmul.f32 %v944, 0.2
      %v1567 = vmul.f32 %v949, 0.2
      %v1568 = vmul.f32 %v954, 0.2
      %v1569 = vmul.f32 %v959, 0.2
      %v1570 = vmul.f32 %v964, 0.2
      %v1571 = vmul.f32 %v969, 0.2
      %v1572 = vmul.f32 %v974, 0.2
      %v1573 = vmul.f32 %v979, 0.2
      %v1574 = vmul.f32 %v984, 0.2
      %v1575 = vmul.f32 %v989, 0.2
      %v1576 = vmul.f32 %v994, 0.2
      %v1577 = vmul.f32 %v999, 0.2
      %v1578 = vmul.f32 %v1004, 0.2
      %v1579 = vmul.f32 %v1009, 0.2
      %v1580 = vmul.f32 %v1014, 0.2
      %v1581 = vmul.f32 %v1019, 0.2
      %v1582 = vmul.f32 %v1024, 0.2
      %v1583 = vmul.f32 %v1029, 0.2
      %v1584 = vmul.f32 %v1034, 0.2
      %v1585 = vmul.f32 %v1039, 0.2
      %v1586 = vmul.f32 %v1044, 0.2
      %v1587 = vmul.f32 %v1049, 0.2
      %v1588 = vmul.f32 %v1054, 0.2
      %v1589 = vmul.f32 %v1059, 0.2
      %v1590 = vmul.f32 %v1064, 0.2
      %v1591 = vmul.f32 %v1069, 0.2
      %v1592 = vmul.f32 %v1074, 0.2
      %v1593 = vmul.f32 %v1079, 0.2
      %v1594 = vmul.f32 %v1084, 0.2
      %v1595 = vmul.f32 %v1089, 0.2
      %v1596 = vmul.f32 %v1094, 0.2
      %v1597 = vmul.f32 %v1099, 0.2
      %v1598 = vmul.f32 %v1104, 0.2
      %v1599 = vmul.f32 %v1109, 0.2
      %v1600 = vmul.f32 %v1114, 0.2
      %v1601 = vmul.f32 %v1119, 0.2
      %v1602 = vmul.f32 %v1124, 0.2
      %v1603 = vmul.f32 %v1129, 0.2
      %v1604 = vmul.f32 %v1134, 0.2
      %v1605 = vmul.f32 %v1139, 0.2
      %v1606 = vmul.f32 %v1144, 0.2
      %v1607 = vmul.f32 %v1149, 0.2
      %v1608 = vmul.f32 %v1154, 0.2
      %v1609 = vmul.f32 %v1159, 0.2
      %v1610 = vmul.f32 %v1164, 0.2
      %v1611 = vmul.f32 %v1169, 0.2
      %v1612 = vmul.f32 %v1174, 0.2
      %v1613 = vmul.f32 %v1179, 0.2
      %v1614 = vmul.f32 %v1184, 0.2
      %v1615 = vmul.f32 %v1189, 0.2
      %v1616 = vmul.f32 %v1194, 0.2
      %v1617 = vmul.f32 %v1199, 0.2
      %v1618 = vmul.f32 %v1204, 0.2
      %v1619 = vmul.f32 %v1209, 0.2
      %v1620 = vmul.f32 %v1214, 0.2
      %v1621 = vmul.f32 %v1219, 0.2
      %v1622 = vmul.f32 %v1224, 0.2
      %v1623 = vmul.f32 %v1229, 0.2
      %v1624 = vmul.f32 %v1234, 0.2
      %v1625 = vmul.f32 %v1239, 0.2
      %v1626 = vmul.f32 %v1244, 0.2
      %v1627 = vmul.f32 %v1249, 0.2
      %v1628 = vmul.f32 %v1254, 0.2
      %v1629 = vmul.f32 %v1259, 0.2
      %v1630 = vmul.f32 %v1264, 0.2
      %v1631 = vmul.f32 %v1269, 0.2
      %v1632 = vmul.f32 %v1274, 0.2
      %v1633 = vmul.f32 %v1279, 0.2
      %v1634 = vmul.f32 %v1284, 0.2
      %v1635 = vmul.f32 %v1289, 0.2
      %v1636 = vmul.f32 %v1294, 0.2
      %v1637 = vmul.f32 %v1299, 0.2
      %v1638 = vmul.f32 %v1304, 0.2
      %v1639 = vmul.f32 %v1309, 0.2
      %v1640 = vmul.f32 %v1314, 0.2
      %v1641 = vmul.f32 %v1319, 0.2
      %v1642 = vmul.f32 %v1324, 0.2
      %v1643 = vmul.f32 %v1329, 0.2
      %v1644 = vmul.f32 %v1334, 0.2
      %v1645 = vmul.f32 %v1339, 0.2
      %v1646 = vmul.f32 %v1344, 0.2
      %v1647 = vmul.f32 %v1349, 0.2
      %v1648 = vmul.f32 %v1354, 0.2
      %v1649 = vmul.f32 %v1359, 0.2
      %v1650 = vmul.f32 %v1364, 0.2
      %v1651 = vmul.f32 %v1369, 0.2
      %v1652 = vmul.f32 %v1374, 0.2
      %v1653 = vmul.f32 %v1379, 0.2
      %v1654 = vmul.f32 %v1384, 0.2
      %v1655 = vmul.f32 %v1389, 0.2
      %v1656 = vmul.f32 %v1394, 0.2
      %v1657 = vmul.f32 %v1399, 0.2
      %v1658 = vsel %vm1402, %v764, %v1530
      %v1659 = vsel %vm1403, %v769, %v1531
      %v1660 = vsel %vm1404, %v774, %v1532
      %v1661 = vsel %vm1405, %v779, %v1533
      %v1662 = vsel %vm1406, %v784, %v1534
      %v1663 = vsel %vm1407, %v789, %v1535
      %v1664 = vsel %vm1408, %v794, %v1536
      %v1665 = vsel %vm1409, %v799, %v1537
      %v1666 = vsel %vm1410, %v804, %v1538
      %v1667 = vsel %vm1411, %v809, %v1539
      %v1668 = vsel %vm1412, %v814, %v1540
      %v1669 = vsel %vm1413, %v819, %v1541
      %v1670 = vsel %vm1414, %v824, %v1542
      %v1671 = vsel %vm1415, %v829, %v1543
      %v1672 = vsel %vm1416, %v834, %v1544
      %v1673 = vsel %vm1417, %v839, %v1545
      %v1674 = vsel %vm1418, %v844, %v1546
      %v1675 = vsel %vm1419, %v849, %v1547
      %v1676 = vsel %vm1420, %v854, %v1548
      %v1677 = vsel %vm1421, %v859, %v1549
      %v1678 = vsel %vm1422, %v864, %v1550
      %v1679 = vsel %vm1423, %v869, %v1551
      %v1680 = vsel %vm1424, %v874, %v1552
      %v1681 = vsel %vm1425, %v879, %v1553
      %v1682 = vsel %vm1426, %v884, %v1554
      %v1683 = vsel %vm1427, %v889, %v1555
      %v1684 = vsel %vm1428, %v894, %v1556
      %v1685 = vsel %vm1429, %v899, %v1557
      %v1686 = vsel %vm1430, %v904, %v1558
      %v1687 = vsel %vm1431, %v909, %v1559
      %v1688 = vsel %vm1432, %v914, %v1560
      %v1689 = vsel %vm1433, %v919, %v1561
      %v1690 = vsel %vm1434, %v924, %v1562
      %v1691 = vsel %vm1435, %v929, %v1563
      %v1692 = vsel %vm1436, %v934, %v1564
      %v1693 = vsel %vm1437, %v939, %v1565
      %v1694 = vsel %vm1438, %v944, %v1566
      %v1695 = vsel %vm1439, %v949, %v1567
      %v1696 = vsel %vm1440, %v954, %v1568
      %v1697 = vsel %vm1441, %v959, %v1569
      %v1698 = vsel %vm1442, %v964, %v1570
      %v1699 = vsel %vm1443, %v969, %v1571
      %v1700 = vsel %vm1444, %v974, %v1572
      %v1701 = vsel %vm1445, %v979, %v1573
      %v1702 = vsel %vm1446, %v984, %v1574
      %v1703 = vsel %vm1447, %v989, %v1575
      %v1704 = vsel %vm1448, %v994, %v1576
      %v1705 = vsel %vm1449, %v999, %v1577
      %v1706 = vsel %vm1450, %v1004, %v1578
      %v1707 = vsel %vm1451, %v1009, %v1579
      %v1708 = vsel %vm1452, %v1014, %v1580
      %v1709 = vsel %vm1453, %v1019, %v1581
      %v1710 = vsel %vm1454, %v1024, %v1582
      %v1711 = vsel %vm1455, %v1029, %v1583
      %v1712 = vsel %vm1456, %v1034, %v1584
      %v1713 = vsel %vm1457, %v1039, %v1585
      %v1714 = vsel %vm1458, %v1044, %v1586
      %v1715 = vsel %vm1459, %v1049, %v1587
      %v1716 = vsel %vm1460, %v1054, %v1588
      %v1717 = vsel %vm1461, %v1059, %v1589
      %v1718 = vsel %vm1462, %v1064, %v1590
      %v1719 = vsel %vm1463, %v1069, %v1591
      %v1720 = vsel %vm1464, %v1074, %v1592
      %v1721 = vsel %vm1465, %v1079, %v1593
      %v1722 = vsel %vm1466, %v1084, %v1594
      %v1723 = vsel %vm1467, %v1089, %v1595
      %v1724 = vsel %vm1468, %v1094, %v1596
      %v1725 = vsel %vm1469, %v1099, %v1597
      %v1726 = vsel %vm1470, %v1104, %v1598
      %v1727 = vsel %vm1471, %v1109, %v1599
      %v1728 = vsel %vm1472, %v1114, %v1600
      %v1729 = vsel %vm1473, %v1119, %v1601
      %v1730 = vsel %vm1474, %v1124, %v1602
      %v1731 = vsel %vm1475, %v1129, %v1603
      %v1732 = vsel %vm1476, %v1134, %v1604
      %v1733 = vsel %vm1477, %v1139, %v1605
      %v1734 = vsel %vm1478, %v1144, %v1606
      %v1735 = vsel %vm1479, %v1149, %v1607
      %v1736 = vsel %vm1480, %v1154, %v1608
      %v1737 = vsel %vm1481, %v1159, %v1609
      %v1738 = vsel %vm1482, %v1164, %v1610
      %v1739 = vsel %vm1483, %v1169, %v1611
      %v1740 = vsel %vm1484, %v1174, %v1612
      %v1741 = vsel %vm1485, %v1179, %v1613
      %v1742 = vsel %vm1486, %v1184, %v1614
      %v1743 = vsel %vm1487, %v1189, %v1615
      %v1744 = vsel %vm1488, %v1194, %v1616
      %v1745 = vsel %vm1489, %v1199, %v1617
      %v1746 = vsel %vm1490, %v1204, %v1618
      %v1747 = vsel %vm1491, %v1209, %v1619
      %v1748 = vsel %vm1492, %v1214, %v1620
      %v1749 = vsel %vm1493, %v1219, %v1621
      %v1750 = vsel %vm1494, %v1224, %v1622
      %v1751 = vsel %vm1495, %v1229, %v1623
      %v1752 = vsel %vm1496, %v1234, %v1624
      %v1753 = vsel %vm1497, %v1239, %v1625
      %v1754 = vsel %vm1498, %v1244, %v1626
      %v1755 = vsel %vm1499, %v1249, %v1627
      %v1756 = vsel %vm1500, %v1254, %v1628
      %v1757 = vsel %vm1501, %v1259, %v1629
      %v1758 = vsel %vm1502, %v1264, %v1630
      %v1759 = vsel %vm1503, %v1269, %v1631
      %v1760 = vsel %vm1504, %v1274, %v1632
      %v1761 = vsel %vm1505, %v1279, %v1633
      %v1762 = vsel %vm1506, %v1284, %v1634
      %v1763 = vsel %vm1507, %v1289, %v1635
      %v1764 = vsel %vm1508, %v1294, %v1636
      %v1765 = vsel %vm1509, %v1299, %v1637
      %v1766 = vsel %vm1510, %v1304, %v1638
      %v1767 = vsel %vm1511, %v1309, %v1639
      %v1768 = vsel %vm1512, %v1314, %v1640
      %v1769 = vsel %vm1513, %v1319, %v1641
      %v1770 = vsel %vm1514, %v1324, %v1642
      %v1771 = vsel %vm1515, %v1329, %v1643
      %v1772 = vsel %vm1516, %v1334, %v1644
      %v1773 = vsel %vm1517, %v1339, %v1645
      %v1774 = vsel %vm1518, %v1344, %v1646
      %v1775 = vsel %vm1519, %v1349, %v1647
      %v1776 = vsel %vm1520, %v1354, %v1648
      %v1777 = vsel %vm1521, %v1359, %v1649
      %v1778 = vsel %vm1522, %v1364, %v1650
      %v1779 = vsel %vm1523, %v1369, %v1651
      %v1780 = vsel %vm1524, %v1374, %v1652
      %v1781 = vsel %vm1525, %v1379, %v1653
      %v1782 = vsel %vm1526, %v1384, %v1654
      %v1783 = vsel %vm1527, %v1389, %v1655
      %v1784 = vsel %vm1528, %v1394, %v1656
      %v1785 = vsel %vm1529, %v1399, %v1657
      %vm1786 = vcmask 64512
      %1787 = vst.msk [vmem:[%s170] sm:$0xff] %vm1786, %v1658
      %1788 = vst.msk [vmem:[%s170 + $0x8] sm:$0xff] %vm1786, %v1659
      %1789 = vst.msk [vmem:[%s170 + $0x10] sm:$0xff] %vm1786, %v1660
      %1790 = vst.msk [vmem:[%s170 + $0x18] sm:$0xff] %vm1786, %v1661
      %1791 = vst.msk [vmem:[%s170 + $0x20] sm:$0xff] %vm1786, %v1662
      %1792 = vst.msk [vmem:[%s170 + $0x28] sm:$0xff] %vm1786, %v1663
      %1793 = vst.msk [vmem:[%s170 + $0x30] sm:$0xff] %vm1786, %v1664
      %1794 = vst.msk [vmem:[%s170 + $0x38] sm:$0xff] %vm1786, %v1665
      %1795 = vst.msk [vmem:[%s170 + $0x40] sm:$0xff] %vm1786, %v1666
      %1796 = vst.msk [vmem:[%s170 + $0x48] sm:$0xff] %vm1786, %v1667
      %1797 = vst.msk [vmem:[%s170 + $0x50] sm:$0xff] %vm1786, %v1668
      %1798 = vst.msk [vmem:[%s170 + $0x58] sm:$0xff] %vm1786, %v1669
      %1799 = vst.msk [vmem:[%s170 + $0x60] sm:$0xff] %vm1786, %v1670
      %1800 = vst.msk [vmem:[%s170 + $0x68] sm:$0xff] %vm1786, %v1671
      %1801 = vst.msk [vmem:[%s170 + $0x70] sm:$0xff] %vm1786, %v1672
      %1802 = vst.msk [vmem:[%s170 + $0x78] sm:$0xff] %vm1786, %v1673
      %1803 = vst.msk [vmem:[%s170 + $0x80] sm:$0xff] %vm1786, %v1674
      %1804 = vst.msk [vmem:[%s170 + $0x88] sm:$0xff] %vm1786, %v1675
      %1805 = vst.msk [vmem:[%s170 + $0x90] sm:$0xff] %vm1786, %v1676
      %1806 = vst.msk [vmem:[%s170 + $0x98] sm:$0xff] %vm1786, %v1677
      %1807 = vst.msk [vmem:[%s170 + $0xa0] sm:$0xff] %vm1786, %v1678
      %1808 = vst.msk [vmem:[%s170 + $0xa8] sm:$0xff] %vm1786, %v1679
      %1809 = vst.msk [vmem:[%s170 + $0xb0] sm:$0xff] %vm1786, %v1680
      %1810 = vst.msk [vmem:[%s170 + $0xb8] sm:$0xff] %vm1786, %v1681
      %1811 = vst.msk [vmem:[%s170 + $0xc0] sm:$0xff] %vm1786, %v1682
      %1812 = vst.msk [vmem:[%s170 + $0xc8] sm:$0xff] %vm1786, %v1683
      %1813 = vst.msk [vmem:[%s170 + $0xd0] sm:$0xff] %vm1786, %v1684
      %1814 = vst.msk [vmem:[%s170 + $0xd8] sm:$0xff] %vm1786, %v1685
      %1815 = vst.msk [vmem:[%s170 + $0xe0] sm:$0xff] %vm1786, %v1686
      %1816 = vst.msk [vmem:[%s170 + $0xe8] sm:$0xff] %vm1786, %v1687
      %1817 = vst.msk [vmem:[%s170 + $0xf0] sm:$0xff] %vm1786, %v1688
      %1818 = vst.msk [vmem:[%s170 + $0xf8] sm:$0xff] %vm1786, %v1689
      %1819 = vst.msk [vmem:[%s170 + $0x100] sm:$0xff] %vm1786, %v1690
      %1820 = vst.msk [vmem:[%s170 + $0x108] sm:$0xff] %vm1786, %v1691
      %1821 = vst.msk [vmem:[%s170 + $0x110] sm:$0xff] %vm1786, %v1692
      %1822 = vst.msk [vmem:[%s170 + $0x118] sm:$0xff] %vm1786, %v1693
      %1823 = vst.msk [vmem:[%s170 + $0x120] sm:$0xff] %vm1786, %v1694
      %1824 = vst.msk [vmem:[%s170 + $0x128] sm:$0xff] %vm1786, %v1695
      %1825 = vst.msk [vmem:[%s170 + $0x130] sm:$0xff] %vm1786, %v1696
      %1826 = vst.msk [vmem:[%s170 + $0x138] sm:$0xff] %vm1786, %v1697
      %1827 = vst.msk [vmem:[%s170 + $0x140] sm:$0xff] %vm1786, %v1698
      %1828 = vst.msk [vmem:[%s170 + $0x148] sm:$0xff] %vm1786, %v1699
      %1829 = vst.msk [vmem:[%s170 + $0x150] sm:$0xff] %vm1786, %v1700
      %1830 = vst.msk [vmem:[%s170 + $0x158] sm:$0xff] %vm1786, %v1701
      %1831 = vst.msk [vmem:[%s170 + $0x160] sm:$0xff] %vm1786, %v1702
      %1832 = vst.msk [vmem:[%s170 + $0x168] sm:$0xff] %vm1786, %v1703
      %1833 = vst.msk [vmem:[%s170 + $0x170] sm:$0xff] %vm1786, %v1704
      %1834 = vst.msk [vmem:[%s170 + $0x178] sm:$0xff] %vm1786, %v1705
      %1835 = vst.msk [vmem:[%s170 + $0x180] sm:$0xff] %vm1786, %v1706
      %1836 = vst.msk [vmem:[%s170 + $0x188] sm:$0xff] %vm1786, %v1707
      %1837 = vst.msk [vmem:[%s170 + $0x190] sm:$0xff] %vm1786, %v1708
      %1838 = vst.msk [vmem:[%s170 + $0x198] sm:$0xff] %vm1786, %v1709
      %1839 = vst.msk [vmem:[%s170 + $0x1a0] sm:$0xff] %vm1786, %v1710
      %1840 = vst.msk [vmem:[%s170 + $0x1a8] sm:$0xff] %vm1786, %v1711
      %1841 = vst.msk [vmem:[%s170 + $0x1b0] sm:$0xff] %vm1786, %v1712
      %1842 = vst.msk [vmem:[%s170 + $0x1b8] sm:$0xff] %vm1786, %v1713
      %1843 = vst.msk [vmem:[%s170 + $0x1c0] sm:$0xff] %vm1786, %v1714
      %1844 = vst.msk [vmem:[%s170 + $0x1c8] sm:$0xff] %vm1786, %v1715
      %1845 = vst.msk [vmem:[%s170 + $0x1d0] sm:$0xff] %vm1786, %v1716
      %1846 = vst.msk [vmem:[%s170 + $0x1d8] sm:$0xff] %vm1786, %v1717
      %1847 = vst.msk [vmem:[%s170 + $0x1e0] sm:$0xff] %vm1786, %v1718
      %1848 = vst.msk [vmem:[%s170 + $0x1e8] sm:$0xff] %vm1786, %v1719
      %1849 = vst.msk [vmem:[%s170 + $0x1f0] sm:$0xff] %vm1786, %v1720
      %1850 = vst.msk [vmem:[%s170 + $0x1f8] sm:$0xff] %vm1786, %v1721
      %1851 = vst.msk [vmem:[%s170 + $0x200] sm:$0xff] %vm1786, %v1722
      %1852 = vst.msk [vmem:[%s170 + $0x208] sm:$0xff] %vm1786, %v1723
      %1853 = vst.msk [vmem:[%s170 + $0x210] sm:$0xff] %vm1786, %v1724
      %1854 = vst.msk [vmem:[%s170 + $0x218] sm:$0xff] %vm1786, %v1725
      %1855 = vst.msk [vmem:[%s170 + $0x220] sm:$0xff] %vm1786, %v1726
      %1856 = vst.msk [vmem:[%s170 + $0x228] sm:$0xff] %vm1786, %v1727
      %1857 = vst.msk [vmem:[%s170 + $0x230] sm:$0xff] %vm1786, %v1728
      %1858 = vst.msk [vmem:[%s170 + $0x238] sm:$0xff] %vm1786, %v1729
      %1859 = vst.msk [vmem:[%s170 + $0x240] sm:$0xff] %vm1786, %v1730
      %1860 = vst.msk [vmem:[%s170 + $0x248] sm:$0xff] %vm1786, %v1731
      %1861 = vst.msk [vmem:[%s170 + $0x250] sm:$0xff] %vm1786, %v1732
      %1862 = vst.msk [vmem:[%s170 + $0x258] sm:$0xff] %vm1786, %v1733
      %1863 = vst.msk [vmem:[%s170 + $0x260] sm:$0xff] %vm1786, %v1734
      %1864 = vst.msk [vmem:[%s170 + $0x268] sm:$0xff] %vm1786, %v1735
      %1865 = vst.msk [vmem:[%s170 + $0x270] sm:$0xff] %vm1786, %v1736
      %1866 = vst.msk [vmem:[%s170 + $0x278] sm:$0xff] %vm1786, %v1737
      %1867 = vst.msk [vmem:[%s170 + $0x280] sm:$0xff] %vm1786, %v1738
      %1868 = vst.msk [vmem:[%s170 + $0x288] sm:$0xff] %vm1786, %v1739
      %1869 = vst.msk [vmem:[%s170 + $0x290] sm:$0xff] %vm1786, %v1740
      %1870 = vst.msk [vmem:[%s170 + $0x298] sm:$0xff] %vm1786, %v1741
      %1871 = vst.msk [vmem:[%s170 + $0x2a0] sm:$0xff] %vm1786, %v1742
      %1872 = vst.msk [vmem:[%s170 + $0x2a8] sm:$0xff] %vm1786, %v1743
      %1873 = vst.msk [vmem:[%s170 + $0x2b0] sm:$0xff] %vm1786, %v1744
      %1874 = vst.msk [vmem:[%s170 + $0x2b8] sm:$0xff] %vm1786, %v1745
      %1875 = vst.msk [vmem:[%s170 + $0x2c0] sm:$0xff] %vm1786, %v1746
      %1876 = vst.msk [vmem:[%s170 + $0x2c8] sm:$0xff] %vm1786, %v1747
      %1877 = vst.msk [vmem:[%s170 + $0x2d0] sm:$0xff] %vm1786, %v1748
      %1878 = vst.msk [vmem:[%s170 + $0x2d8] sm:$0xff] %vm1786, %v1749
      %1879 = vst.msk [vmem:[%s170 + $0x2e0] sm:$0xff] %vm1786, %v1750
      %1880 = vst.msk [vmem:[%s170 + $0x2e8] sm:$0xff] %vm1786, %v1751
      %1881 = vst.msk [vmem:[%s170 + $0x2f0] sm:$0xff] %vm1786, %v1752
      %1882 = vst.msk [vmem:[%s170 + $0x2f8] sm:$0xff] %vm1786, %v1753
      %1883 = vst.msk [vmem:[%s170 + $0x300] sm:$0xff] %vm1786, %v1754
      %1884 = vst.msk [vmem:[%s170 + $0x308] sm:$0xff] %vm1786, %v1755
      %1885 = vst.msk [vmem:[%s170 + $0x310] sm:$0xff] %vm1786, %v1756
      %1886 = vst.msk [vmem:[%s170 + $0x318] sm:$0xff] %vm1786, %v1757
      %1887 = vst.msk [vmem:[%s170 + $0x320] sm:$0xff] %vm1786, %v1758
      %1888 = vst.msk [vmem:[%s170 + $0x328] sm:$0xff] %vm1786, %v1759
      %1889 = vst.msk [vmem:[%s170 + $0x330] sm:$0xff] %vm1786, %v1760
      %1890 = vst.msk [vmem:[%s170 + $0x338] sm:$0xff] %vm1786, %v1761
      %1891 = vst.msk [vmem:[%s170 + $0x340] sm:$0xff] %vm1786, %v1762
      %1892 = vst.msk [vmem:[%s170 + $0x348] sm:$0xff] %vm1786, %v1763
      %1893 = vst.msk [vmem:[%s170 + $0x350] sm:$0xff] %vm1786, %v1764
      %1894 = vst.msk [vmem:[%s170 + $0x358] sm:$0xff] %vm1786, %v1765
      %1895 = vst.msk [vmem:[%s170 + $0x360] sm:$0xff] %vm1786, %v1766
      %1896 = vst.msk [vmem:[%s170 + $0x368] sm:$0xff] %vm1786, %v1767
      %1897 = vst.msk [vmem:[%s170 + $0x370] sm:$0xff] %vm1786, %v1768
      %1898 = vst.msk [vmem:[%s170 + $0x378] sm:$0xff] %vm1786, %v1769
      %1899 = vst.msk [vmem:[%s170 + $0x380] sm:$0xff] %vm1786, %v1770
      %1900 = vst.msk [vmem:[%s170 + $0x388] sm:$0xff] %vm1786, %v1771
      %1901 = vst.msk [vmem:[%s170 + $0x390] sm:$0xff] %vm1786, %v1772
      %1902 = vst.msk [vmem:[%s170 + $0x398] sm:$0xff] %vm1786, %v1773
      %1903 = vst.msk [vmem:[%s170 + $0x3a0] sm:$0xff] %vm1786, %v1774
      %1904 = vst.msk [vmem:[%s170 + $0x3a8] sm:$0xff] %vm1786, %v1775
      %1905 = vst.msk [vmem:[%s170 + $0x3b0] sm:$0xff] %vm1786, %v1776
      %1906 = vst.msk [vmem:[%s170 + $0x3b8] sm:$0xff] %vm1786, %v1777
      %1907 = vst.msk [vmem:[%s170 + $0x3c0] sm:$0xff] %vm1786, %v1778
      %1908 = vst.msk [vmem:[%s170 + $0x3c8] sm:$0xff] %vm1786, %v1779
      %1909 = vst.msk [vmem:[%s170 + $0x3d0] sm:$0xff] %vm1786, %v1780
      %1910 = vst.msk [vmem:[%s170 + $0x3d8] sm:$0xff] %vm1786, %v1781
      %1911 = vst.msk [vmem:[%s170 + $0x3e0] sm:$0xff] %vm1786, %v1782
      %1912 = vst.msk [vmem:[%s170 + $0x3e8] sm:$0xff] %vm1786, %v1783
      %1913 = vst.msk [vmem:[%s170 + $0x3f0] sm:$0xff] %vm1786, %v1784
      %1914 = vst.msk [vmem:[%s170 + $0x3f8] sm:$0xff] %vm1786, %v1785
      %p1915 = scmp.lt.s32.totalorder %s14, 1
      %s1916 = scalar_select %p1915, %s14, 1
      %s1917 = smul.addr %s1916, 128
      %s1918 = smul.addr %s1917, 8
      %s1919 = scalar_lea.vmem %s3, %s1918
      // Predicated region
      $region33: #{critic_forward.4} parent=31 // pred_check
        %p1920 = pneg %p100
      $region34: #{critic_forward.4} parent=31 // pred_check_branch
        %1922 = sbr.rel (%p1920) target = $region36
      $region35: #{critic_forward.4} parent=31 // pred_region
        _
      $region36: #{critic_forward.4} parent=31 // pred_fallthru
        _
    $region32: #{critic_forward.4} parent=5 // pred_fallthru
      _
    %p1923 = scmp.le.s32.totalorder 2, %s9
    // Predicated region
    $region37: #{critic_forward.4} parent=5 // pred_check
      %p1924 = pneg %p1923
    $region38: #{critic_forward.4} parent=5 // pred_check_branch
      %1926 = sbr.rel (%p1924) target = $region40
    $region39: #{critic_forward.4} parent=5 // pred_region
      %s1927 = ssub.s32 %s9, 2
      // Predicated region
      $region41: #{critic_forward.4} parent=39 // pred_check
        %p1928 = pneg %p106
      $region42: #{critic_forward.4} parent=39 // pred_check_branch
        %1930 = sbr.rel (%p1928) target = $region44
      $region43: #{critic_forward.4} parent=39 // pred_region
        %p1931 = scmp.lt.s32.totalorder %s15, 1
        %s1932 = scalar_select %p1931, %s15, 1
        %s1933 = smul.addr %s1932, 128
        %s1934 = smul.addr %s1933, 8
        %s1935 = scalar_lea.vmem %s3, %s1934
      $region44: #{critic_forward.4} parent=39 // pred_fallthru
        _
    $region40: #{critic_forward.4} parent=5 // pred_fallthru
      _
  $region6: #{critic_forward.4} parent=0 // loop_footer
    %s13 = sadd.s32 1, %s9
  $region7: #{critic_forward.4} parent=0 // loop_footer_branch
    %8 = sbr.rel target = $region3
  $region8: #{critic_forward.4} parent=0 // loop_exit
    _

// kernel: critic_forward.5
$region0: #{critic_forward.5}
  #allocation0 [shape = 'u32[]', space=smem, size = 0x4, offset = 0x4, fixed_abs, tag = 'smem constant byte address 0x4 - core index']
  #allocation1 [shape = 'u32[144,128]{1,0:T(1,128)}', space=vmem, size = 0x12000, scoped, tag = 'internal scratch']
  %s0 = inlined_call_operand.vmem [shape: f32[2,256,128], index: 0, kind: input, shape index: {}]
  %s1 = inlined_call_operand.vmem [shape: f32[128,16], index: 1, kind: input, shape index: {}]
  %s2 = inlined_call_operand.vmem [shape: f32[1,16], index: 2, kind: input, shape index: {}]
  %s3 = inlined_call_operand.vmem [shape: f32[1,16], index: 3, kind: input, shape index: {}]
  %s4 = inlined_call_operand.vmem [shape: f32[2,256,16], index: 4, kind: output, shape index: {}]
  %s5 = sld [smem:[#allocation0]]
  $region49: #{critic_forward.5} parent=0
    _
  %s7 = ssub.s32 1, %s5
  %s8 = scalar_select 0, %s7, %s5
  loop: start=0, step=1, limit=4
  $region2: #{critic_forward.5} parent=0 // loop_pre_header
    _
  $region3: #{critic_forward.5} parent=0 // loop_header
    %s10 = sphi 0, %s14
    %p11 = scmp.ge.s32.totalorder %s10, 4
    %s20 = sphi 0, %s22
    %s23 = sphi 0, %s20
    %s24 = sphi 0, %s23
    %s40 = sphi 0, %s24
    %s44 = sphi 0, %s44
    %s46 = sphi 0, %s44
    %s47 = sphi 0, %s46
    %s61 = sphi 0, %s47
    %s65 = sphi 0, %s65
    %s67 = sphi 0, %s65
    %s68 = sphi 0, %s67
    %s82 = sphi 0, %s68
    %s86 = sphi 0, %s86
    %s88 = sphi 0, %s86
    %s89 = sphi 0, %s88
    %s103 = sphi 0, %s89
    %s109 = sphi 0, %s111
    %s112 = sphi 0, %s109
    %s113 = sphi 0, %s112
    %s129 = sphi 0, %s113
  $region4: #{critic_forward.5} parent=0 // loop_header_branch
    %13 = sbr.rel (%p11) target = $region8
  $region5: #{critic_forward.5} parent=0 // loop_body
    %s15 = ssub.s32 %s10, 1
    %s16 = ssub.s32 %s10, 2
    %s17 = sadd.s32 %s10, 1
    %s18 = ssub.s32 %s10, %s17
    %p19 = scmp.eq.s32.totalorder %s18, 0
    %s21 = sadd.s32 %s20, 1
    %s22 = scalar_select %p19, %s20, %s21
    %p25 = pneg %p19
    %p26 = scmp.eq.s32.totalorder %s10, 1
    %p27 = por %p25, %p26
    %p28 = scmp.ne.s32.totalorder %s20, %s23
    %p29 = scmp.eq.s32.totalorder %s10, 0
    %p30 = por %p28, %p29
    %p31 = scmp.ne.s32.totalorder %s20, %s23
    %p32 = scmp.eq.s32.totalorder %s15, 1
    %p33 = por %p31, %p32
    %p34 = scmp.ne.s32.totalorder %s23, %s24
    %p35 = scmp.eq.s32.totalorder %s15, 0
    %p36 = por %p34, %p35
    %p37 = scmp.ne.s32.totalorder %s23, %s24
    %p38 = scmp.eq.s32.totalorder %s16, 1
    %p39 = por %p37, %p38
    %p41 = scmp.ne.s32.totalorder %s24, %s40
    %p42 = scmp.eq.s32.totalorder %s16, 0
    %p43 = por %p41, %p42
    %s45 = sadd.s32 %s44, 1
    %p48 = scmp.eq.s32.totalorder %s10, 1
    %p49 = scmp.ne.s32.totalorder %s44, %s46
    %p50 = scmp.eq.s32.totalorder %s10, 0
    %p51 = por %p49, %p50
    %p52 = scmp.ne.s32.totalorder %s44, %s46
    %p53 = scmp.eq.s32.totalorder %s15, 1
    %p54 = por %p52, %p53
    %p55 = scmp.ne.s32.totalorder %s46, %s47
    %p56 = scmp.eq.s32.totalorder %s15, 0
    %p57 = por %p55, %p56
    %p58 = scmp.ne.s32.totalorder %s46, %s47
    %p59 = scmp.eq.s32.totalorder %s16, 1
    %p60 = por %p58, %p59
    %p62 = scmp.ne.s32.totalorder %s47, %s61
    %p63 = scmp.eq.s32.totalorder %s16, 0
    %p64 = por %p62, %p63
    %s66 = sadd.s32 %s65, 1
    %p69 = scmp.eq.s32.totalorder %s10, 1
    %p70 = scmp.ne.s32.totalorder %s65, %s67
    %p71 = scmp.eq.s32.totalorder %s10, 0
    %p72 = por %p70, %p71
    %p73 = scmp.ne.s32.totalorder %s65, %s67
    %p74 = scmp.eq.s32.totalorder %s15, 1
    %p75 = por %p73, %p74
    %p76 = scmp.ne.s32.totalorder %s67, %s68
    %p77 = scmp.eq.s32.totalorder %s15, 0
    %p78 = por %p76, %p77
    %p79 = scmp.ne.s32.totalorder %s67, %s68
    %p80 = scmp.eq.s32.totalorder %s16, 1
    %p81 = por %p79, %p80
    %p83 = scmp.ne.s32.totalorder %s68, %s82
    %p84 = scmp.eq.s32.totalorder %s16, 0
    %p85 = por %p83, %p84
    %s87 = sadd.s32 %s86, 1
    %p90 = scmp.eq.s32.totalorder %s10, 1
    %p91 = scmp.ne.s32.totalorder %s86, %s88
    %p92 = scmp.eq.s32.totalorder %s10, 0
    %p93 = por %p91, %p92
    %p94 = scmp.ne.s32.totalorder %s86, %s88
    %p95 = scmp.eq.s32.totalorder %s15, 1
    %p96 = por %p94, %p95
    %p97 = scmp.ne.s32.totalorder %s88, %s89
    %p98 = scmp.eq.s32.totalorder %s15, 0
    %p99 = por %p97, %p98
    %p100 = scmp.ne.s32.totalorder %s88, %s89
    %p101 = scmp.eq.s32.totalorder %s16, 1
    %p102 = por %p100, %p101
    %p104 = scmp.ne.s32.totalorder %s89, %s103
    %p105 = scmp.eq.s32.totalorder %s16, 0
    %p106 = por %p104, %p105
    %s107 = ssub.s32 %s10, %s17
    %p108 = scmp.eq.s32.totalorder %s107, 0
    %s110 = sadd.s32 %s109, 1
    %s111 = scalar_select %p108, %s109, %s110
    %p114 = pneg %p108
    %p115 = scmp.eq.s32.totalorder %s10, 1
    %p116 = por %p114, %p115
    %p117 = scmp.ne.s32.totalorder %s109, %s112
    %p118 = scmp.eq.s32.totalorder %s10, 0
    %p119 = por %p117, %p118
    %p120 = scmp.ne.s32.totalorder %s109, %s112
    %p121 = scmp.eq.s32.totalorder %s15, 1
    %p122 = por %p120, %p121
    %p123 = scmp.ne.s32.totalorder %s112, %s113
    %p124 = scmp.eq.s32.totalorder %s15, 0
    %p125 = por %p123, %p124
    %p126 = scmp.ne.s32.totalorder %s112, %s113
    %p127 = scmp.eq.s32.totalorder %s16, 1
    %p128 = por %p126, %p127
    %p130 = scmp.ne.s32.totalorder %s113, %s129
    %p131 = scmp.eq.s32.totalorder %s16, 0
    %p132 = por %p130, %p131
    %p133 = scmp.le.s32.totalorder 1, %s10
    %p134 = scmp.lt.s32.totalorder %s10, 3
    %p135 = pnand %p133, %p134
    %p136 = pneg %p135
    // Predicated region
    $region9: #{critic_forward.5} parent=5 // pred_check
      _
    $region10: #{critic_forward.5} parent=5 // pred_check_branch
      %138 = sbr.rel (%p135) target = $region12
    $region11: #{critic_forward.5} parent=5 // pred_region
      %s139 = ssub.s32 %s10, 1
      // Predicated region
      $region13: #{critic_forward.5} parent=11 // pred_check
        %p140 = pneg %p57
      $region14: #{critic_forward.5} parent=11 // pred_check_branch
        %142 = sbr.rel (%p140) target = $region16
      $region15: #{critic_forward.5} parent=11 // pred_region
        _
      $region16: #{critic_forward.5} parent=11 // pred_fallthru
        _
      // Predicated region
      $region17: #{critic_forward.5} parent=11 // pred_check
        %p143 = pneg %p78
      $region18: #{critic_forward.5} parent=11 // pred_check_branch
        %145 = sbr.rel (%p143) target = $region20
      $region19: #{critic_forward.5} parent=11 // pred_region
        _
      $region20: #{critic_forward.5} parent=11 // pred_fallthru
        _
      // Predicated region
      $region21: #{critic_forward.5} parent=11 // pred_check
        %p146 = pneg %p99
      $region22: #{critic_forward.5} parent=11 // pred_check_branch
        %148 = sbr.rel (%p146) target = $region24
      $region23: #{critic_forward.5} parent=11 // pred_region
        _
      $region24: #{critic_forward.5} parent=11 // pred_fallthru
        _
    $region12: #{critic_forward.5} parent=5 // pred_fallthru
      _
    %p149 = scmp.lt.s32.totalorder %s10, 2
    // Predicated region
    $region25: #{critic_forward.5} parent=5 // pred_check
      %p150 = pneg %p149
    $region26: #{critic_forward.5} parent=5 // pred_check_branch
      %152 = sbr.rel (%p150) target = $region28
    $region27: #{critic_forward.5} parent=5 // pred_region
      // Predicated region
      $region29: #{critic_forward.5} parent=27 // pred_check
        %p153 = pneg %p30
      $region30: #{critic_forward.5} parent=27 // pred_check_branch
        %155 = sbr.rel (%p153) target = $region32
      $region31: #{critic_forward.5} parent=27 // pred_region
        %p156 = scmp.lt.s32.totalorder %s10, 1
        %s157 = scalar_select %p156, %s10, 1
        %s158 = smul.addr %s157, 32
        %s159 = smul.addr %s158, 8
        %s160 = scalar_lea.vmem %s0, %s159
      $region32: #{critic_forward.5} parent=27 // pred_fallthru
        _
    $region28: #{critic_forward.5} parent=5 // pred_fallthru
      _
    %p161 = scmp.le.s32.totalorder 1, %s10
    %p162 = scmp.lt.s32.totalorder %s10, 3
    %p163 = pnand %p161, %p162
    %p164 = pneg %p163
    // Predicated region
    $region33: #{critic_forward.5} parent=5 // pred_check
      _
    $region34: #{critic_forward.5} parent=5 // pred_check_branch
      %166 = sbr.rel (%p163) target = $region36
    $region35: #{critic_forward.5} parent=5 // pred_region
      %s167 = ssub.s32 %s10, 1
      %p168 = scmp.lt.s32.totalorder %s15, 1
      %s169 = scalar_select %p168, %s15, 1
      %s170 = smul.addr %s169, 32
      %s171 = smul.addr %s170, 8
      %s172 = scalar_lea.vmem %s0, %s171
      %p173 = pneg %p36
      %p174 = pneg %p33
      %p175 = pneg %p57
      %p176 = pneg %p54
      %p177 = pneg %p78
      %p178 = pneg %p75
      %p179 = pneg %p99
      %p180 = pneg %p96
      %p181 = pneg %p125
      %p182 = pneg %p122
      %p183 = scmp.lt.s32.totalorder %s15, 1
      %s184 = scalar_select %p183, %s15, 1
      %s185 = smul.addr %s184, 32
      %s186 = smul.addr %s185, 8
      %s187 = scalar_lea.vmem %s4, %s186
      %p188 = scmp.lt.s32.totalorder %s15, 1
      %s189 = scalar_select %p188, %s15, 1
      %s190 = smul.addr %s189, 32
      %s191 = smul.addr %s190, 8
      %s192 = scalar_lea.vmem %s0, %s191
      %p193 = scmp.lt.s32.totalorder %s15, 1
      %s194 = scalar_select %p193, %s15, 1
      %s195 = smul.addr %s194, 32
      %s196 = smul.addr %s195, 8
      %s197 = scalar_lea.vmem %s4, %s196
      %v198 = vld [vmem:[%s192] sm:$0xff]
      %v199 = vld [vmem:[%s192 + $0x8] sm:$0xff]
      %v200 = vld [vmem:[%s192 + $0x10] sm:$0xff]
      %v201 = vld [vmem:[%s192 + $0x18] sm:$0xff]
      %v202 = vld [vmem:[%s192 + $0x20] sm:$0xff]
      %v203 = vld [vmem:[%s192 + $0x28] sm:$0xff]
      %v204 = vld [vmem:[%s192 + $0x30] sm:$0xff]
      %v205 = vld [vmem:[%s192 + $0x38] sm:$0xff]
      %v206 = vld [vmem:[%s192 + $0x40] sm:$0xff]
      %v207 = vld [vmem:[%s192 + $0x48] sm:$0xff]
      %v208 = vld [vmem:[%s192 + $0x50] sm:$0xff]
      %v209 = vld [vmem:[%s192 + $0x58] sm:$0xff]
      %v210 = vld [vmem:[%s192 + $0x60] sm:$0xff]
      %v211 = vld [vmem:[%s192 + $0x68] sm:$0xff]
      %v212 = vld [vmem:[%s192 + $0x70] sm:$0xff]
      %v213 = vld [vmem:[%s192 + $0x78] sm:$0xff]
      %v214 = vld [vmem:[%s192 + $0x80] sm:$0xff]
      %v215 = vld [vmem:[%s192 + $0x88] sm:$0xff]
      %v216 = vld [vmem:[%s192 + $0x90] sm:$0xff]
      %v217 = vld [vmem:[%s192 + $0x98] sm:$0xff]
      %v218 = vld [vmem:[%s192 + $0xa0] sm:$0xff]
      %v219 = vld [vmem:[%s192 + $0xa8] sm:$0xff]
      %v220 = vld [vmem:[%s192 + $0xb0] sm:$0xff]
      %v221 = vld [vmem:[%s192 + $0xb8] sm:$0xff]
      %v222 = vld [vmem:[%s192 + $0xc0] sm:$0xff]
      %v223 = vld [vmem:[%s192 + $0xc8] sm:$0xff]
      %v224 = vld [vmem:[%s192 + $0xd0] sm:$0xff]
      %v225 = vld [vmem:[%s192 + $0xd8] sm:$0xff]
      %v226 = vld [vmem:[%s192 + $0xe0] sm:$0xff]
      %v227 = vld [vmem:[%s192 + $0xe8] sm:$0xff]
      %v228 = vld [vmem:[%s192 + $0xf0] sm:$0xff]
      %v229 = vld [vmem:[%s192 + $0xf8] sm:$0xff]
      %v230 = vld [vmem:[%s1] sm:$0xff]
      %v231 = vld [vmem:[%s1 + $0x8] sm:$0xff]
      %v232 = vld [vmem:[%s1 + $0x10] sm:$0xff]
      %v233 = vld [vmem:[%s1 + $0x18] sm:$0xff]
      %v234 = vld [vmem:[%s1 + $0x20] sm:$0xff]
      %v235 = vld [vmem:[%s1 + $0x28] sm:$0xff]
      %v236 = vld [vmem:[%s1 + $0x30] sm:$0xff]
      %v237 = vld [vmem:[%s1 + $0x38] sm:$0xff]
      %v238 = vld [vmem:[%s1 + $0x40] sm:$0xff]
      %v239 = vld [vmem:[%s1 + $0x48] sm:$0xff]
      %v240 = vld [vmem:[%s1 + $0x50] sm:$0xff]
      %v241 = vld [vmem:[%s1 + $0x58] sm:$0xff]
      %v242 = vld [vmem:[%s1 + $0x60] sm:$0xff]
      %v243 = vld [vmem:[%s1 + $0x68] sm:$0xff]
      %v244 = vld [vmem:[%s1 + $0x70] sm:$0xff]
      %v245 = vld [vmem:[%s1 + $0x78] sm:$0xff]
      %v246 = vld [vmem:[%s2] sm:$0x1]
      %v247 = vld [vmem:[%s3] sm:$0x1]
      %248 = vmatprep.subr.mxu0 0.0
      %249 = vmatpush1.msra.mxu0 %v230
      %250 = vmatprep.subr.mxu0 0.0
      %251 = vmatpush1.msra.mxu0 %v231
      %252 = vmatprep.subr.mxu0 0.0
      %253 = vmatpush1.msra.mxu0 %v232
      %254 = vmatprep.subr.mxu0 0.0
      %255 = vmatpush1.msra.mxu0 %v233
      %256 = vmatprep.subr.mxu0 0.0
      %257 = vmatpush1.msra.mxu0 %v234
      %258 = vmatprep.subr.mxu0 0.0
      %259 = vmatpush1.msra.mxu0 %v235
      %260 = vmatprep.subr.mxu0 0.0
      %261 = vmatpush1.msra.mxu0 %v236
      %262 = vmatprep.subr.mxu0 0.0
      %263 = vmatpush1.msra.mxu0 %v237
      %264 = vmatprep.subr.mxu0 0.0
      %265 = vmatpush1.msra.mxu0 %v238
      %266 = vmatprep.subr.mxu0 0.0
      %267 = vmatpush1.msra.mxu0 %v239
      %268 = vmatprep.subr.mxu0 0.0
      %269 = vmatpush1.msra.mxu0 %v240
      %270 = vmatprep.subr.mxu0 0.0
      %271 = vmatpush1.msra.mxu0 %v241
      %272 = vmatprep.subr.mxu0 0.0
      %273 = vmatpush1.msra.mxu0 %v242
      %274 = vmatprep.subr.mxu0 0.0
      %275 = vmatpush1.msra.mxu0 %v243
      %276 = vmatprep.subr.mxu0 0.0
      %277 = vmatpush1.msra.mxu0 %v244
      %278 = vmatprep.subr.mxu0 0.0
      %279 = vmatpush1.msra.mxu0 %v245
      %280 = vmatprep.subr.mxu0 0.0
      %281 = vmatpush1.msra.mxu0 0.0
      %282 = vmatprep.subr.mxu0 0.0
      %283 = vmatpush1.msra.mxu0 0.0
      %284 = vmatprep.subr.mxu0 0.0
      %285 = vmatpush1.msra.mxu0 0.0
      %286 = vmatprep.subr.mxu0 0.0
      %287 = vmatpush1.msra.mxu0 0.0
      %288 = vmatprep.subr.mxu0 0.0
      %289 = vmatpush1.msra.mxu0 0.0
      %290 = vmatprep.subr.mxu0 0.0
      %291 = vmatpush1.msra.mxu0 0.0
      %292 = vmatprep.subr.mxu0 0.0
      %293 = vmatpush1.msra.mxu0 0.0
      %294 = vmatprep.subr.mxu0 0.0
      %295 = vmatpush1.msra.mxu0 0.0
      %296 = vmatprep.subr.mxu0 0.0
      %297 = vmatpush1.msra.mxu0 0.0
      %298 = vmatprep.subr.mxu0 0.0
      %299 = vmatpush1.msra.mxu0 0.0
      %300 = vmatprep.subr.mxu0 0.0
      %301 = vmatpush1.msra.mxu0 0.0
      %302 = vmatprep.subr.mxu0 0.0
      %303 = vmatpush1.msra.mxu0 0.0
      %304 = vmatprep.subr.mxu0 0.0
      %305 = vmatpush1.msra.mxu0 0.0
      %306 = vmatprep.subr.mxu0 0.0
      %307 = vmatpush1.msra.mxu0 0.0
      %308 = vmatprep.subr.mxu0 0.0
      %309 = vmatpush1.msra.mxu0 0.0
      %310 = vmatprep.subr.mxu0 0.0
      %311 = vmatpush1.msra.mxu0 0.0
      %312 = vmatprep.mubr.f32.mxu0 0.0
      %313 = vmatmul.mubr.f32.gmra.mrb[0].mxu0 %v198
      %v314 = vpop.f32.mrb[0].mxu0
      %v315 = vadd.f32 0.0, %v314
      %v316 = vpop.f32.mrb[0].mxu0
      %317 = vmatprep.mubr.f32.mxu0 0.0
      %318 = vmatmul.mubr.f32.gmra.mrb[0].mxu0 %v199
      %v319 = vpop.f32.mrb[0].mxu0
      %v320 = vadd.f32 0.0, %v319
      %v321 = vpop.f32.mrb[0].mxu0
      %322 = vmatprep.mubr.f32.mxu0 0.0
      %323 = vmatmul.mubr.f32.gmra.mrb[0].mxu0 %v200
      %v324 = vpop.f32.mrb[0].mxu0
      %v325 = vadd.f32 0.0, %v324
      %v326 = vpop.f32.mrb[0].mxu0
      %327 = vmatprep.mubr.f32.mxu0 0.0
      %328 = vmatmul.mubr.f32.gmra.mrb[0].mxu0 %v201
      %v329 = vpop.f32.mrb[0].mxu0
      %v330 = vadd.f32 0.0, %v329
      %v331 = vpop.f32.mrb[0].mxu0
      %332 = vmatprep.mubr.f32.mxu0 0.0
      %333 = vmatmul.mubr.f32.gmra.mrb[0].mxu0 %v202
      %v334 = vpop.f32.mrb[0].mxu0
      %v335 = vadd.f32 0.0, %v334
      %v336 = vpop.f32.mrb[0].mxu0
      %337 = vmatprep.mubr.f32.mxu0 0.0
      %338 = vmatmul.mubr.f32.gmra.mrb[0].mxu0 %v203
      %v339 = vpop.f32.mrb[0].mxu0
      %v340 = vadd.f32 0.0, %v339
      %v341 = vpop.f32.mrb[0].mxu0
      %342 = vmatprep.mubr.f32.mxu0 0.0
      %343 = vmatmul.mubr.f32.gmra.mrb[0].mxu0 %v204
      %v344 = vpop.f32.mrb[0].mxu0
      %v345 = vadd.f32 0.0, %v344
      %v346 = vpop.f32.mrb[0].mxu0
      %347 = vmatprep.mubr.f32.mxu0 0.0
      %348 = vmatmul.mubr.f32.gmra.mrb[0].mxu0 %v205
      %v349 = vpop.f32.mrb[0].mxu0
      %v350 = vadd.f32 0.0, %v349
      %v351 = vpop.f32.mrb[0].mxu0
      %352 = vmatprep.mubr.f32.mxu0 0.0
      %353 = vmatmul.mubr.f32.gmra.mrb[0].mxu0 %v206
      %v354 = vpop.f32.mrb[0].mxu0
      %v355 = vadd.f32 0.0, %v354
      %v356 = vpop.f32.mrb[0].mxu0
      %357 = vmatprep.mubr.f32.mxu0 0.0
      %358 = vmatmul.mubr.f32.gmra.mrb[0].mxu0 %v207
      %v359 = vpop.f32.mrb[0].mxu0
      %v360 = vadd.f32 0.0, %v359
      %v361 = vpop.f32.mrb[0].mxu0
      %362 = vmatprep.mubr.f32.mxu0 0.0
      %363 = vmatmul.mubr.f32.gmra.mrb[0].mxu0 %v208
      %v364 = vpop.f32.mrb[0].mxu0
      %v365 = vadd.f32 0.0, %v364
      %v366 = vpop.f32.mrb[0].mxu0
      %367 = vmatprep.mubr.f32.mxu0 0.0
      %368 = vmatmul.mubr.f32.gmra.mrb[0].mxu0 %v209
      %v369 = vpop.f32.mrb[0].mxu0
      %v370 = vadd.f32 0.0, %v369
      %v371 = vpop.f32.mrb[0].mxu0
      %372 = vmatprep.mubr.f32.mxu0 0.0
      %373 = vmatmul.mubr.f32.gmra.mrb[0].mxu0 %v210
      %v374 = vpop.f32.mrb[0].mxu0
      %v375 = vadd.f32 0.0, %v374
      %v376 = vpop.f32.mrb[0].mxu0
      %377 = vmatprep.mubr.f32.mxu0 0.0
      %378 = vmatmul.mubr.f32.gmra.mrb[0].mxu0 %v211
      %v379 = vpop.f32.mrb[0].mxu0
      %v380 = vadd.f32 0.0, %v379
      %v381 = vpop.f32.mrb[0].mxu0
      %382 = vmatprep.mubr.f32.mxu0 0.0
      %383 = vmatmul.mubr.f32.gmra.mrb[0].mxu0 %v212
      %v384 = vpop.f32.mrb[0].mxu0
      %v385 = vadd.f32 0.0, %v384
      %v386 = vpop.f32.mrb[0].mxu0
      %387 = vmatprep.mubr.f32.mxu0 0.0
      %388 = vmatmul.mubr.f32.gmra.mrb[0].mxu0 %v213
      %v389 = vpop.f32.mrb[0].mxu0
      %v390 = vadd.f32 0.0, %v389
      %v391 = vpop.f32.mrb[0].mxu0
      %392 = vmatprep.mubr.f32.mxu0 0.0
      %393 = vmatmul.mubr.f32.gmra.mrb[0].mxu0 %v214
      %v394 = vpop.f32.mrb[0].mxu0
      %v395 = vadd.f32 0.0, %v394
      %v396 = vpop.f32.mrb[0].mxu0
      %397 = vmatprep.mubr.f32.mxu0 0.0
      %398 = vmatmul.mubr.f32.gmra.mrb[0].mxu0 %v215
      %v399 = vpop.f32.mrb[0].mxu0
      %v400 = vadd.f32 0.0, %v399
      %v401 = vpop.f32.mrb[0].mxu0
      %402 = vmatprep.mubr.f32.mxu0 0.0
      %403 = vmatmul.mubr.f32.gmra.mrb[0].mxu0 %v216
      %v404 = vpop.f32.mrb[0].mxu0
      %v405 = vadd.f32 0.0, %v404
      %v406 = vpop.f32.mrb[0].mxu0
      %407 = vmatprep.mubr.f32.mxu0 0.0
      %408 = vmatmul.mubr.f32.gmra.mrb[0].mxu0 %v217
      %v409 = vpop.f32.mrb[0].mxu0
      %v410 = vadd.f32 0.0, %v409
      %v411 = vpop.f32.mrb[0].mxu0
      %412 = vmatprep.mubr.f32.mxu0 0.0
      %413 = vmatmul.mubr.f32.gmra.mrb[0].mxu0 %v218
      %v414 = vpop.f32.mrb[0].mxu0
      %v415 = vadd.f32 0.0, %v414
      %v416 = vpop.f32.mrb[0].mxu0
      %417 = vmatprep.mubr.f32.mxu0 0.0
      %418 = vmatmul.mubr.f32.gmra.mrb[0].mxu0 %v219
      %v419 = vpop.f32.mrb[0].mxu0
      %v420 = vadd.f32 0.0, %v419
      %v421 = vpop.f32.mrb[0].mxu0
      %422 = vmatprep.mubr.f32.mxu0 0.0
      %423 = vmatmul.mubr.f32.gmra.mrb[0].mxu0 %v220
      %v424 = vpop.f32.mrb[0].mxu0
      %v425 = vadd.f32 0.0, %v424
      %v426 = vpop.f32.mrb[0].mxu0
      %427 = vmatprep.mubr.f32.mxu0 0.0
      %428 = vmatmul.mubr.f32.gmra.mrb[0].mxu0 %v221
      %v429 = vpop.f32.mrb[0].mxu0
      %v430 = vadd.f32 0.0, %v429
      %v431 = vpop.f32.mrb[0].mxu0
      %432 = vmatprep.mubr.f32.mxu0 0.0
      %433 = vmatmul.mubr.f32.gmra.mrb[0].mxu0 %v222
      %v434 = vpop.f32.mrb[0].mxu0
      %v435 = vadd.f32 0.0, %v434
      %v436 = vpop.f32.mrb[0].mxu0
      %437 = vmatprep.mubr.f32.mxu0 0.0
      %438 = vmatmul.mubr.f32.gmra.mrb[0].mxu0 %v223
      %v439 = vpop.f32.mrb[0].mxu0
      %v440 = vadd.f32 0.0, %v439
      %v441 = vpop.f32.mrb[0].mxu0
      %442 = vmatprep.mubr.f32.mxu0 0.0
      %443 = vmatmul.mubr.f32.gmra.mrb[0].mxu0 %v224
      %v444 = vpop.f32.mrb[0].mxu0
      %v445 = vadd.f32 0.0, %v444
      %v446 = vpop.f32.mrb[0].mxu0
      %447 = vmatprep.mubr.f32.mxu0 0.0
      %448 = vmatmul.mubr.f32.gmra.mrb[0].mxu0 %v225
      %v449 = vpop.f32.mrb[0].mxu0
      %v450 = vadd.f32 0.0, %v449
      %v451 = vpop.f32.mrb[0].mxu0
      %452 = vmatprep.mubr.f32.mxu0 0.0
      %453 = vmatmul.mubr.f32.gmra.mrb[0].mxu0 %v226
      %v454 = vpop.f32.mrb[0].mxu0
      %v455 = vadd.f32 0.0, %v454
      %v456 = vpop.f32.mrb[0].mxu0
      %457 = vmatprep.mubr.f32.mxu0 0.0
      %458 = vmatmul.mubr.f32.gmra.mrb[0].mxu0 %v227
      %v459 = vpop.f32.mrb[0].mxu0
      %v460 = vadd.f32 0.0, %v459
      %v461 = vpop.f32.mrb[0].mxu0
      %462 = vmatprep.mubr.f32.mxu0 0.0
      %463 = vmatmul.mubr.f32.gmra.mrb[0].mxu0 %v228
      %v464 = vpop.f32.mrb[0].mxu0
      %v465 = vadd.f32 0.0, %v464
      %v466 = vpop.f32.mrb[0].mxu0
      %467 = vmatprep.mubr.f32.mxu0 0.0
      %468 = vmatmul.mubr.f32.gmra.mrb[0].mxu0 %v229
      %v469 = vpop.f32.mrb[0].mxu0
      %v470 = vadd.f32 0.0, %v469
      %v471 = vpop.f32.mrb[0].mxu0
      %472 = vdwg.mxu0
      %vm473 = vcmask 130048
      %v474 = vsel %vm473, %v315, 0.0
      %v475 = vsel %vm473, %v320, 0.0
      %v476 = vadd.f32 %v474, %v475
      %v477 = vsel %vm473, %v325, 0.0
      %v478 = vadd.f32 %v476, %v477
      %v479 = vsel %vm473, %v330, 0.0
      %v480 = vadd.f32 %v478, %v479
      %v481 = vsel %vm473, %v335, 0.0
      %v482 = vadd.f32 %v480, %v481
      %v483 = vsel %vm473, %v340, 0.0
      %v484 = vadd.f32 %v482, %v483
      %v485 = vsel %vm473, %v345, 0.0
      %v486 = vadd.f32 %v484, %v485
      %v487 = vsel %vm473, %v350, 0.0
      %v488 = vadd.f32 %v486, %v487
      %v489 = vsel %vm473, %v355, 0.0
      %v490 = vadd.f32 %v488, %v489
      %v491 = vsel %vm473, %v360, 0.0
      %v492 = vadd.f32 %v490, %v491
      %v493 = vsel %vm473, %v365, 0.0
      %v494 = vadd.f32 %v492, %v493
      %v495 = vsel %vm473, %v370, 0.0
      %v496 = vadd.f32 %v494, %v495
      %v497 = vsel %vm473, %v375, 0.0
      %v498 = vadd.f32 %v496, %v497
      %v499 = vsel %vm473, %v380, 0.0
      %v500 = vadd.f32 %v498, %v499
      %v501 = vsel %vm473, %v385, 0.0
      %v502 = vadd.f32 %v500, %v501
      %v503 = vsel %vm473, %v390, 0.0
      %v504 = vadd.f32 %v502, %v503
      %v505 = vsel %vm473, %v395, 0.0
      %v506 = vadd.f32 %v504, %v505
      %v507 = vsel %vm473, %v400, 0.0
      %v508 = vadd.f32 %v506, %v507
      %v509 = vsel %vm473, %v405, 0.0
      %v510 = vadd.f32 %v508, %v509
      %v511 = vsel %vm473, %v410, 0.0
      %v512 = vadd.f32 %v510, %v511
      %v513 = vsel %vm473, %v415, 0.0
      %v514 = vadd.f32 %v512, %v513
      %v515 = vsel %vm473, %v420, 0.0
      %v516 = vadd.f32 %v514, %v515
      %v517 = vsel %vm473, %v425, 0.0
      %v518 = vadd.f32 %v516, %v517
      %v519 = vsel %vm473, %v430, 0.0
      %v520 = vadd.f32 %v518, %v519
      %v521 = vsel %vm473, %v435, 0.0
      %v522 = vadd.f32 %v520, %v521
      %v523 = vsel %vm473, %v440, 0.0
      %v524 = vadd.f32 %v522, %v523
      %v525 = vsel %vm473, %v445, 0.0
      %v526 = vadd.f32 %v524, %v525
      %v527 = vsel %vm473, %v450, 0.0
      %v528 = vadd.f32 %v526, %v527
      %v529 = vsel %vm473, %v455, 0.0
      %v530 = vadd.f32 %v528, %v529
      %v531 = vsel %vm473, %v460, 0.0
      %v532 = vadd.f32 %v530, %v531
      %v533 = vsel %vm473, %v465, 0.0
      %v534 = vadd.f32 %v532, %v533
      %v535 = vsel %vm473, %v470, 0.0
      %v536 = vadd.f32 %v534, %v535
      %v537 = vrot.slane %v536, 4
      %v538 = vadd.f32 %v536, %v537
      %v539 = vrot.slane %v538, 2
      %v540 = vadd.f32 %v538, %v539
      %v541 = vrot.slane %v540, 1
      %v542 = vadd.f32 %v540, %v541
      %v543 = vmul.f32 %v315, %v315
      %v544 = vmul.f32 %v320, %v320
      %v545 = vmul.f32 %v325, %v325
      %v546 = vmul.f32 %v330, %v330
      %v547 = vmul.f32 %v335, %v335
      %v548 = vmul.f32 %v340, %v340
      %v549 = vmul.f32 %v345, %v345
      %v550 = vmul.f32 %v350, %v350
      %v551 = vmul.f32 %v355, %v355
      %v552 = vmul.f32 %v360, %v360
      %v553 = vmul.f32 %v365, %v365
      %v554 = vmul.f32 %v370, %v370
      %v555 = vmul.f32 %v375, %v375
      %v556 = vmul.f32 %v380, %v380
      %v557 = vmul.f32 %v385, %v385
      %v558 = vmul.f32 %v390, %v390
      %v559 = vmul.f32 %v395, %v395
      %v560 = vmul.f32 %v400, %v400
      %v561 = vmul.f32 %v405, %v405
      %v562 = vmul.f32 %v410, %v410
      %v563 = vmul.f32 %v415, %v415
      %v564 = vmul.f32 %v420, %v420
      %v565 = vmul.f32 %v425, %v425
      %v566 = vmul.f32 %v430, %v430
      %v567 = vmul.f32 %v435, %v435
      %v568 = vmul.f32 %v440, %v440
      %v569 = vmul.f32 %v445, %v445
      %v570 = vmul.f32 %v450, %v450
      %v571 = vmul.f32 %v455, %v455
      %v572 = vmul.f32 %v460, %v460
      %v573 = vmul.f32 %v465, %v465
      %v574 = vmul.f32 %v470, %v470
      %v575 = vsel %vm473, %v543, 0.0
      %v576 = vsel %vm473, %v544, 0.0
      %v577 = vadd.f32 %v575, %v576
      %v578 = vsel %vm473, %v545, 0.0
      %v579 = vadd.f32 %v577, %v578
      %v580 = vsel %vm473, %v546, 0.0
      %v581 = vadd.f32 %v579, %v580
      %v582 = vsel %vm473, %v547, 0.0
      %v583 = vadd.f32 %v581, %v582
      %v584 = vsel %vm473, %v548, 0.0
      %v585 = vadd.f32 %v583, %v584
      %v586 = vsel %vm473, %v549, 0.0
      %v587 = vadd.f32 %v585, %v586
      %v588 = vsel %vm473, %v550, 0.0
      %v589 = vadd.f32 %v587, %v588
      %v590 = vsel %vm473, %v551, 0.0
      %v591 = vadd.f32 %v589, %v590
      %v592 = vsel %vm473, %v552, 0.0
      %v593 = vadd.f32 %v591, %v592
      %v594 = vsel %vm473, %v553, 0.0
      %v595 = vadd.f32 %v593, %v594
      %v596 = vsel %vm473, %v554, 0.0
      %v597 = vadd.f32 %v595, %v596
      %v598 = vsel %vm473, %v555, 0.0
      %v599 = vadd.f32 %v597, %v598
      %v600 = vsel %vm473, %v556, 0.0
      %v601 = vadd.f32 %v599, %v600
      %v602 = vsel %vm473, %v557, 0.0
      %v603 = vadd.f32 %v601, %v602
      %v604 = vsel %vm473, %v558, 0.0
      %v605 = vadd.f32 %v603, %v604
      %v606 = vsel %vm473, %v559, 0.0
      %v607 = vadd.f32 %v605, %v606
      %v608 = vsel %vm473, %v560, 0.0
      %v609 = vadd.f32 %v607, %v608
      %v610 = vsel %vm473, %v561, 0.0
      %v611 = vadd.f32 %v609, %v610
      %v612 = vsel %vm473, %v562, 0.0
      %v613 = vadd.f32 %v611, %v612
      %v614 = vsel %vm473, %v563, 0.0
      %v615 = vadd.f32 %v613, %v614
      %v616 = vsel %vm473, %v564, 0.0
      %v617 = vadd.f32 %v615, %v616
      %v618 = vsel %vm473, %v565, 0.0
      %v619 = vadd.f32 %v617, %v618
      %v620 = vsel %vm473, %v566, 0.0
      %v621 = vadd.f32 %v619, %v620
      %v622 = vsel %vm473, %v567, 0.0
      %v623 = vadd.f32 %v621, %v622
      %v624 = vsel %vm473, %v568, 0.0
      %v625 = vadd.f32 %v623, %v624
      %v626 = vsel %vm473, %v569, 0.0
      %v627 = vadd.f32 %v625, %v626
      %v628 = vsel %vm473, %v570, 0.0
      %v629 = vadd.f32 %v627, %v628
      %v630 = vsel %vm473, %v571, 0.0
      %v631 = vadd.f32 %v629, %v630
      %v632 = vsel %vm473, %v572, 0.0
      %v633 = vadd.f32 %v631, %v632
      %v634 = vsel %vm473, %v573, 0.0
      %v635 = vadd.f32 %v633, %v634
      %v636 = vsel %vm473, %v574, 0.0
      %v637 = vadd.f32 %v635, %v636
      %v638 = vrot.slane %v637, 4
      %v639 = vadd.f32 %v637, %v638
      %v640 = vrot.slane %v639, 2
      %v641 = vadd.f32 %v639, %v640
      %v642 = vrot.slane %v641, 1
      %v643 = vadd.f32 %v641, %v642
      %v644 = vmul.f32 %v542, 0.00390625
      %v645 = vmul.f32 %v643, 0.00390625
      %v646 = vmul.f32 %v644, %v644
      %v647 = vsub.f32 %v645, %v646
      %v648 = vmax.f32 %v647, 0.0
      %v649 = vadd.f32 %v648, 1e-05
      %v650 = vrsqrt.pop %v649
      %v651 = vmul.f32 %v246, %v650
      %v652 = vmul.f32 %v644, %v651
      %v653 = vsub.f32 %v247, %v652
      %v655 = vlaneseq
      %v656 = vshrl.u32 %v655, 7
      %v657 = vsub.s32 0, %v656
      %v658 = vrot.slane %v651, %v657
      %v660 = vmul.f32 %v315, %v658
      %v661 = vmul.f32 %v320, %v658
      %v662 = vmul.f32 %v325, %v658
      %v663 = vmul.f32 %v330, %v658
      %v664 = vmul.f32 %v335, %v658
      %v665 = vmul.f32 %v340, %v658
      %v666 = vmul.f32 %v345, %v658
      %v667 = vmul.f32 %v350, %v658
      %v668 = vmul.f32 %v355, %v658
      %v669 = vmul.f32 %v360, %v658
      %v670 = vmul.f32 %v365, %v658
      %v671 = vmul.f32 %v370, %v658
      %v672 = vmul.f32 %v375, %v658
      %v673 = vmul.f32 %v380, %v658
      %v674 = vmul.f32 %v385, %v658
      %v675 = vmul.f32 %v390, %v658
      %v676 = vmul.f32 %v395, %v658
      %v677 = vmul.f32 %v400, %v658
      %v678 = vmul.f32 %v405, %v658
      %v679 = vmul.f32 %v410, %v658
      %v680 = vmul.f32 %v415, %v658
      %v681 = vmul.f32 %v420, %v658
      %v682 = vmul.f32 %v425, %v658
      %v683 = vmul.f32 %v430, %v658
      %v684 = vmul.f32 %v435, %v658
      %v685 = vmul.f32 %v440, %v658
      %v686 = vmul.f32 %v445, %v658
      %v687 = vmul.f32 %v450, %v658
      %v688 = vmul.f32 %v455, %v658
      %v689 = vmul.f32 %v460, %v658
      %v690 = vmul.f32 %v465, %v658
      %v691 = vmul.f32 %v470, %v658
      %v693 = vlaneseq
      %v694 = vshrl.u32 %v693, 7
      %v695 = vsub.s32 0, %v694
      %v696 = vrot.slane %v653, %v695
      %v698 = vadd.f32 %v660, %v696
      %v699 = vadd.f32 %v661, %v696
      %v700 = vadd.f32 %v662, %v696
      %v701 = vadd.f32 %v663, %v696
      %v702 = vadd.f32 %v664, %v696
      %v703 = vadd.f32 %v665, %v696
      %v704 = vadd.f32 %v666, %v696
      %v705 = vadd.f32 %v667, %v696
      %v706 = vadd.f32 %v668, %v696
      %v707 = vadd.f32 %v669, %v696
      %v708 = vadd.f32 %v670, %v696
      %v709 = vadd.f32 %v671, %v696
      %v710 = vadd.f32 %v672, %v696
      %v711 = vadd.f32 %v673, %v696
      %v712 = vadd.f32 %v674, %v696
      %v713 = vadd.f32 %v675, %v696
      %v714 = vadd.f32 %v676, %v696
      %v715 = vadd.f32 %v677, %v696
      %v716 = vadd.f32 %v678, %v696
      %v717 = vadd.f32 %v679, %v696
      %v718 = vadd.f32 %v680, %v696
      %v719 = vadd.f32 %v681, %v696
      %v720 = vadd.f32 %v682, %v696
      %v721 = vadd.f32 %v683, %v696
      %v722 = vadd.f32 %v684, %v696
      %v723 = vadd.f32 %v685, %v696
      %v724 = vadd.f32 %v686, %v696
      %v725 = vadd.f32 %v687, %v696
      %v726 = vadd.f32 %v688, %v696
      %v727 = vadd.f32 %v689, %v696
      %v728 = vadd.f32 %v690, %v696
      %v729 = vadd.f32 %v691, %v696
      %vm730 = vcmp.gt.f32.partialorder %v698, 0.0
      %vm731 = vcmp.gt.f32.partialorder %v699, 0.0
      %vm732 = vcmp.gt.f32.partialorder %v700, 0.0
      %vm733 = vcmp.gt.f32.partialorder %v701, 0.0
      %vm734 = vcmp.gt.f32.partialorder %v702, 0.0
      %vm735 = vcmp.gt.f32.partialorder %v703, 0.0
      %vm736 = vcmp.gt.f32.partialorder %v704, 0.0
      %vm737 = vcmp.gt.f32.partialorder %v705, 0.0
      %vm738 = vcmp.gt.f32.partialorder %v706, 0.0
      %vm739 = vcmp.gt.f32.partialorder %v707, 0.0
      %vm740 = vcmp.gt.f32.partialorder %v708, 0.0
      %vm741 = vcmp.gt.f32.partialorder %v709, 0.0
      %vm742 = vcmp.gt.f32.partialorder %v710, 0.0
      %vm743 = vcmp.gt.f32.partialorder %v711, 0.0
      %vm744 = vcmp.gt.f32.partialorder %v712, 0.0
      %vm745 = vcmp.gt.f32.partialorder %v713, 0.0
      %vm746 = vcmp.gt.f32.partialorder %v714, 0.0
      %vm747 = vcmp.gt.f32.partialorder %v715, 0.0
      %vm748 = vcmp.gt.f32.partialorder %v716, 0.0
      %vm749 = vcmp.gt.f32.partialorder %v717, 0.0
      %vm750 = vcmp.gt.f32.partialorder %v718, 0.0
      %vm751 = vcmp.gt.f32.partialorder %v719, 0.0
      %vm752 = vcmp.gt.f32.partialorder %v720, 0.0
      %vm753 = vcmp.gt.f32.partialorder %v721, 0.0
      %vm754 = vcmp.gt.f32.partialorder %v722, 0.0
      %vm755 = vcmp.gt.f32.partialorder %v723, 0.0
      %vm756 = vcmp.gt.f32.partialorder %v724, 0.0
      %vm757 = vcmp.gt.f32.partialorder %v725, 0.0
      %vm758 = vcmp.gt.f32.partialorder %v726, 0.0
      %vm759 = vcmp.gt.f32.partialorder %v727, 0.0
      %vm760 = vcmp.gt.f32.partialorder %v728, 0.0
      %vm761 = vcmp.gt.f32.partialorder %v729, 0.0
      %v762 = vmul.f32 %v698, 0.2
      %v763 = vmul.f32 %v699, 0.2
      %v764 = vmul.f32 %v700, 0.2
      %v765 = vmul.f32 %v701, 0.2
      %v766 = vmul.f32 %v702, 0.2
      %v767 = vmul.f32 %v703, 0.2
      %v768 = vmul.f32 %v704, 0.2
      %v769 = vmul.f32 %v705, 0.2
      %v770 = vmul.f32 %v706, 0.2
      %v771 = vmul.f32 %v707, 0.2
      %v772 = vmul.f32 %v708, 0.2
      %v773 = vmul.f32 %v709, 0.2
      %v774 = vmul.f32 %v710, 0.2
      %v775 = vmul.f32 %v711, 0.2
      %v776 = vmul.f32 %v712, 0.2
      %v777 = vmul.f32 %v713, 0.2
      %v778 = vmul.f32 %v714, 0.2
      %v779 = vmul.f32 %v715, 0.2
      %v780 = vmul.f32 %v716, 0.2
      %v781 = vmul.f32 %v717, 0.2
      %v782 = vmul.f32 %v718, 0.2
      %v783 = vmul.f32 %v719, 0.2
      %v784 = vmul.f32 %v720, 0.2
      %v785 = vmul.f32 %v721, 0.2
      %v786 = vmul.f32 %v722, 0.2
      %v787 = vmul.f32 %v723, 0.2
      %v788 = vmul.f32 %v724, 0.2
      %v789 = vmul.f32 %v725, 0.2
      %v790 = vmul.f32 %v726, 0.2
      %v791 = vmul.f32 %v727, 0.2
      %v792 = vmul.f32 %v728, 0.2
      %v793 = vmul.f32 %v729, 0.2
      %v794 = vsel %vm730, %v698, %v762
      %v795 = vsel %vm731, %v699, %v763
      %v796 = vsel %vm732, %v700, %v764
      %v797 = vsel %vm733, %v701, %v765
      %v798 = vsel %vm734, %v702, %v766
      %v799 = vsel %vm735, %v703, %v767
      %v800 = vsel %vm736, %v704, %v768
      %v801 = vsel %vm737, %v705, %v769
      %v802 = vsel %vm738, %v706, %v770
      %v803 = vsel %vm739, %v707, %v771
      %v804 = vsel %vm740, %v708, %v772
      %v805 = vsel %vm741, %v709, %v773
      %v806 = vsel %vm742, %v710, %v774
      %v807 = vsel %vm743, %v711, %v775
      %v808 = vsel %vm744, %v712, %v776
      %v809 = vsel %vm745, %v713, %v777
      %v810 = vsel %vm746, %v714, %v778
      %v811 = vsel %vm747, %v715, %v779
      %v812 = vsel %vm748, %v716, %v780
      %v813 = vsel %vm749, %v717, %v781
      %v814 = vsel %vm750, %v718, %v782
      %v815 = vsel %vm751, %v719, %v783
      %v816 = vsel %vm752, %v720, %v784
      %v817 = vsel %vm753, %v721, %v785
      %v818 = vsel %vm754, %v722, %v786
      %v819 = vsel %vm755, %v723, %v787
      %v820 = vsel %vm756, %v724, %v788
      %v821 = vsel %vm757, %v725, %v789
      %v822 = vsel %vm758, %v726, %v790
      %v823 = vsel %vm759, %v727, %v791
      %v824 = vsel %vm760, %v728, %v792
      %v825 = vsel %vm761, %v729, %v793
      %826 = vst.msk [vmem:[%s197] sm:$0xff] %vm473, %v794
      %827 = vst.msk [vmem:[%s197 + $0x8] sm:$0xff] %vm473, %v795
      %828 = vst.msk [vmem:[%s197 + $0x10] sm:$0xff] %vm473, %v796
      %829 = vst.msk [vmem:[%s197 + $0x18] sm:$0xff] %vm473, %v797
      %830 = vst.msk [vmem:[%s197 + $0x20] sm:$0xff] %vm473, %v798
      %831 = vst.msk [vmem:[%s197 + $0x28] sm:$0xff] %vm473, %v799
      %832 = vst.msk [vmem:[%s197 + $0x30] sm:$0xff] %vm473, %v800
      %833 = vst.msk [vmem:[%s197 + $0x38] sm:$0xff] %vm473, %v801
      %834 = vst.msk [vmem:[%s197 + $0x40] sm:$0xff] %vm473, %v802
      %835 = vst.msk [vmem:[%s197 + $0x48] sm:$0xff] %vm473, %v803
      %836 = vst.msk [vmem:[%s197 + $0x50] sm:$0xff] %vm473, %v804
      %837 = vst.msk [vmem:[%s197 + $0x58] sm:$0xff] %vm473, %v805
      %838 = vst.msk [vmem:[%s197 + $0x60] sm:$0xff] %vm473, %v806
      %839 = vst.msk [vmem:[%s197 + $0x68] sm:$0xff] %vm473, %v807
      %840 = vst.msk [vmem:[%s197 + $0x70] sm:$0xff] %vm473, %v808
      %841 = vst.msk [vmem:[%s197 + $0x78] sm:$0xff] %vm473, %v809
      %842 = vst.msk [vmem:[%s197 + $0x80] sm:$0xff] %vm473, %v810
      %843 = vst.msk [vmem:[%s197 + $0x88] sm:$0xff] %vm473, %v811
      %844 = vst.msk [vmem:[%s197 + $0x90] sm:$0xff] %vm473, %v812
      %845 = vst.msk [vmem:[%s197 + $0x98] sm:$0xff] %vm473, %v813
      %846 = vst.msk [vmem:[%s197 + $0xa0] sm:$0xff] %vm473, %v814
      %847 = vst.msk [vmem:[%s197 + $0xa8] sm:$0xff] %vm473, %v815
      %848 = vst.msk [vmem:[%s197 + $0xb0] sm:$0xff] %vm473, %v816
      %849 = vst.msk [vmem:[%s197 + $0xb8] sm:$0xff] %vm473, %v817
      %850 = vst.msk [vmem:[%s197 + $0xc0] sm:$0xff] %vm473, %v818
      %851 = vst.msk [vmem:[%s197 + $0xc8] sm:$0xff] %vm473, %v819
      %852 = vst.msk [vmem:[%s197 + $0xd0] sm:$0xff] %vm473, %v820
      %853 = vst.msk [vmem:[%s197 + $0xd8] sm:$0xff] %vm473, %v821
      %854 = vst.msk [vmem:[%s197 + $0xe0] sm:$0xff] %vm473, %v822
      %855 = vst.msk [vmem:[%s197 + $0xe8] sm:$0xff] %vm473, %v823
      %856 = vst.msk [vmem:[%s197 + $0xf0] sm:$0xff] %vm473, %v824
      %857 = vst.msk [vmem:[%s197 + $0xf8] sm:$0xff] %vm473, %v825
      %p858 = scmp.lt.s32.totalorder %s15, 1
      %s859 = scalar_select %p858, %s15, 1
      %s860 = smul.addr %s859, 32
      %s861 = smul.addr %s860, 8
      %s862 = scalar_lea.vmem %s4, %s861
      // Predicated region
      $region37: #{critic_forward.5} parent=35 // pred_check
        %p863 = pneg %p122
      $region38: #{critic_forward.5} parent=35 // pred_check_branch
        %865 = sbr.rel (%p863) target = $region40
      $region39: #{critic_forward.5} parent=35 // pred_region
        _
      $region40: #{critic_forward.5} parent=35 // pred_fallthru
        _
    $region36: #{critic_forward.5} parent=5 // pred_fallthru
      _
    %p866 = scmp.le.s32.totalorder 2, %s10
    // Predicated region
    $region41: #{critic_forward.5} parent=5 // pred_check
      %p867 = pneg %p866
    $region42: #{critic_forward.5} parent=5 // pred_check_branch
      %869 = sbr.rel (%p867) target = $region44
    $region43: #{critic_forward.5} parent=5 // pred_region
      %s870 = ssub.s32 %s10, 2
      // Predicated region
      $region45: #{critic_forward.5} parent=43 // pred_check
        %p871 = pneg %p128
      $region46: #{critic_forward.5} parent=43 // pred_check_branch
        %873 = sbr.rel (%p871) target = $region48
      $region47: #{critic_forward.5} parent=43 // pred_region
        %p874 = scmp.lt.s32.totalorder %s16, 1
        %s875 = scalar_select %p874, %s16, 1
        %s876 = smul.addr %s875, 32
        %s877 = smul.addr %s876, 8
        %s878 = scalar_lea.vmem %s4, %s877
      $region48: #{critic_forward.5} parent=43 // pred_fallthru
        _
    $region44: #{critic_forward.5} parent=5 // pred_fallthru
      _
  $region6: #{critic_forward.5} parent=0 // loop_footer
    %s14 = sadd.s32 1, %s10
  $region7: #{critic_forward.5} parent=0 // loop_footer_branch
    %9 = sbr.rel target = $region3
  $region8: #{critic_forward.5} parent=0 // loop_exit
    _

// kernel: critic_forward.6
$region0: #{critic_forward.6}
  #allocation0 [shape = 'u32[]', space=smem, size = 0x4, offset = 0x4, fixed_abs, tag = 'smem constant byte address 0x4 - core index']
  #allocation1 [shape = 'u32[144,128]{1,0:T(1,128)}', space=vmem, size = 0x12000, scoped, tag = 'internal scratch']
  %s0 = inlined_call_operand.vmem [shape: f32[2,64,256], index: 0, kind: input, shape index: {}]
  %s1 = inlined_call_operand.vmem [shape: f32[256,32], index: 1, kind: input, shape index: {}]
  %s2 = inlined_call_operand.vmem [shape: f32[1,32], index: 2, kind: input, shape index: {}]
  %s3 = inlined_call_operand.vmem [shape: f32[1,32], index: 3, kind: input, shape index: {}]
  %s4 = inlined_call_operand.vmem [shape: f32[2,64,32], index: 4, kind: output, shape index: {}]
  %s5 = sld [smem:[#allocation0]]
  $region49: #{critic_forward.6} parent=0
    _
  %s7 = ssub.s32 1, %s5
  %s8 = scalar_select 0, %s7, %s5
  loop: start=0, step=1, limit=4
  $region2: #{critic_forward.6} parent=0 // loop_pre_header
    _
  $region3: #{critic_forward.6} parent=0 // loop_header
    %s10 = sphi 0, %s14
    %p11 = scmp.ge.s32.totalorder %s10, 4
    %s20 = sphi 0, %s22
    %s23 = sphi 0, %s20
    %s24 = sphi 0, %s23
    %s40 = sphi 0, %s24
    %s44 = sphi 0, %s44
    %s46 = sphi 0, %s44
    %s47 = sphi 0, %s46
    %s61 = sphi 0, %s47
    %s65 = sphi 0, %s65
    %s67 = sphi 0, %s65
    %s68 = sphi 0, %s67
    %s82 = sphi 0, %s68
    %s86 = sphi 0, %s86
    %s88 = sphi 0, %s86
    %s89 = sphi 0, %s88
    %s103 = sphi 0, %s89
    %s109 = sphi 0, %s111
    %s112 = sphi 0, %s109
    %s113 = sphi 0, %s112
    %s129 = sphi 0, %s113
  $region4: #{critic_forward.6} parent=0 // loop_header_branch
    %13 = sbr.rel (%p11) target = $region8
  $region5: #{critic_forward.6} parent=0 // loop_body
    %s15 = ssub.s32 %s10, 1
    %s16 = ssub.s32 %s10, 2
    %s17 = sadd.s32 %s10, 1
    %s18 = ssub.s32 %s10, %s17
    %p19 = scmp.eq.s32.totalorder %s18, 0
    %s21 = sadd.s32 %s20, 1
    %s22 = scalar_select %p19, %s20, %s21
    %p25 = pneg %p19
    %p26 = scmp.eq.s32.totalorder %s10, 1
    %p27 = por %p25, %p26
    %p28 = scmp.ne.s32.totalorder %s20, %s23
    %p29 = scmp.eq.s32.totalorder %s10, 0
    %p30 = por %p28, %p29
    %p31 = scmp.ne.s32.totalorder %s20, %s23
    %p32 = scmp.eq.s32.totalorder %s15, 1
    %p33 = por %p31, %p32
    %p34 = scmp.ne.s32.totalorder %s23, %s24
    %p35 = scmp.eq.s32.totalorder %s15, 0
    %p36 = por %p34, %p35
    %p37 = scmp.ne.s32.totalorder %s23, %s24
    %p38 = scmp.eq.s32.totalorder %s16, 1
    %p39 = por %p37, %p38
    %p41 = scmp.ne.s32.totalorder %s24, %s40
    %p42 = scmp.eq.s32.totalorder %s16, 0
    %p43 = por %p41, %p42
    %s45 = sadd.s32 %s44, 1
    %p48 = scmp.eq.s32.totalorder %s10, 1
    %p49 = scmp.ne.s32.totalorder %s44, %s46
    %p50 = scmp.eq.s32.totalorder %s10, 0
    %p51 = por %p49, %p50
    %p52 = scmp.ne.s32.totalorder %s44, %s46
    %p53 = scmp.eq.s32.totalorder %s15, 1
    %p54 = por %p52, %p53
    %p55 = scmp.ne.s32.totalorder %s46, %s47
    %p56 = scmp.eq.s32.totalorder %s15, 0
    %p57 = por %p55, %p56
    %p58 = scmp.ne.s32.totalorder %s46, %s47
    %p59 = scmp.eq.s32.totalorder %s16, 1
    %p60 = por %p58, %p59
    %p62 = scmp.ne.s32.totalorder %s47, %s61
    %p63 = scmp.eq.s32.totalorder %s16, 0
    %p64 = por %p62, %p63
    %s66 = sadd.s32 %s65, 1
    %p69 = scmp.eq.s32.totalorder %s10, 1
    %p70 = scmp.ne.s32.totalorder %s65, %s67
    %p71 = scmp.eq.s32.totalorder %s10, 0
    %p72 = por %p70, %p71
    %p73 = scmp.ne.s32.totalorder %s65, %s67
    %p74 = scmp.eq.s32.totalorder %s15, 1
    %p75 = por %p73, %p74
    %p76 = scmp.ne.s32.totalorder %s67, %s68
    %p77 = scmp.eq.s32.totalorder %s15, 0
    %p78 = por %p76, %p77
    %p79 = scmp.ne.s32.totalorder %s67, %s68
    %p80 = scmp.eq.s32.totalorder %s16, 1
    %p81 = por %p79, %p80
    %p83 = scmp.ne.s32.totalorder %s68, %s82
    %p84 = scmp.eq.s32.totalorder %s16, 0
    %p85 = por %p83, %p84
    %s87 = sadd.s32 %s86, 1
    %p90 = scmp.eq.s32.totalorder %s10, 1
    %p91 = scmp.ne.s32.totalorder %s86, %s88
    %p92 = scmp.eq.s32.totalorder %s10, 0
    %p93 = por %p91, %p92
    %p94 = scmp.ne.s32.totalorder %s86, %s88
    %p95 = scmp.eq.s32.totalorder %s15, 1
    %p96 = por %p94, %p95
    %p97 = scmp.ne.s32.totalorder %s88, %s89
    %p98 = scmp.eq.s32.totalorder %s15, 0
    %p99 = por %p97, %p98
    %p100 = scmp.ne.s32.totalorder %s88, %s89
    %p101 = scmp.eq.s32.totalorder %s16, 1
    %p102 = por %p100, %p101
    %p104 = scmp.ne.s32.totalorder %s89, %s103
    %p105 = scmp.eq.s32.totalorder %s16, 0
    %p106 = por %p104, %p105
    %s107 = ssub.s32 %s10, %s17
    %p108 = scmp.eq.s32.totalorder %s107, 0
    %s110 = sadd.s32 %s109, 1
    %s111 = scalar_select %p108, %s109, %s110
    %p114 = pneg %p108
    %p115 = scmp.eq.s32.totalorder %s10, 1
    %p116 = por %p114, %p115
    %p117 = scmp.ne.s32.totalorder %s109, %s112
    %p118 = scmp.eq.s32.totalorder %s10, 0
    %p119 = por %p117, %p118
    %p120 = scmp.ne.s32.totalorder %s109, %s112
    %p121 = scmp.eq.s32.totalorder %s15, 1
    %p122 = por %p120, %p121
    %p123 = scmp.ne.s32.totalorder %s112, %s113
    %p124 = scmp.eq.s32.totalorder %s15, 0
    %p125 = por %p123, %p124
    %p126 = scmp.ne.s32.totalorder %s112, %s113
    %p127 = scmp.eq.s32.totalorder %s16, 1
    %p128 = por %p126, %p127
    %p130 = scmp.ne.s32.totalorder %s113, %s129
    %p131 = scmp.eq.s32.totalorder %s16, 0
    %p132 = por %p130, %p131
    %p133 = scmp.le.s32.totalorder 1, %s10
    %p134 = scmp.lt.s32.totalorder %s10, 3
    %p135 = pnand %p133, %p134
    %p136 = pneg %p135
    // Predicated region
    $region9: #{critic_forward.6} parent=5 // pred_check
      _
    $region10: #{critic_forward.6} parent=5 // pred_check_branch
      %138 = sbr.rel (%p135) target = $region12
    $region11: #{critic_forward.6} parent=5 // pred_region
      %s139 = ssub.s32 %s10, 1
      // Predicated region
      $region13: #{critic_forward.6} parent=11 // pred_check
        %p140 = pneg %p57
      $region14: #{critic_forward.6} parent=11 // pred_check_branch
        %142 = sbr.rel (%p140) target = $region16
      $region15: #{critic_forward.6} parent=11 // pred_region
        _
      $region16: #{critic_forward.6} parent=11 // pred_fallthru
        _
      // Predicated region
      $region17: #{critic_forward.6} parent=11 // pred_check
        %p143 = pneg %p78
      $region18: #{critic_forward.6} parent=11 // pred_check_branch
        %145 = sbr.rel (%p143) target = $region20
      $region19: #{critic_forward.6} parent=11 // pred_region
        _
      $region20: #{critic_forward.6} parent=11 // pred_fallthru
        _
      // Predicated region
      $region21: #{critic_forward.6} parent=11 // pred_check
        %p146 = pneg %p99
      $region22: #{critic_forward.6} parent=11 // pred_check_branch
        %148 = sbr.rel (%p146) target = $region24
      $region23: #{critic_forward.6} parent=11 // pred_region
        _
      $region24: #{critic_forward.6} parent=11 // pred_fallthru
        _
    $region12: #{critic_forward.6} parent=5 // pred_fallthru
      _
    %p149 = scmp.lt.s32.totalorder %s10, 2
    // Predicated region
    $region25: #{critic_forward.6} parent=5 // pred_check
      %p150 = pneg %p149
    $region26: #{critic_forward.6} parent=5 // pred_check_branch
      %152 = sbr.rel (%p150) target = $region28
    $region27: #{critic_forward.6} parent=5 // pred_region
      // Predicated region
      $region29: #{critic_forward.6} parent=27 // pred_check
        %p153 = pneg %p30
      $region30: #{critic_forward.6} parent=27 // pred_check_branch
        %155 = sbr.rel (%p153) target = $region32
      $region31: #{critic_forward.6} parent=27 // pred_region
        %p156 = scmp.lt.s32.totalorder %s10, 1
        %s157 = scalar_select %p156, %s10, 1
        %s158 = smul.addr %s157, 16
        %s159 = smul.addr %s158, 8
        %s160 = scalar_lea.vmem %s0, %s159
      $region32: #{critic_forward.6} parent=27 // pred_fallthru
        _
    $region28: #{critic_forward.6} parent=5 // pred_fallthru
      _
    %p161 = scmp.le.s32.totalorder 1, %s10
    %p162 = scmp.lt.s32.totalorder %s10, 3
    %p163 = pnand %p161, %p162
    %p164 = pneg %p163
    // Predicated region
    $region33: #{critic_forward.6} parent=5 // pred_check
      _
    $region34: #{critic_forward.6} parent=5 // pred_check_branch
      %166 = sbr.rel (%p163) target = $region36
    $region35: #{critic_forward.6} parent=5 // pred_region
      %s167 = ssub.s32 %s10, 1
      %p168 = scmp.lt.s32.totalorder %s15, 1
      %s169 = scalar_select %p168, %s15, 1
      %s170 = smul.addr %s169, 16
      %s171 = smul.addr %s170, 8
      %s172 = scalar_lea.vmem %s0, %s171
      %p173 = pneg %p36
      %p174 = pneg %p33
      %p175 = pneg %p57
      %p176 = pneg %p54
      %p177 = pneg %p78
      %p178 = pneg %p75
      %p179 = pneg %p99
      %p180 = pneg %p96
      %p181 = pneg %p125
      %p182 = pneg %p122
      %p183 = scmp.lt.s32.totalorder %s15, 1
      %s184 = scalar_select %p183, %s15, 1
      %s185 = smul.addr %s184, 8
      %s186 = smul.addr %s185, 8
      %s187 = scalar_lea.vmem %s4, %s186
      %p188 = scmp.lt.s32.totalorder %s15, 1
      %s189 = scalar_select %p188, %s15, 1
      %s190 = smul.addr %s189, 16
      %s191 = smul.addr %s190, 8
      %s192 = scalar_lea.vmem %s0, %s191
      %p193 = scmp.lt.s32.totalorder %s15, 1
      %s194 = scalar_select %p193, %s15, 1
      %s195 = smul.addr %s194, 8
      %s196 = smul.addr %s195, 8
      %s197 = scalar_lea.vmem %s4, %s196
      %v198 = vld [vmem:[%s192] sm:$0xff]
      %v199 = vld [vmem:[%s192 + $0x8] sm:$0xff]
      %v200 = vld [vmem:[%s192 + $0x10] sm:$0xff]
      %v201 = vld [vmem:[%s192 + $0x18] sm:$0xff]
      %v202 = vld [vmem:[%s192 + $0x20] sm:$0xff]
      %v203 = vld [vmem:[%s192 + $0x28] sm:$0xff]
      %v204 = vld [vmem:[%s192 + $0x30] sm:$0xff]
      %v205 = vld [vmem:[%s192 + $0x38] sm:$0xff]
      %v206 = vld [vmem:[%s192 + $0x40] sm:$0xff]
      %v207 = vld [vmem:[%s192 + $0x48] sm:$0xff]
      %v208 = vld [vmem:[%s192 + $0x50] sm:$0xff]
      %v209 = vld [vmem:[%s192 + $0x58] sm:$0xff]
      %v210 = vld [vmem:[%s192 + $0x60] sm:$0xff]
      %v211 = vld [vmem:[%s192 + $0x68] sm:$0xff]
      %v212 = vld [vmem:[%s192 + $0x70] sm:$0xff]
      %v213 = vld [vmem:[%s192 + $0x78] sm:$0xff]
      %v214 = vld [vmem:[%s1] sm:$0xff]
      %v215 = vld [vmem:[%s1 + $0x8] sm:$0xff]
      %v216 = vld [vmem:[%s1 + $0x10] sm:$0xff]
      %v217 = vld [vmem:[%s1 + $0x18] sm:$0xff]
      %v218 = vld [vmem:[%s1 + $0x20] sm:$0xff]
      %v219 = vld [vmem:[%s1 + $0x28] sm:$0xff]
      %v220 = vld [vmem:[%s1 + $0x30] sm:$0xff]
      %v221 = vld [vmem:[%s1 + $0x38] sm:$0xff]
      %v222 = vld [vmem:[%s1 + $0x40] sm:$0xff]
      %v223 = vld [vmem:[%s1 + $0x48] sm:$0xff]
      %v224 = vld [vmem:[%s1 + $0x50] sm:$0xff]
      %v225 = vld [vmem:[%s1 + $0x58] sm:$0xff]
      %v226 = vld [vmem:[%s1 + $0x60] sm:$0xff]
      %v227 = vld [vmem:[%s1 + $0x68] sm:$0xff]
      %v228 = vld [vmem:[%s1 + $0x70] sm:$0xff]
      %v229 = vld [vmem:[%s1 + $0x78] sm:$0xff]
      %v230 = vld [vmem:[%s1 + $0x80] sm:$0xff]
      %v231 = vld [vmem:[%s1 + $0x88] sm:$0xff]
      %v232 = vld [vmem:[%s1 + $0x90] sm:$0xff]
      %v233 = vld [vmem:[%s1 + $0x98] sm:$0xff]
      %v234 = vld [vmem:[%s1 + $0xa0] sm:$0xff]
      %v235 = vld [vmem:[%s1 + $0xa8] sm:$0xff]
      %v236 = vld [vmem:[%s1 + $0xb0] sm:$0xff]
      %v237 = vld [vmem:[%s1 + $0xb8] sm:$0xff]
      %v238 = vld [vmem:[%s1 + $0xc0] sm:$0xff]
      %v239 = vld [vmem:[%s1 + $0xc8] sm:$0xff]
      %v240 = vld [vmem:[%s1 + $0xd0] sm:$0xff]
      %v241 = vld [vmem:[%s1 + $0xd8] sm:$0xff]
      %v242 = vld [vmem:[%s1 + $0xe0] sm:$0xff]
      %v243 = vld [vmem:[%s1 + $0xe8] sm:$0xff]
      %v244 = vld [vmem:[%s1 + $0xf0] sm:$0xff]
      %v245 = vld [vmem:[%s1 + $0xf8] sm:$0xff]
      %v246 = vld [vmem:[%s2] sm:$0x1]
      %v247 = vld [vmem:[%s3] sm:$0x1]
      %248 = vmatprep.subr.mxu0 0.0
      %249 = vmatpush1.msra.mxu0 %v214
      %250 = vmatprep.subr.mxu0 0.0
      %251 = vmatpush1.msra.mxu0 %v215
      %252 = vmatprep.subr.mxu0 0.0
      %253 = vmatpush1.msra.mxu0 %v216
      %254 = vmatprep.subr.mxu0 0.0
      %255 = vmatpush1.msra.mxu0 %v217
      %256 = vmatprep.subr.mxu0 0.0
      %257 = vmatpush1.msra.mxu0 %v218
      %258 = vmatprep.subr.mxu0 0.0
      %259 = vmatpush1.msra.mxu0 %v219
      %260 = vmatprep.subr.mxu0 0.0
      %261 = vmatpush1.msra.mxu0 %v220
      %262 = vmatprep.subr.mxu0 0.0
      %263 = vmatpush1.msra.mxu0 %v221
      %264 = vmatprep.subr.mxu0 0.0
      %265 = vmatpush1.msra.mxu0 %v222
      %266 = vmatprep.subr.mxu0 0.0
      %267 = vmatpush1.msra.mxu0 %v223
      %268 = vmatprep.subr.mxu0 0.0
      %269 = vmatpush1.msra.mxu0 %v224
      %270 = vmatprep.subr.mxu0 0.0
      %271 = vmatpush1.msra.mxu0 %v225
      %272 = vmatprep.subr.mxu0 0.0
      %273 = vmatpush1.msra.mxu0 %v226
      %274 = vmatprep.subr.mxu0 0.0
      %275 = vmatpush1.msra.mxu0 %v227
      %276 = vmatprep.subr.mxu0 0.0
      %277 = vmatpush1.msra.mxu0 %v228
      %278 = vmatprep.subr.mxu0 0.0
      %279 = vmatpush1.msra.mxu0 %v229
      %280 = vmatprep.subr.mxu0 0.0
      %281 = vmatpush1.msra.mxu0 %v230
      %282 = vmatprep.subr.mxu0 0.0
      %283 = vmatpush1.msra.mxu0 %v231
      %284 = vmatprep.subr.mxu0 0.0
      %285 = vmatpush1.msra.mxu0 %v232
      %286 = vmatprep.subr.mxu0 0.0
      %287 = vmatpush1.msra.mxu0 %v233
      %288 = vmatprep.subr.mxu0 0.0
      %289 = vmatpush1.msra.mxu0 %v234
      %290 = vmatprep.subr.mxu0 0.0
      %291 = vmatpush1.msra.mxu0 %v235
      %292 = vmatprep.subr.mxu0 0.0
      %293 = vmatpush1.msra.mxu0 %v236
      %294 = vmatprep.subr.mxu0 0.0
      %295 = vmatpush1.msra.mxu0 %v237
      %296 = vmatprep.subr.mxu0 0.0
      %297 = vmatpush1.msra.mxu0 %v238
      %298 = vmatprep.subr.mxu0 0.0
      %299 = vmatpush1.msra.mxu0 %v239
      %300 = vmatprep.subr.mxu0 0.0
      %301 = vmatpush1.msra.mxu0 %v240
      %302 = vmatprep.subr.mxu0 0.0
      %303 = vmatpush1.msra.mxu0 %v241
      %304 = vmatprep.subr.mxu0 0.0
      %305 = vmatpush1.msra.mxu0 %v242
      %306 = vmatprep.subr.mxu0 0.0
      %307 = vmatpush1.msra.mxu0 %v243
      %308 = vmatprep.subr.mxu0 0.0
      %309 = vmatpush1.msra.mxu0 %v244
      %310 = vmatprep.subr.mxu0 0.0
      %311 = vmatpush1.msra.mxu0 %v245
      %312 = vmatprep.mubr.f32.mxu0 %v199
      %313 = vmatmul.mubr.f32.gmra.mrb[0].mxu0 %v198
      %v314 = vpop.f32.mrb[0].mxu0
      %v315 = vadd.f32 0.0, %v314
      %v316 = vpop.f32.mrb[0].mxu0
      %317 = vmatprep.mubr.f32.mxu0 %v201
      %318 = vmatmul.mubr.f32.gmra.mrb[0].mxu0 %v200
      %v319 = vpop.f32.mrb[0].mxu0
      %v320 = vadd.f32 0.0, %v319
      %v321 = vpop.f32.mrb[0].mxu0
      %322 = vmatprep.mubr.f32.mxu0 %v203
      %323 = vmatmul.mubr.f32.gmra.mrb[0].mxu0 %v202
      %v324 = vpop.f32.mrb[0].mxu0
      %v325 = vadd.f32 0.0, %v324
      %v326 = vpop.f32.mrb[0].mxu0
      %327 = vmatprep.mubr.f32.mxu0 %v205
      %328 = vmatmul.mubr.f32.gmra.mrb[0].mxu0 %v204
      %v329 = vpop.f32.mrb[0].mxu0
      %v330 = vadd.f32 0.0, %v329
      %v331 = vpop.f32.mrb[0].mxu0
      %332 = vmatprep.mubr.f32.mxu0 %v207
      %333 = vmatmul.mubr.f32.gmra.mrb[0].mxu0 %v206
      %v334 = vpop.f32.mrb[0].mxu0
      %v335 = vadd.f32 0.0, %v334
      %v336 = vpop.f32.mrb[0].mxu0
      %337 = vmatprep.mubr.f32.mxu0 %v209
      %338 = vmatmul.mubr.f32.gmra.mrb[0].mxu0 %v208
      %v339 = vpop.f32.mrb[0].mxu0
      %v340 = vadd.f32 0.0, %v339
      %v341 = vpop.f32.mrb[0].mxu0
      %342 = vmatprep.mubr.f32.mxu0 %v211
      %343 = vmatmul.mubr.f32.gmra.mrb[0].mxu0 %v210
      %v344 = vpop.f32.mrb[0].mxu0
      %v345 = vadd.f32 0.0, %v344
      %v346 = vpop.f32.mrb[0].mxu0
      %347 = vmatprep.mubr.f32.mxu0 %v213
      %348 = vmatmul.mubr.f32.gmra.mrb[0].mxu0 %v212
      %v349 = vpop.f32.mrb[0].mxu0
      %v350 = vadd.f32 0.0, %v349
      %v351 = vpop.f32.mrb[0].mxu0
      %352 = vdwg.mxu0
      %vm353 = vcmask 261120
      %v354 = vsel %vm353, %v315, 0.0
      %v355 = vsel %vm353, %v320, 0.0
      %v356 = vadd.f32 %v354, %v355
      %v357 = vsel %vm353, %v325, 0.0
      %v358 = vadd.f32 %v356, %v357
      %v359 = vsel %vm353, %v330, 0.0
      %v360 = vadd.f32 %v358, %v359
      %v361 = vsel %vm353, %v335, 0.0
      %v362 = vadd.f32 %v360, %v361
      %v363 = vsel %vm353, %v340, 0.0
      %v364 = vadd.f32 %v362, %v363
      %v365 = vsel %vm353, %v345, 0.0
      %v366 = vadd.f32 %v364, %v365
      %v367 = vsel %vm353, %v350, 0.0
      %v368 = vadd.f32 %v366, %v367
      %v369 = vrot.slane %v368, 4
      %v370 = vadd.f32 %v368, %v369
      %v371 = vrot.slane %v370, 2
      %v372 = vadd.f32 %v370, %v371
      %v373 = vrot.slane %v372, 1
      %v374 = vadd.f32 %v372, %v373
      %v375 = vmul.f32 %v315, %v315
      %v376 = vmul.f32 %v320, %v320
      %v377 = vmul.f32 %v325, %v325
      %v378 = vmul.f32 %v330, %v330
      %v379 = vmul.f32 %v335, %v335
      %v380 = vmul.f32 %v340, %v340
      %v381 = vmul.f32 %v345, %v345
      %v382 = vmul.f32 %v350, %v350
      %v383 = vsel %vm353, %v375, 0.0
      %v384 = vsel %vm353, %v376, 0.0
      %v385 = vadd.f32 %v383, %v384
      %v386 = vsel %vm353, %v377, 0.0
      %v387 = vadd.f32 %v385, %v386
      %v388 = vsel %vm353, %v378, 0.0
      %v389 = vadd.f32 %v387, %v388
      %v390 = vsel %vm353, %v379, 0.0
      %v391 = vadd.f32 %v389, %v390
      %v392 = vsel %vm353, %v380, 0.0
      %v393 = vadd.f32 %v391, %v392
      %v394 = vsel %vm353, %v381, 0.0
      %v395 = vadd.f32 %v393, %v394
      %v396 = vsel %vm353, %v382, 0.0
      %v397 = vadd.f32 %v395, %v396
      %v398 = vrot.slane %v397, 4
      %v399 = vadd.f32 %v397, %v398
      %v400 = vrot.slane %v399, 2
      %v401 = vadd.f32 %v399, %v400
      %v402 = vrot.slane %v401, 1
      %v403 = vadd.f32 %v401, %v402
      %v404 = vmul.f32 %v374, 0.015625
      %v405 = vmul.f32 %v403, 0.015625
      %v406 = vmul.f32 %v404, %v404
      %v407 = vsub.f32 %v405, %v406
      %v408 = vmax.f32 %v407, 0.0
      %v409 = vadd.f32 %v408, 1e-05
      %v410 = vrsqrt.pop %v409
      %v411 = vmul.f32 %v246, %v410
      %v412 = vmul.f32 %v404, %v411
      %v413 = vsub.f32 %v247, %v412
      %v415 = vlaneseq
      %v416 = vshrl.u32 %v415, 7
      %v417 = vsub.s32 0, %v416
      %v418 = vrot.slane %v411, %v417
      %v420 = vmul.f32 %v315, %v418
      %v421 = vmul.f32 %v320, %v418
      %v422 = vmul.f32 %v325, %v418
      %v423 = vmul.f32 %v330, %v418
      %v424 = vmul.f32 %v335, %v418
      %v425 = vmul.f32 %v340, %v418
      %v426 = vmul.f32 %v345, %v418
      %v427 = vmul.f32 %v350, %v418
      %v429 = vlaneseq
      %v430 = vshrl.u32 %v429, 7
      %v431 = vsub.s32 0, %v430
      %v432 = vrot.slane %v413, %v431
      %v434 = vadd.f32 %v420, %v432
      %v435 = vadd.f32 %v421, %v432
      %v436 = vadd.f32 %v422, %v432
      %v437 = vadd.f32 %v423, %v432
      %v438 = vadd.f32 %v424, %v432
      %v439 = vadd.f32 %v425, %v432
      %v440 = vadd.f32 %v426, %v432
      %v441 = vadd.f32 %v427, %v432
      %vm442 = vcmp.gt.f32.partialorder %v434, 0.0
      %vm443 = vcmp.gt.f32.partialorder %v435, 0.0
      %vm444 = vcmp.gt.f32.partialorder %v436, 0.0
      %vm445 = vcmp.gt.f32.partialorder %v437, 0.0
      %vm446 = vcmp.gt.f32.partialorder %v438, 0.0
      %vm447 = vcmp.gt.f32.partialorder %v439, 0.0
      %vm448 = vcmp.gt.f32.partialorder %v440, 0.0
      %vm449 = vcmp.gt.f32.partialorder %v441, 0.0
      %v450 = vmul.f32 %v434, 0.2
      %v451 = vmul.f32 %v435, 0.2
      %v452 = vmul.f32 %v436, 0.2
      %v453 = vmul.f32 %v437, 0.2
      %v454 = vmul.f32 %v438, 0.2
      %v455 = vmul.f32 %v439, 0.2
      %v456 = vmul.f32 %v440, 0.2
      %v457 = vmul.f32 %v441, 0.2
      %v458 = vsel %vm442, %v434, %v450
      %v459 = vsel %vm443, %v435, %v451
      %v460 = vsel %vm444, %v436, %v452
      %v461 = vsel %vm445, %v437, %v453
      %v462 = vsel %vm446, %v438, %v454
      %v463 = vsel %vm447, %v439, %v455
      %v464 = vsel %vm448, %v440, %v456
      %v465 = vsel %vm449, %v441, %v457
      %466 = vst.msk [vmem:[%s197] sm:$0xff] %vm353, %v458
      %467 = vst.msk [vmem:[%s197 + $0x8] sm:$0xff] %vm353, %v459
      %468 = vst.msk [vmem:[%s197 + $0x10] sm:$0xff] %vm353, %v460
      %469 = vst.msk [vmem:[%s197 + $0x18] sm:$0xff] %vm353, %v461
      %470 = vst.msk [vmem:[%s197 + $0x20] sm:$0xff] %vm353, %v462
      %471 = vst.msk [vmem:[%s197 + $0x28] sm:$0xff] %vm353, %v463
      %472 = vst.msk [vmem:[%s197 + $0x30] sm:$0xff] %vm353, %v464
      %473 = vst.msk [vmem:[%s197 + $0x38] sm:$0xff] %vm353, %v465
      %p474 = scmp.lt.s32.totalorder %s15, 1
      %s475 = scalar_select %p474, %s15, 1
      %s476 = smul.addr %s475, 8
      %s477 = smul.addr %s476, 8
      %s478 = scalar_lea.vmem %s4, %s477
      // Predicated region
      $region37: #{critic_forward.6} parent=35 // pred_check
        %p479 = pneg %p122
      $region38: #{critic_forward.6} parent=35 // pred_check_branch
        %481 = sbr.rel (%p479) target = $region40
      $region39: #{critic_forward.6} parent=35 // pred_region
        _
      $region40: #{critic_forward.6} parent=35 // pred_fallthru
        _
    $region36: #{critic_forward.6} parent=5 // pred_fallthru
      _
    %p482 = scmp.le.s32.totalorder 2, %s10
    // Predicated region
    $region41: #{critic_forward.6} parent=5 // pred_check
      %p483 = pneg %p482
    $region42: #{critic_forward.6} parent=5 // pred_check_branch
      %485 = sbr.rel (%p483) target = $region44
    $region43: #{critic_forward.6} parent=5 // pred_region
      %s486 = ssub.s32 %s10, 2
      // Predicated region
      $region45: #{critic_forward.6} parent=43 // pred_check
        %p487 = pneg %p128
      $region46: #{critic_forward.6} parent=43 // pred_check_branch
        %489 = sbr.rel (%p487) target = $region48
      $region47: #{critic_forward.6} parent=43 // pred_region
        %p490 = scmp.lt.s32.totalorder %s16, 1
        %s491 = scalar_select %p490, %s16, 1
        %s492 = smul.addr %s491, 8
        %s493 = smul.addr %s492, 8
        %s494 = scalar_lea.vmem %s4, %s493
      $region48: #{critic_forward.6} parent=43 // pred_fallthru
        _
    $region44: #{critic_forward.6} parent=5 // pred_fallthru
      _
  $region6: #{critic_forward.6} parent=0 // loop_footer
    %s14 = sadd.s32 1, %s10
  $region7: #{critic_forward.6} parent=0 // loop_footer_branch
    %9 = sbr.rel target = $region3
  $region8: #{critic_forward.6} parent=0 // loop_exit
    _

// kernel: critic_forward.7
$region0: #{critic_forward.7}
  #allocation0 [shape = 'u32[]', space=smem, size = 0x4, offset = 0x4, fixed_abs, tag = 'smem constant byte address 0x4 - core index']
  #allocation1 [shape = 'u32[144,128]{1,0:T(1,128)}', space=vmem, size = 0x12000, scoped, tag = 'internal scratch']
  #allocation2 [shape = 'f32[1,1]{1,0:T(1,128)S(1)}', space=vmem, size = 0x200, scoped, tag = 'scoped memory for critic_forward.7']
  %s0 = inlined_call_operand.vmem [shape: f32[2,16,512], index: 0, kind: input, shape index: {}]
  %s1 = inlined_call_operand.vmem [shape: f32[512,64], index: 1, kind: input, shape index: {}]
  %s2 = inlined_call_operand.vmem [shape: f32[1,64], index: 2, kind: input, shape index: {}]
  %s3 = inlined_call_operand.vmem [shape: f32[1,64], index: 3, kind: input, shape index: {}]
  %s4 = inlined_call_operand.vmem [shape: f32[16,64], index: 4, kind: input, shape index: {}]
  %s5 = inlined_call_operand.<no memory space> [shape: f32[1,1], index: 5, kind: input, shape index: {}]
  %s6 = inlined_call_operand.vmem [shape: f32[2,1,1], index: 6, kind: output, shape index: {}]
  %s7 = sld [smem:[#allocation0]]
  $region57: #{critic_forward.7} parent=0
    _
  %s9 = ssub.s32 1, %s7
  %s10 = scalar_select 0, %s9, %s7
  %v11 = vstv %s5
  %12 = vst [vmem:[#allocation2] sm:$0x1] %v11
  loop: start=0, step=1, limit=4
  $region2: #{critic_forward.7} parent=0 // loop_pre_header
    _
  $region3: #{critic_forward.7} parent=0 // loop_header
    %s14 = sphi 0, %s18
    %p15 = scmp.ge.s32.totalorder %s14, 4
    %s24 = sphi 0, %s26
    %s27 = sphi 0, %s24
    %s28 = sphi 0, %s27
    %s44 = sphi 0, %s28
    %s48 = sphi 0, %s48
    %s50 = sphi 0, %s48
    %s51 = sphi 0, %s50
    %s65 = sphi 0, %s51
    %s69 = sphi 0, %s69
    %s71 = sphi 0, %s69
    %s72 = sphi 0, %s71
    %s86 = sphi 0, %s72
    %s90 = sphi 0, %s90
    %s92 = sphi 0, %s90
    %s93 = sphi 0, %s92
    %s107 = sphi 0, %s93
    %s111 = sphi 0, %s111
    %s113 = sphi 0, %s111
    %s114 = sphi 0, %s113
    %s128 = sphi 0, %s114
    %s132 = sphi 0, %s132
    %s134 = sphi 0, %s132
    %s135 = sphi 0, %s134
    %s149 = sphi 0, %s135
    %s155 = sphi 0, %s157
    %s158 = sphi 0, %s155
    %s159 = sphi 0, %s158
    %s175 = sphi 0, %s159
  $region4: #{critic_forward.7} parent=0 // loop_header_branch
    %17 = sbr.rel (%p15) target = $region8
  $region5: #{critic_forward.7} parent=0 // loop_body
    %s19 = ssub.s32 %s14, 1
    %s20 = ssub.s32 %s14, 2
    %s21 = sadd.s32 %s14, 1
    %s22 = ssub.s32 %s14, %s21
    %p23 = scmp.eq.s32.totalorder %s22, 0
    %s25 = sadd.s32 %s24, 1
    %s26 = scalar_select %p23, %s24, %s25
    %p29 = pneg %p23
    %p30 = scmp.eq.s32.totalorder %s14, 1
    %p31 = por %p29, %p30
    %p32 = scmp.ne.s32.totalorder %s24, %s27
    %p33 = scmp.eq.s32.totalorder %s14, 0
    %p34 = por %p32, %p33
    %p35 = scmp.ne.s32.totalorder %s24, %s27
    %p36 = scmp.eq.s32.totalorder %s19, 1
    %p37 = por %p35, %p36
    %p38 = scmp.ne.s32.totalorder %s27, %s28
    %p39 = scmp.eq.s32.totalorder %s19, 0
    %p40 = por %p38, %p39
    %p41 = scmp.ne.s32.totalorder %s27, %s28
    %p42 = scmp.eq.s32.totalorder %s20, 1
    %p43 = por %p41, %p42
    %p45 = scmp.ne.s32.totalorder %s28, %s44
    %p46 = scmp.eq.s32.totalorder %s20, 0
    %p47 = por %p45, %p46
    %s49 = sadd.s32 %s48, 1
    %p52 = scmp.eq.s32.totalorder %s14, 1
    %p53 = scmp.ne.s32.totalorder %s48, %s50
    %p54 = scmp.eq.s32.totalorder %s14, 0
    %p55 = por %p53, %p54
    %p56 = scmp.ne.s32.totalorder %s48, %s50
    %p57 = scmp.eq.s32.totalorder %s19, 1
    %p58 = por %p56, %p57
    %p59 = scmp.ne.s32.totalorder %s50, %s51
    %p60 = scmp.eq.s32.totalorder %s19, 0
    %p61 = por %p59, %p60
    %p62 = scmp.ne.s32.totalorder %s50, %s51
    %p63 = scmp.eq.s32.totalorder %s20, 1
    %p64 = por %p62, %p63
    %p66 = scmp.ne.s32.totalorder %s51, %s65
    %p67 = scmp.eq.s32.totalorder %s20, 0
    %p68 = por %p66, %p67
    %s70 = sadd.s32 %s69, 1
    %p73 = scmp.eq.s32.totalorder %s14, 1
    %p74 = scmp.ne.s32.totalorder %s69, %s71
    %p75 = scmp.eq.s32.totalorder %s14, 0
    %p76 = por %p74, %p75
    %p77 = scmp.ne.s32.totalorder %s69, %s71
    %p78 = scmp.eq.s32.totalorder %s19, 1
    %p79 = por %p77, %p78
    %p80 = scmp.ne.s32.totalorder %s71, %s72
    %p81 = scmp.eq.s32.totalorder %s19, 0
    %p82 = por %p80, %p81
    %p83 = scmp.ne.s32.totalorder %s71, %s72
    %p84 = scmp.eq.s32.totalorder %s20, 1
    %p85 = por %p83, %p84
    %p87 = scmp.ne.s32.totalorder %s72, %s86
    %p88 = scmp.eq.s32.totalorder %s20, 0
    %p89 = por %p87, %p88
    %s91 = sadd.s32 %s90, 1
    %p94 = scmp.eq.s32.totalorder %s14, 1
    %p95 = scmp.ne.s32.totalorder %s90, %s92
    %p96 = scmp.eq.s32.totalorder %s14, 0
    %p97 = por %p95, %p96
    %p98 = scmp.ne.s32.totalorder %s90, %s92
    %p99 = scmp.eq.s32.totalorder %s19, 1
    %p100 = por %p98, %p99
    %p101 = scmp.ne.s32.totalorder %s92, %s93
    %p102 = scmp.eq.s32.totalorder %s19, 0
    %p103 = por %p101, %p102
    %p104 = scmp.ne.s32.totalorder %s92, %s93
    %p105 = scmp.eq.s32.totalorder %s20, 1
    %p106 = por %p104, %p105
    %p108 = scmp.ne.s32.totalorder %s93, %s107
    %p109 = scmp.eq.s32.totalorder %s20, 0
    %p110 = por %p108, %p109
    %s112 = sadd.s32 %s111, 1
    %p115 = scmp.eq.s32.totalorder %s14, 1
    %p116 = scmp.ne.s32.totalorder %s111, %s113
    %p117 = scmp.eq.s32.totalorder %s14, 0
    %p118 = por %p116, %p117
    %p119 = scmp.ne.s32.totalorder %s111, %s113
    %p120 = scmp.eq.s32.totalorder %s19, 1
    %p121 = por %p119, %p120
    %p122 = scmp.ne.s32.totalorder %s113, %s114
    %p123 = scmp.eq.s32.totalorder %s19, 0
    %p124 = por %p122, %p123
    %p125 = scmp.ne.s32.totalorder %s113, %s114
    %p126 = scmp.eq.s32.totalorder %s20, 1
    %p127 = por %p125, %p126
    %p129 = scmp.ne.s32.totalorder %s114, %s128
    %p130 = scmp.eq.s32.totalorder %s20, 0
    %p131 = por %p129, %p130
    %s133 = sadd.s32 %s132, 1
    %p136 = scmp.eq.s32.totalorder %s14, 1
    %p137 = scmp.ne.s32.totalorder %s132, %s134
    %p138 = scmp.eq.s32.totalorder %s14, 0
    %p139 = por %p137, %p138
    %p140 = scmp.ne.s32.totalorder %s132, %s134
    %p141 = scmp.eq.s32.totalorder %s19, 1
    %p142 = por %p140, %p141
    %p143 = scmp.ne.s32.totalorder %s134, %s135
    %p144 = scmp.eq.s32.totalorder %s19, 0
    %p145 = por %p143, %p144
    %p146 = scmp.ne.s32.totalorder %s134, %s135
    %p147 = scmp.eq.s32.totalorder %s20, 1
    %p148 = por %p146, %p147
    %p150 = scmp.ne.s32.totalorder %s135, %s149
    %p151 = scmp.eq.s32.totalorder %s20, 0
    %p152 = por %p150, %p151
    %s153 = ssub.s32 %s14, %s21
    %p154 = scmp.eq.s32.totalorder %s153, 0
    %s156 = sadd.s32 %s155, 1
    %s157 = scalar_select %p154, %s155, %s156
    %p160 = pneg %p154
    %p161 = scmp.eq.s32.totalorder %s14, 1
    %p162 = por %p160, %p161
    %p163 = scmp.ne.s32.totalorder %s155, %s158
    %p164 = scmp.eq.s32.totalorder %s14, 0
    %p165 = por %p163, %p164
    %p166 = scmp.ne.s32.totalorder %s155, %s158
    %p167 = scmp.eq.s32.totalorder %s19, 1
    %p168 = por %p166, %p167
    %p169 = scmp.ne.s32.totalorder %s158, %s159
    %p170 = scmp.eq.s32.totalorder %s19, 0
    %p171 = por %p169, %p170
    %p172 = scmp.ne.s32.totalorder %s158, %s159
    %p173 = scmp.eq.s32.totalorder %s20, 1
    %p174 = por %p172, %p173
    %p176 = scmp.ne.s32.totalorder %s159, %s175
    %p177 = scmp.eq.s32.totalorder %s20, 0
    %p178 = por %p176, %p177
    %p179 = scmp.le.s32.totalorder 1, %s14
    %p180 = scmp.lt.s32.totalorder %s14, 3
    %p181 = pnand %p179, %p180
    %p182 = pneg %p181
    // Predicated region
    $region9: #{critic_forward.7} parent=5 // pred_check
      _
    $region10: #{critic_forward.7} parent=5 // pred_check_branch
      %184 = sbr.rel (%p181) target = $region12
    $region11: #{critic_forward.7} parent=5 // pred_region
      %s185 = ssub.s32 %s14, 1
      // Predicated region
      $region13: #{critic_forward.7} parent=11 // pred_check
        %p186 = pneg %p61
      $region14: #{critic_forward.7} parent=11 // pred_check_branch
        %188 = sbr.rel (%p186) target = $region16
      $region15: #{critic_forward.7} parent=11 // pred_region
        _
      $region16: #{critic_forward.7} parent=11 // pred_fallthru
        _
      // Predicated region
      $region17: #{critic_forward.7} parent=11 // pred_check
        %p189 = pneg %p82
      $region18: #{critic_forward.7} parent=11 // pred_check_branch
        %191 = sbr.rel (%p189) target = $region20
      $region19: #{critic_forward.7} parent=11 // pred_region
        _
      $region20: #{critic_forward.7} parent=11 // pred_fallthru
        _
      // Predicated region
      $region21: #{critic_forward.7} parent=11 // pred_check
        %p192 = pneg %p103
      $region22: #{critic_forward.7} parent=11 // pred_check_branch
        %194 = sbr.rel (%p192) target = $region24
      $region23: #{critic_forward.7} parent=11 // pred_region
        _
      $region24: #{critic_forward.7} parent=11 // pred_fallthru
        _
      // Predicated region
      $region25: #{critic_forward.7} parent=11 // pred_check
        %p195 = pneg %p124
      $region26: #{critic_forward.7} parent=11 // pred_check_branch
        %197 = sbr.rel (%p195) target = $region28
      $region27: #{critic_forward.7} parent=11 // pred_region
        _
      $region28: #{critic_forward.7} parent=11 // pred_fallthru
        _
      // Predicated region
      $region29: #{critic_forward.7} parent=11 // pred_check
        %p198 = pneg %p145
      $region30: #{critic_forward.7} parent=11 // pred_check_branch
        %200 = sbr.rel (%p198) target = $region32
      $region31: #{critic_forward.7} parent=11 // pred_region
        _
      $region32: #{critic_forward.7} parent=11 // pred_fallthru
        _
    $region12: #{critic_forward.7} parent=5 // pred_fallthru
      _
    %p201 = scmp.lt.s32.totalorder %s14, 2
    // Predicated region
    $region33: #{critic_forward.7} parent=5 // pred_check
      %p202 = pneg %p201
    $region34: #{critic_forward.7} parent=5 // pred_check_branch
      %204 = sbr.rel (%p202) target = $region36
    $region35: #{critic_forward.7} parent=5 // pred_region
      // Predicated region
      $region37: #{critic_forward.7} parent=35 // pred_check
        %p205 = pneg %p34
      $region38: #{critic_forward.7} parent=35 // pred_check_branch
        %207 = sbr.rel (%p205) target = $region40
      $region39: #{critic_forward.7} parent=35 // pred_region
        %p208 = scmp.lt.s32.totalorder %s14, 1
        %s209 = scalar_select %p208, %s14, 1
        %s210 = smul.addr %s209, 8
        %s211 = smul.addr %s210, 8
        %s212 = scalar_lea.vmem %s0, %s211
      $region40: #{critic_forward.7} parent=35 // pred_fallthru
        _
    $region36: #{critic_forward.7} parent=5 // pred_fallthru
      _
    %p213 = scmp.le.s32.totalorder 1, %s14
    %p214 = scmp.lt.s32.totalorder %s14, 3
    %p215 = pnand %p213, %p214
    %p216 = pneg %p215
    // Predicated region
    $region41: #{critic_forward.7} parent=5 // pred_check
      _
    $region42: #{critic_forward.7} parent=5 // pred_check_branch
      %218 = sbr.rel (%p215) target = $region44
    $region43: #{critic_forward.7} parent=5 // pred_region
      %s219 = ssub.s32 %s14, 1
      %p220 = scmp.lt.s32.totalorder %s19, 1
      %s221 = scalar_select %p220, %s19, 1
      %s222 = smul.addr %s221, 8
      %s223 = smul.addr %s222, 8
      %s224 = scalar_lea.vmem %s0, %s223
      %p225 = pneg %p40
      %p226 = pneg %p37
      %p227 = pneg %p61
      %p228 = pneg %p58
      %p229 = pneg %p82
      %p230 = pneg %p79
      %p231 = pneg %p103
      %p232 = pneg %p100
      %p233 = pneg %p124
      %p234 = pneg %p121
      %p235 = pneg %p145
      %p236 = pneg %p142
      %p237 = pneg %p171
      %p238 = pneg %p168
      %p239 = scmp.lt.s32.totalorder %s19, 1
      %s240 = scalar_select %p239, %s19, 1
      %s241 = scalar_lea.vmem %s6, %s240
      %p242 = scmp.lt.s32.totalorder %s19, 1
      %s243 = scalar_select %p242, %s19, 1
      %s244 = smul.addr %s243, 8
      %s245 = smul.addr %s244, 8
      %s246 = scalar_lea.vmem %s0, %s245
      %p247 = scmp.lt.s32.totalorder %s19, 1
      %s248 = scalar_select %p247, %s19, 1
      %s249 = scalar_lea.vmem %s6, %s248
      %v250 = vld [vmem:[%s246] sm:$0xff]
      %v251 = vld [vmem:[%s246 + $0x8] sm:$0xff]
      %v252 = vld [vmem:[%s246 + $0x10] sm:$0xff]
      %v253 = vld [vmem:[%s246 + $0x18] sm:$0xff]
      %v254 = vld [vmem:[%s246 + $0x20] sm:$0xff]
      %v255 = vld [vmem:[%s246 + $0x28] sm:$0xff]
      %v256 = vld [vmem:[%s246 + $0x30] sm:$0xff]
      %v257 = vld [vmem:[%s246 + $0x38] sm:$0xff]
      %v258 = vld [vmem:[%s1] sm:$0xff]
      %v259 = vld [vmem:[%s1 + $0x8] sm:$0xff]
      %v260 = vld [vmem:[%s1 + $0x10] sm:$0xff]
      %v261 = vld [vmem:[%s1 + $0x18] sm:$0xff]
      %v262 = vld [vmem:[%s1 + $0x20] sm:$0xff]
      %v263 = vld [vmem:[%s1 + $0x28] sm:$0xff]
      %v264 = vld [vmem:[%s1 + $0x30] sm:$0xff]
      %v265 = vld [vmem:[%s1 + $0x38] sm:$0xff]
      %v266 = vld [vmem:[%s1 + $0x40] sm:$0xff]
      %v267 = vld [vmem:[%s1 + $0x48] sm:$0xff]
      %v268 = vld [vmem:[%s1 + $0x50] sm:$0xff]
      %v269 = vld [vmem:[%s1 + $0x58] sm:$0xff]
      %v270 = vld [vmem:[%s1 + $0x60] sm:$0xff]
      %v271 = vld [vmem:[%s1 + $0x68] sm:$0xff]
      %v272 = vld [vmem:[%s1 + $0x70] sm:$0xff]
      %v273 = vld [vmem:[%s1 + $0x78] sm:$0xff]
      %v274 = vld [vmem:[%s1 + $0x80] sm:$0xff]
      %v275 = vld [vmem:[%s1 + $0x88] sm:$0xff]
      %v276 = vld [vmem:[%s1 + $0x90] sm:$0xff]
      %v277 = vld [vmem:[%s1 + $0x98] sm:$0xff]
      %v278 = vld [vmem:[%s1 + $0xa0] sm:$0xff]
      %v279 = vld [vmem:[%s1 + $0xa8] sm:$0xff]
      %v280 = vld [vmem:[%s1 + $0xb0] sm:$0xff]
      %v281 = vld [vmem:[%s1 + $0xb8] sm:$0xff]
      %v282 = vld [vmem:[%s1 + $0xc0] sm:$0xff]
      %v283 = vld [vmem:[%s1 + $0xc8] sm:$0xff]
      %v284 = vld [vmem:[%s1 + $0xd0] sm:$0xff]
      %v285 = vld [vmem:[%s1 + $0xd8] sm:$0xff]
      %v286 = vld [vmem:[%s1 + $0xe0] sm:$0xff]
      %v287 = vld [vmem:[%s1 + $0xe8] sm:$0xff]
      %v288 = vld [vmem:[%s1 + $0xf0] sm:$0xff]
      %v289 = vld [vmem:[%s1 + $0xf8] sm:$0xff]
      %v290 = vld [vmem:[%s1 + $0x100] sm:$0xff]
      %v291 = vld [vmem:[%s1 + $0x108] sm:$0xff]
      %v292 = vld [vmem:[%s1 + $0x110] sm:$0xff]
      %v293 = vld [vmem:[%s1 + $0x118] sm:$0xff]
      %v294 = vld [vmem:[%s1 + $0x120] sm:$0xff]
      %v295 = vld [vmem:[%s1 + $0x128] sm:$0xff]
      %v296 = vld [vmem:[%s1 + $0x130] sm:$0xff]
      %v297 = vld [vmem:[%s1 + $0x138] sm:$0xff]
      %v298 = vld [vmem:[%s1 + $0x140] sm:$0xff]
      %v299 = vld [vmem:[%s1 + $0x148] sm:$0xff]
      %v300 = vld [vmem:[%s1 + $0x150] sm:$0xff]
      %v301 = vld [vmem:[%s1 + $0x158] sm:$0xff]
      %v302 = vld [vmem:[%s1 + $0x160] sm:$0xff]
      %v303 = vld [vmem:[%s1 + $0x168] sm:$0xff]
      %v304 = vld [vmem:[%s1 + $0x170] sm:$0xff]
      %v305 = vld [vmem:[%s1 + $0x178] sm:$0xff]
      %v306 = vld [vmem:[%s1 + $0x180] sm:$0xff]
      %v307 = vld [vmem:[%s1 + $0x188] sm:$0xff]
      %v308 = vld [vmem:[%s1 + $0x190] sm:$0xff]
      %v309 = vld [vmem:[%s1 + $0x198] sm:$0xff]
      %v310 = vld [vmem:[%s1 + $0x1a0] sm:$0xff]
      %v311 = vld [vmem:[%s1 + $0x1a8] sm:$0xff]
      %v312 = vld [vmem:[%s1 + $0x1b0] sm:$0xff]
      %v313 = vld [vmem:[%s1 + $0x1b8] sm:$0xff]
      %v314 = vld [vmem:[%s1 + $0x1c0] sm:$0xff]
      %v315 = vld [vmem:[%s1 + $0x1c8] sm:$0xff]
      %v316 = vld [vmem:[%s1 + $0x1d0] sm:$0xff]
      %v317 = vld [vmem:[%s1 + $0x1d8] sm:$0xff]
      %v318 = vld [vmem:[%s1 + $0x1e0] sm:$0xff]
      %v319 = vld [vmem:[%s1 + $0x1e8] sm:$0xff]
      %v320 = vld [vmem:[%s1 + $0x1f0] sm:$0xff]
      %v321 = vld [vmem:[%s1 + $0x1f8] sm:$0xff]
      %v322 = vld [vmem:[%s2] sm:$0x1]
      %v323 = vld [vmem:[%s3] sm:$0x1]
      %324 = vmatprep.subr.mxu0 0.0
      %325 = vmatpush1.msra.mxu0 %v258
      %326 = vmatprep.subr.mxu0 0.0
      %327 = vmatpush1.msra.mxu0 %v259
      %328 = vmatprep.subr.mxu0 0.0
      %329 = vmatpush1.msra.mxu0 %v260
      %330 = vmatprep.subr.mxu0 0.0
      %331 = vmatpush1.msra.mxu0 %v261
      %332 = vmatprep.subr.mxu0 0.0
      %333 = vmatpush1.msra.mxu0 %v262
      %334 = vmatprep.subr.mxu0 0.0
      %335 = vmatpush1.msra.mxu0 %v263
      %336 = vmatprep.subr.mxu0 0.0
      %337 = vmatpush1.msra.mxu0 %v264
      %338 = vmatprep.subr.mxu0 0.0
      %339 = vmatpush1.msra.mxu0 %v265
      %340 = vmatprep.subr.mxu0 0.0
      %341 = vmatpush1.msra.mxu0 %v266
      %342 = vmatprep.subr.mxu0 0.0
      %343 = vmatpush1.msra.mxu0 %v267
      %344 = vmatprep.subr.mxu0 0.0
      %345 = vmatpush1.msra.mxu0 %v268
      %346 = vmatprep.subr.mxu0 0.0
      %347 = vmatpush1.msra.mxu0 %v269
      %348 = vmatprep.subr.mxu0 0.0
      %349 = vmatpush1.msra.mxu0 %v270
      %350 = vmatprep.subr.mxu0 0.0
      %351 = vmatpush1.msra.mxu0 %v271
      %352 = vmatprep.subr.mxu0 0.0
      %353 = vmatpush1.msra.mxu0 %v272
      %354 = vmatprep.subr.mxu0 0.0
      %355 = vmatpush1.msra.mxu0 %v273
      %356 = vmatprep.subr.mxu0 0.0
      %357 = vmatpush1.msra.mxu0 %v274
      %358 = vmatprep.subr.mxu0 0.0
      %359 = vmatpush1.msra.mxu0 %v275
      %360 = vmatprep.subr.mxu0 0.0
      %361 = vmatpush1.msra.mxu0 %v276
      %362 = vmatprep.subr.mxu0 0.0
      %363 = vmatpush1.msra.mxu0 %v277
      %364 = vmatprep.subr.mxu0 0.0
      %365 = vmatpush1.msra.mxu0 %v278
      %366 = vmatprep.subr.mxu0 0.0
      %367 = vmatpush1.msra.mxu0 %v279
      %368 = vmatprep.subr.mxu0 0.0
      %369 = vmatpush1.msra.mxu0 %v280
      %370 = vmatprep.subr.mxu0 0.0
      %371 = vmatpush1.msra.mxu0 %v281
      %372 = vmatprep.subr.mxu0 0.0
      %373 = vmatpush1.msra.mxu0 %v282
      %374 = vmatprep.subr.mxu0 0.0
      %375 = vmatpush1.msra.mxu0 %v283
      %376 = vmatprep.subr.mxu0 0.0
      %377 = vmatpush1.msra.mxu0 %v284
      %378 = vmatprep.subr.mxu0 0.0
      %379 = vmatpush1.msra.mxu0 %v285
      %380 = vmatprep.subr.mxu0 0.0
      %381 = vmatpush1.msra.mxu0 %v286
      %382 = vmatprep.subr.mxu0 0.0
      %383 = vmatpush1.msra.mxu0 %v287
      %384 = vmatprep.subr.mxu0 0.0
      %385 = vmatpush1.msra.mxu0 %v288
      %386 = vmatprep.subr.mxu0 0.0
      %387 = vmatpush1.msra.mxu0 %v289
      %388 = vmatprep.mubr.f32.mxu0 %v251
      %389 = vmatmul.mubr.f32.gmra.mrb[0].mxu0 %v250
      %v390 = vpop.f32.mrb[0].mxu0
      %v391 = vadd.f32 0.0, %v390
      %v392 = vpop.f32.mrb[0].mxu0
      %393 = vmatprep.mubr.f32.mxu0 %v255
      %394 = vmatmul.mubr.f32.gmra.mrb[0].mxu0 %v254
      %v395 = vpop.f32.mrb[0].mxu0
      %v396 = vadd.f32 0.0, %v395
      %v397 = vpop.f32.mrb[0].mxu0
      %398 = vdwg.mxu0
      %399 = vmatprep.subr.mxu0 0.0
      %400 = vmatpush1.msra.mxu0 %v290
      %401 = vmatprep.subr.mxu0 0.0
      %402 = vmatpush1.msra.mxu0 %v291
      %403 = vmatprep.subr.mxu0 0.0
      %404 = vmatpush1.msra.mxu0 %v292
      %405 = vmatprep.subr.mxu0 0.0
      %406 = vmatpush1.msra.mxu0 %v293
      %407 = vmatprep.subr.mxu0 0.0
      %408 = vmatpush1.msra.mxu0 %v294
      %409 = vmatprep.subr.mxu0 0.0
      %410 = vmatpush1.msra.mxu0 %v295
      %411 = vmatprep.subr.mxu0 0.0
      %412 = vmatpush1.msra.mxu0 %v296
      %413 = vmatprep.subr.mxu0 0.0
      %414 = vmatpush1.msra.mxu0 %v297
      %415 = vmatprep.subr.mxu0 0.0
      %416 = vmatpush1.msra.mxu0 %v298
      %417 = vmatprep.subr.mxu0 0.0
      %418 = vmatpush1.msra.mxu0 %v299
      %419 = vmatprep.subr.mxu0 0.0
      %420 = vmatpush1.msra.mxu0 %v300
      %421 = vmatprep.subr.mxu0 0.0
      %422 = vmatpush1.msra.mxu0 %v301
      %423 = vmatprep.subr.mxu0 0.0
      %424 = vmatpush1.msra.mxu0 %v302
      %425 = vmatprep.subr.mxu0 0.0
      %426 = vmatpush1.msra.mxu0 %v303
      %427 = vmatprep.subr.mxu0 0.0
      %428 = vmatpush1.msra.mxu0 %v304
      %429 = vmatprep.subr.mxu0 0.0
      %430 = vmatpush1.msra.mxu0 %v305
      %431 = vmatprep.subr.mxu0 0.0
      %432 = vmatpush1.msra.mxu0 %v306
      %433 = vmatprep.subr.mxu0 0.0
      %434 = vmatpush1.msra.mxu0 %v307
      %435 = vmatprep.subr.mxu0 0.0
      %436 = vmatpush1.msra.mxu0 %v308
      %437 = vmatprep.subr.mxu0 0.0
      %438 = vmatpush1.msra.mxu0 %v309
      %439 = vmatprep.subr.mxu0 0.0
      %440 = vmatpush1.msra.mxu0 %v310
      %441 = vmatprep.subr.mxu0 0.0
      %442 = vmatpush1.msra.mxu0 %v311
      %443 = vmatprep.subr.mxu0 0.0
      %444 = vmatpush1.msra.mxu0 %v312
      %445 = vmatprep.subr.mxu0 0.0
      %446 = vmatpush1.msra.mxu0 %v313
      %447 = vmatprep.subr.mxu0 0.0
      %448 = vmatpush1.msra.mxu0 %v314
      %449 = vmatprep.subr.mxu0 0.0
      %450 = vmatpush1.msra.mxu0 %v315
      %451 = vmatprep.subr.mxu0 0.0
      %452 = vmatpush1.msra.mxu0 %v316
      %453 = vmatprep.subr.mxu0 0.0
      %454 = vmatpush1.msra.mxu0 %v317
      %455 = vmatprep.subr.mxu0 0.0
      %456 = vmatpush1.msra.mxu0 %v318
      %457 = vmatprep.subr.mxu0 0.0
      %458 = vmatpush1.msra.mxu0 %v319
      %459 = vmatprep.subr.mxu0 0.0
      %460 = vmatpush1.msra.mxu0 %v320
      %461 = vmatprep.subr.mxu0 0.0
      %462 = vmatpush1.msra.mxu0 %v321
      %463 = vmatprep.mubr.f32.mxu0 %v253
      %464 = vmatmul.mubr.f32.gmra.mrb[0].mxu0 %v252
      %v465 = vpop.f32.mrb[0].mxu0
      %v466 = vadd.f32 %v391, %v465
      %v467 = vpop.f32.mrb[0].mxu0
      %468 = vmatprep.mubr.f32.mxu0 %v257
      %469 = vmatmul.mubr.f32.gmra.mrb[0].mxu0 %v256
      %v470 = vpop.f32.mrb[0].mxu0
      %v471 = vadd.f32 %v396, %v470
      %v472 = vpop.f32.mrb[0].mxu0
      %473 = vdwg.mxu0
      %vm474 = vcmask 523264
      %v475 = vsel %vm474, %v466, 0.0
      %v476 = vsel %vm474, %v471, 0.0
      %v477 = vadd.f32 %v475, %v476
      %v478 = vrot.slane %v477, 4
      %v479 = vadd.f32 %v477, %v478
      %v480 = vrot.slane %v479, 2
      %v481 = vadd.f32 %v479, %v480
      %v482 = vrot.slane %v481, 1
      %v483 = vadd.f32 %v481, %v482
      %v484 = vmul.f32 %v466, %v466
      %v485 = vmul.f32 %v471, %v471
      %v486 = vsel %vm474, %v484, 0.0
      %v487 = vsel %vm474, %v485, 0.0
      %v488 = vadd.f32 %v486, %v487
      %v489 = vrot.slane %v488, 4
      %v490 = vadd.f32 %v488, %v489
      %v491 = vrot.slane %v490, 2
      %v492 = vadd.f32 %v490, %v491
      %v493 = vrot.slane %v492, 1
      %v494 = vadd.f32 %v492, %v493
      %v495 = vmul.f32 %v483, 0.0625
      %v496 = vmul.f32 %v494, 0.0625
      %v497 = vmul.f32 %v495, %v495
      %v498 = vsub.f32 %v496, %v497
      %v499 = vmax.f32 %v498, 0.0
      %v500 = vadd.f32 %v499, 1e-05
      %v501 = vrsqrt.pop %v500
      %v502 = vmul.f32 %v322, %v501
      %v503 = vmul.f32 %v495, %v502
      %v504 = vsub.f32 %v323, %v503
      %v506 = vlaneseq
      %v507 = vshrl.u32 %v506, 7
      %v508 = vsub.s32 0, %v507
      %v509 = vrot.slane %v502, %v508
      %v511 = vmul.f32 %v466, %v509
      %v512 = vmul.f32 %v471, %v509
      %v514 = vlaneseq
      %v515 = vshrl.u32 %v514, 7
      %v516 = vsub.s32 0, %v515
      %v517 = vrot.slane %v504, %v516
      %v519 = vadd.f32 %v511, %v517
      %v520 = vadd.f32 %v512, %v517
      %vm521 = vcmp.gt.f32.partialorder %v519, 0.0
      %vm522 = vcmp.gt.f32.partialorder %v520, 0.0
      %v523 = vmul.f32 %v519, 0.2
      %v524 = vmul.f32 %v520, 0.2
      %v525 = vsel %vm521, %v519, %v523
      %v526 = vsel %vm522, %v520, %v524
      %v527 = vld [vmem:[%s4] sm:$0xff]
      %v528 = vld [vmem:[%s4 + $0x8] sm:$0xff]
      %v529 = vmul.f32 %v525, %v527
      %v530 = vmul.f32 %v526, %v528
      %v531 = vsel %vm474, %v529, 0.0
      %v532 = vsel %vm474, %v530, 0.0
      %v533 = vadd.f32 %v531, %v532
      %v534 = vrot.slane %v533, 4
      %v535 = vadd.f32 %v533, %v534
      %v536 = vrot.slane %v535, 2
      %v537 = vadd.f32 %v535, %v536
      %v538 = vrot.slane %v537, 1
      %v539 = vadd.f32 %v537, %v538
      %v540 = vsel %vm474, %v539, 0.0
      %541 = vadd.xlane.f32.xlu0 %v540
      %v542 = vpop.xlane.xlu0 %541
      %v543 = vld [vmem:[#allocation2] sm:$0x1]
      %v544 = vadd.f32 %v542, %v543
      %vm545 = vcmask 0
      %546 = vst.msk [vmem:[%s249] sm:$0x1] %vm545, %v544
      %p547 = scmp.lt.s32.totalorder %s19, 1
      %s548 = scalar_select %p547, %s19, 1
      %s549 = scalar_lea.vmem %s6, %s548
      // Predicated region
      $region45: #{critic_forward.7} parent=43 // pred_check
        %p550 = pneg %p168
      $region46: #{critic_forward.7} parent=43 // pred_check_branch
        %552 = sbr.rel (%p550) target = $region48
      $region47: #{critic_forward.7} parent=43 // pred_region
        _
      $region48: #{critic_forward.7} parent=43 // pred_fallthru
        _
    $region44: #{critic_forward.7} parent=5 // pred_fallthru
      _
    %p553 = scmp.le.s32.totalorder 2, %s14
    // Predicated region
    $region49: #{critic_forward.7} parent=5 // pred_check
      %p554 = pneg %p553
    $region50: #{critic_forward.7} parent=5 // pred_check_branch
      %556 = sbr.rel (%p554) target = $region52
    $region51: #{critic_forward.7} parent=5 // pred_region
      %s557 = ssub.s32 %s14, 2
      // Predicated region
      $region53: #{critic_forward.7} parent=51 // pred_check
        %p558 = pneg %p174
      $region54: #{critic_forward.7} parent=51 // pred_check_branch
        %560 = sbr.rel (%p558) target = $region56
      $region55: #{critic_forward.7} parent=51 // pred_region
        %p561 = scmp.lt.s32.totalorder %s20, 1
        %s562 = scalar_select %p561, %s20, 1
        %s563 = scalar_lea.vmem %s6, %s562
      $region56: #{critic_forward.7} parent=51 // pred_fallthru
        _
    $region52: #{critic_forward.7} parent=5 // pred_fallthru
      _
  $region6: #{critic_forward.7} parent=0 // loop_footer
    %s18 = sadd.s32 1, %s14
  $region7: #{critic_forward.7} parent=0 // loop_footer_branch
    %13 = sbr.rel target = $region3
  $region8: #{critic_forward.7} parent=0 // loop_exit
    _

</llo_original>
